<compile_context>
chip_gen: v7x
topology: tpu7x:2x2x1
jax: 0.10.0
libtpu: 0.0.40
codegen_flags: <defaults>
</compile_context>

<pallas_src>
import numpy as np

import jax
import jax.numpy as jnp
from jax.experimental import pallas as pl
from jax.experimental.pallas import tpu as pltpu


USE_BF16_MATMUL = True  # bf16 MXU operands, f32 accumulate; elementwise stays f32.

# Layer table for num_of_FM == 0:
#   Conv(C,C,3,s2,p1)+IN+LReLU  x3,  Conv(C,C,3)+IN+LReLU,  Conv(C,1,3,bias=False)
_LAYER_CFG = [
    dict(stride=2, padding=1, has_bias=True,  do_norm=True,  do_act=True),
    dict(stride=2, padding=1, has_bias=True,  do_norm=True,  do_act=True),
    dict(stride=2, padding=1, has_bias=True,  do_norm=True,  do_act=True),
    dict(stride=1, padding=0, has_bias=True,  do_norm=True,  do_act=True),
    dict(stride=1, padding=0, has_bias=False, do_norm=False, do_act=False),
]


def _conv_out(size, k, s, p):
    return (size + 2 * p - k) // s + 1


def _sel_w(Wi, Wo, stride, pad, dx):
    """0/1 matrix: S[wi, wo] = 1 iff wi == stride*wo + dx - pad (zero pad via drop)."""
    S = np.zeros((Wi, Wo), np.float32)
    for wo in range(Wo):
        wi = stride * wo + dx - pad
        if 0 <= wi < Wi:
            S[wi, wo] = 1.0
    return S


def _sel_h(Hi, Ho, stride, pad, dy):
    """0/1 matrix: S[ho, hi] = 1 iff hi == stride*ho + dy - pad."""
    S = np.zeros((Ho, Hi), np.float32)
    for ho in range(Ho):
        hi = stride * ho + dy - pad
        if 0 <= hi < Hi:
            S[ho, hi] = 1.0
    return S


# ----------------------------------------------------------------------------
# One-time operand preparation (runs eagerly, outside the timed forward path)
# ----------------------------------------------------------------------------
def _prepare_operands(params, channels, H, W):
    mm_dtype = jnp.bfloat16 if USE_BF16_MATMUL else jnp.float32
    geoms, ops = [], []
    Hi, Wi, Cin = H, W, channels
    for (w, b), cfg in zip(params, _LAYER_CFG):
        k, s, p = 3, cfg["stride"], cfg["padding"]
        Cout = int(w.shape[3])
        Ho, Wo = _conv_out(Hi, k, s, p), _conv_out(Wi, k, s, p)

        # Folded conv weight per vertical offset dy:
        #   Wd_dy[wi*Cin+ci, wo*Cout+co] = sum_dx Sw_dx[wi,wo] * W[dy,dx,ci,co]
        wd = []
        for dy in range(k):
            m = None
            for dx in range(k):
                term = jnp.kron(jnp.asarray(_sel_w(Wi, Wo, s, p, dx)), w[dy, dx])
                m = term if m is None else m + term
            wd.append(m)
        wd = jnp.stack(wd).astype(mm_dtype)                       # (3, Wi*Cin, Wo*Cout)
        sh = jnp.asarray(
            np.stack([_sel_h(Hi, Ho, s, p, dy) for dy in range(k)]))  # (3, Ho, Hi) f32
        brow = jnp.tile(b, Wo).reshape(1, Wo * Cout).astype(jnp.float32)

        layer_ops = [wd, sh, brow]
        if cfg["do_norm"]:
            # Per-channel sum/broadcast projector over the interleaved (wo, co) lanes.
            j = np.arange(Wo * Cout)
            P = (j[:, None] % Cout == j[None, :] % Cout).astype(np.float32)
            layer_ops.append(jnp.asarray(P))                      # (Wo*Cout, Wo*Cout)

        ops.extend(layer_ops)
        geoms.append(dict(Hi=Hi, Wi=Wi, Cin=Cin, Ho=Ho, Wo=Wo, Cout=Cout,
                          do_norm=cfg["do_norm"], do_act=cfg["do_act"]))
        Hi, Wi, Cin = Ho, Wo, Cout
    return geoms, ops


# ----------------------------------------------------------------------------
# Fused kernel: whole network for one sample per grid step
# ----------------------------------------------------------------------------
def _build_kernel(geoms):
    def kernel(*refs):
        x_ref, op_refs, o_ref = refs[0], refs[1:-1], refs[-1]
        a = x_ref[0]                                   # (H0, W0*C) f32
        idx = 0
        for g in geoms:
            wd_ref, sh_ref, b_ref = op_refs[idx], op_refs[idx + 1], op_refs[idx + 2]
            idx += 3
            p_ref = None
            if g["do_norm"]:
                p_ref = op_refs[idx]
                idx += 1

            a_mm = a.astype(jnp.bfloat16) if USE_BF16_MATMUL else a
            acc = None
            for dy in range(3):                        # static unroll over kernel rows
                bdy = jnp.dot(a_mm, wd_ref[dy],
                              preferred_element_type=jnp.float32)     # (Hi, Wo*Cout)
                contrib = jnp.dot(sh_ref[dy], bdy,
                                  preferred_element_type=jnp.float32)  # (Ho, Wo*Cout)
                acc = contrib if acc is None else acc + contrib
            y = acc + b_ref[...]                       # bias broadcast over rows

            if g["do_norm"]:
                # InstanceNorm2d: per-channel over spatial, biased var, eps=1e-5.
                inv_n = 1.0 / float(g["Ho"] * g["Wo"])     # true spatial count
                colsum = jnp.sum(y, axis=0, keepdims=True)         # (1, Wo*Cout)
                colsq = jnp.sum(y * y, axis=0, keepdims=True)
                mean = jnp.dot(colsum, p_ref[...],
                               preferred_element_type=jnp.float32) * inv_n
                ex2 = jnp.dot(colsq, p_ref[...],
                              preferred_element_type=jnp.float32) * inv_n
                var = jnp.maximum(ex2 - mean * mean, 0.0)
                y = (y - mean) * jax.lax.rsqrt(var + 1e-5)

            if g["do_act"]:
                y = jnp.where(y > 0, y, 0.2 * y)       # LeakyReLU(0.2)
            a = y

        a = jax.nn.sigmoid(a)                          # final sigmoid (on flattened map)
        o_ref[0] = a.astype(o_ref.dtype)

    return kernel


def _zeros_map(nd):
    return lambda n: (0,) * nd


def make_d_net_forward(params, channels, H, W):
    geoms, ops = _prepare_operands(params, channels, H, W)
    kernel = _build_kernel(geoms)
    gl = geoms[-1]
    Ho5, WoC5 = gl["Ho"], gl["Wo"] * gl["Cout"]
    op_specs = [pl.BlockSpec(o.shape, _zeros_map(o.ndim)) for o in ops]

    @jax.jit
    def forward(x_nchw):
        N, C, Hx, Wx = x_nchw.shape
        if (C, Hx, Wx) != (channels, H, W):
            raise ValueError("input shape does not match prepared geometry")
        # NCHW -> lane-dense (N, H, W*C)
        x = jnp.transpose(x_nchw, (0, 2, 3, 1)).astype(jnp.float32).reshape(N, H, W * C)
        out = pl.pallas_call(
            kernel,
            out_shape=jax.ShapeDtypeStruct((N, Ho5, WoC5), jnp.float32),
            grid=(N,),
            in_specs=[pl.BlockSpec((1, H, W * C), lambda n: (n, 0, 0))] + op_specs,
            out_specs=pl.BlockSpec((1, Ho5, WoC5), lambda n: (n, 0, 0)),
            compiler_params=pltpu.CompilerParams(
                dimension_semantics=("parallel",)),   # v7x: one sample per TensorCore
        )(x, *ops)
        # final conv has Cout == 1, so NHWC flatten order == PyTorch NCHW .view(-1)
        return out.reshape(-1)

    return forward


# ----------------------------------------------------------------------------
# Synthetic parameters (PyTorch checkpoints: transpose (Cout,Cin,kh,kw)->(kh,kw,Cin,Cout))
# ----------------------------------------------------------------------------
def init_params(key, channels):
    params = []
    cin = channels
    for i, cfg in enumerate(_LAYER_CFG):
        cout = 1 if i == len(_LAYER_CFG) - 1 else channels
        key, kw, kb = jax.random.split(key, 3)
        fan_in = 3 * 3 * cin
        w = jax.random.normal(kw, (3, 3, cin, cout), jnp.float32) / jnp.sqrt(fan_in)
        if cfg["has_bias"]:
            b = 0.01 * jax.random.normal(kb, (cout,), jnp.float32)
        else:
            b = jnp.zeros((cout,), jnp.float32)       # bias=False -> add zeros (identity)
        params.append((w, b))
        cin = cout
    return params


if __name__ == "__main__":
    key = jax.random.PRNGKey(0)
    channels = 8
    N, H, W = 2, 38, 38                    # "DNet_38": 38 -> 19 -> 10 -> 5 -> 3 -> 1
    kx, kp = jax.random.split(key)
    x = jax.random.normal(kx, (N, channels, H, W), jnp.float32)
    params = init_params(kp, channels)

    d_net_forward = make_d_net_forward(params, channels, H, W)
    out = jax.block_until_ready(d_net_forward(x))

    assert out.shape == (N * 1 * 1,)
    assert bool(jnp.all(jnp.isfinite(out)))
    assert bool(jnp.all((out >= 0.0) & (out <= 1.0)))
    print("KERNEL_OK")
</pallas_src>

<mosaic_0001>
module attributes {stable_mosaic.version = 11 : i64} {
  func.func @kernel(%arg0: i32, %arg1: memref<1x38x304xf32, #tpu.memory_space<vmem>>, %arg2: memref<3x304x152xbf16, #tpu.memory_space<vmem>>, %arg3: memref<3x19x38xf32, #tpu.memory_space<vmem>>, %arg4: memref<1x152xf32, #tpu.memory_space<vmem>>, %arg5: memref<152x152xf32, #tpu.memory_space<vmem>>, %arg6: memref<3x152x80xbf16, #tpu.memory_space<vmem>>, %arg7: memref<3x10x19xf32, #tpu.memory_space<vmem>>, %arg8: memref<1x80xf32, #tpu.memory_space<vmem>>, %arg9: memref<80x80xf32, #tpu.memory_space<vmem>>, %arg10: memref<3x80x40xbf16, #tpu.memory_space<vmem>>, %arg11: memref<3x5x10xf32, #tpu.memory_space<vmem>>, %arg12: memref<1x40xf32, #tpu.memory_space<vmem>>, %arg13: memref<40x40xf32, #tpu.memory_space<vmem>>, %arg14: memref<3x40x24xbf16, #tpu.memory_space<vmem>>, %arg15: memref<3x3x5xf32, #tpu.memory_space<vmem>>, %arg16: memref<1x24xf32, #tpu.memory_space<vmem>>, %arg17: memref<24x24xf32, #tpu.memory_space<vmem>>, %arg18: memref<3x24x1xbf16, #tpu.memory_space<vmem>>, %arg19: memref<3x1x3xf32, #tpu.memory_space<vmem>>, %arg20: memref<1x1xf32, #tpu.memory_space<vmem>>, %arg21: memref<1x1x1xf32, #tpu.memory_space<vmem>>) attributes {dimension_semantics = [#tpu.dimension_semantics<parallel>], iteration_bounds = array<i64: 2>, scalar_prefetch = 0 : i64, scratch_operands = 0 : i64, tpu.core_type = #tpu.core_type<tc>, window_params = [{transform_indices = @transform_0, window_bounds = array<i64: 1, 38, 304>}, {pipeline_mode = #tpu.pipeline_mode<synchronous>, transform_indices = @transform_1, window_bounds = array<i64: 3, 304, 152>}, {pipeline_mode = #tpu.pipeline_mode<synchronous>, transform_indices = @transform_2, window_bounds = array<i64: 3, 19, 38>}, {pipeline_mode = #tpu.pipeline_mode<synchronous>, transform_indices = @transform_3, window_bounds = array<i64: 1, 152>}, {pipeline_mode = #tpu.pipeline_mode<synchronous>, transform_indices = @transform_4, window_bounds = array<i64: 152, 152>}, {pipeline_mode = #tpu.pipeline_mode<synchronous>, transform_indices = @transform_5, window_bounds = array<i64: 3, 152, 80>}, {pipeline_mode = #tpu.pipeline_mode<synchronous>, transform_indices = @transform_6, window_bounds = array<i64: 3, 10, 19>}, {pipeline_mode = #tpu.pipeline_mode<synchronous>, transform_indices = @transform_7, window_bounds = array<i64: 1, 80>}, {pipeline_mode = #tpu.pipeline_mode<synchronous>, transform_indices = @transform_8, window_bounds = array<i64: 80, 80>}, {pipeline_mode = #tpu.pipeline_mode<synchronous>, transform_indices = @transform_9, window_bounds = array<i64: 3, 80, 40>}, {pipeline_mode = #tpu.pipeline_mode<synchronous>, transform_indices = @transform_10, window_bounds = array<i64: 3, 5, 10>}, {pipeline_mode = #tpu.pipeline_mode<synchronous>, transform_indices = @transform_11, window_bounds = array<i64: 1, 40>}, {pipeline_mode = #tpu.pipeline_mode<synchronous>, transform_indices = @transform_12, window_bounds = array<i64: 40, 40>}, {pipeline_mode = #tpu.pipeline_mode<synchronous>, transform_indices = @transform_13, window_bounds = array<i64: 3, 40, 24>}, {pipeline_mode = #tpu.pipeline_mode<synchronous>, transform_indices = @transform_14, window_bounds = array<i64: 3, 3, 5>}, {pipeline_mode = #tpu.pipeline_mode<synchronous>, transform_indices = @transform_15, window_bounds = array<i64: 1, 24>}, {pipeline_mode = #tpu.pipeline_mode<synchronous>, transform_indices = @transform_16, window_bounds = array<i64: 24, 24>}, {pipeline_mode = #tpu.pipeline_mode<synchronous>, transform_indices = @transform_17, window_bounds = array<i64: 3, 24, 1>}, {pipeline_mode = #tpu.pipeline_mode<synchronous>, transform_indices = @transform_18, window_bounds = array<i64: 3, 1, 3>}, {pipeline_mode = #tpu.pipeline_mode<synchronous>, transform_indices = @transform_19, window_bounds = array<i64: 1, 1>}, {transform_indices = @transform_20, window_bounds = array<i64: 1, 1, 1>}]} {
    %c0 = arith.constant 0 : index
    %c0_0 = arith.constant 0 : index
    %c0_1 = arith.constant 0 : index
    %0 = vector.load %arg1[%c0, %c0_0, %c0_1] : memref<1x38x304xf32, #tpu.memory_space<vmem>>, vector<1x38x304xf32>
    %1 = vector.shape_cast %0 : vector<1x38x304xf32> to vector<38x304xf32>
    %2 = arith.truncf %1 : vector<38x304xf32> to vector<38x304xbf16>
    %c0_2 = arith.constant 0 : index
    %c0_3 = arith.constant 0 : index
    %c0_4 = arith.constant 0 : index
    %3 = vector.load %arg2[%c0_2, %c0_3, %c0_4] : memref<3x304x152xbf16, #tpu.memory_space<vmem>>, vector<1x304x152xbf16>
    %4 = vector.shape_cast %3 : vector<1x304x152xbf16> to vector<304x152xbf16>
    %cst = arith.constant dense<0.000000e+00> : vector<38x152xf32>
    %5 = tpu.matmul %2, %4, %cst {dimension_numbers = #tpu.dot_dimension_numbers<[1], [0], [0], [1], [0, 0, 1, 1], [], []>} : vector<38x304xbf16>, vector<304x152xbf16>, vector<38x152xf32> -> vector<38x152xf32>
    %c0_5 = arith.constant 0 : index
    %c0_6 = arith.constant 0 : index
    %c0_7 = arith.constant 0 : index
    %6 = vector.load %arg3[%c0_5, %c0_6, %c0_7] : memref<3x19x38xf32, #tpu.memory_space<vmem>>, vector<1x19x38xf32>
    %7 = vector.shape_cast %6 : vector<1x19x38xf32> to vector<19x38xf32>
    %cst_8 = arith.constant dense<0.000000e+00> : vector<19x152xf32>
    %8 = tpu.matmul %7, %5, %cst_8 {dimension_numbers = #tpu.dot_dimension_numbers<[1], [0], [0], [1], [0, 0, 1, 1], [], []>} : vector<19x38xf32>, vector<38x152xf32>, vector<19x152xf32> -> vector<19x152xf32>
    %c1 = arith.constant 1 : index
    %c0_9 = arith.constant 0 : index
    %c0_10 = arith.constant 0 : index
    %9 = vector.load %arg2[%c1, %c0_9, %c0_10] : memref<3x304x152xbf16, #tpu.memory_space<vmem>>, vector<1x304x152xbf16>
    %10 = vector.shape_cast %9 : vector<1x304x152xbf16> to vector<304x152xbf16>
    %cst_11 = arith.constant dense<0.000000e+00> : vector<38x152xf32>
    %11 = tpu.matmul %2, %10, %cst_11 {dimension_numbers = #tpu.dot_dimension_numbers<[1], [0], [0], [1], [0, 0, 1, 1], [], []>} : vector<38x304xbf16>, vector<304x152xbf16>, vector<38x152xf32> -> vector<38x152xf32>
    %c1_12 = arith.constant 1 : index
    %c0_13 = arith.constant 0 : index
    %c0_14 = arith.constant 0 : index
    %12 = vector.load %arg3[%c1_12, %c0_13, %c0_14] : memref<3x19x38xf32, #tpu.memory_space<vmem>>, vector<1x19x38xf32>
    %13 = vector.shape_cast %12 : vector<1x19x38xf32> to vector<19x38xf32>
    %cst_15 = arith.constant dense<0.000000e+00> : vector<19x152xf32>
    %14 = tpu.matmul %13, %11, %cst_15 {dimension_numbers = #tpu.dot_dimension_numbers<[1], [0], [0], [1], [0, 0, 1, 1], [], []>} : vector<19x38xf32>, vector<38x152xf32>, vector<19x152xf32> -> vector<19x152xf32>
    %15 = arith.addf %8, %14 : vector<19x152xf32>
    %c2 = arith.constant 2 : index
    %c0_16 = arith.constant 0 : index
    %c0_17 = arith.constant 0 : index
    %16 = vector.load %arg2[%c2, %c0_16, %c0_17] : memref<3x304x152xbf16, #tpu.memory_space<vmem>>, vector<1x304x152xbf16>
    %17 = vector.shape_cast %16 : vector<1x304x152xbf16> to vector<304x152xbf16>
    %cst_18 = arith.constant dense<0.000000e+00> : vector<38x152xf32>
    %18 = tpu.matmul %2, %17, %cst_18 {dimension_numbers = #tpu.dot_dimension_numbers<[1], [0], [0], [1], [0, 0, 1, 1], [], []>} : vector<38x304xbf16>, vector<304x152xbf16>, vector<38x152xf32> -> vector<38x152xf32>
    %c2_19 = arith.constant 2 : index
    %c0_20 = arith.constant 0 : index
    %c0_21 = arith.constant 0 : index
    %19 = vector.load %arg3[%c2_19, %c0_20, %c0_21] : memref<3x19x38xf32, #tpu.memory_space<vmem>>, vector<1x19x38xf32>
    %20 = vector.shape_cast %19 : vector<1x19x38xf32> to vector<19x38xf32>
    %cst_22 = arith.constant dense<0.000000e+00> : vector<19x152xf32>
    %21 = tpu.matmul %20, %18, %cst_22 {dimension_numbers = #tpu.dot_dimension_numbers<[1], [0], [0], [1], [0, 0, 1, 1], [], []>} : vector<19x38xf32>, vector<38x152xf32>, vector<19x152xf32> -> vector<19x152xf32>
    %22 = arith.addf %15, %21 : vector<19x152xf32>
    %c0_23 = arith.constant 0 : index
    %c0_24 = arith.constant 0 : index
    %23 = vector.load %arg4[%c0_23, %c0_24] : memref<1x152xf32, #tpu.memory_space<vmem>>, vector<1x152xf32>
    %24 = vector.broadcast %23 : vector<1x152xf32> to vector<19x152xf32>
    %25 = arith.addf %22, %24 : vector<19x152xf32>
    %cst_25 = arith.constant dense<0.000000e+00> : vector<152xf32>
    %26 = vector.multi_reduction <add>, %25, %cst_25 [0] : vector<19x152xf32> to vector<152xf32>
    %27 = vector.shape_cast %26 : vector<152xf32> to vector<1x152xf32>
    %28 = arith.mulf %25, %25 : vector<19x152xf32>
    %cst_26 = arith.constant dense<0.000000e+00> : vector<152xf32>
    %29 = vector.multi_reduction <add>, %28, %cst_26 [0] : vector<19x152xf32> to vector<152xf32>
    %30 = vector.shape_cast %29 : vector<152xf32> to vector<1x152xf32>
    %c0_27 = arith.constant 0 : index
    %c0_28 = arith.constant 0 : index
    %31 = vector.load %arg5[%c0_27, %c0_28] : memref<152x152xf32, #tpu.memory_space<vmem>>, vector<152x152xf32>
    %cst_29 = arith.constant dense<0.000000e+00> : vector<1x152xf32>
    %32 = tpu.matmul %27, %31, %cst_29 {dimension_numbers = #tpu.dot_dimension_numbers<[1], [0], [0], [1], [0, 0, 1, 1], [], []>} : vector<1x152xf32>, vector<152x152xf32>, vector<1x152xf32> -> vector<1x152xf32>
    %cst_30 = arith.constant 0.00277008303 : f32
    %33 = vector.broadcast %cst_30 : f32 to vector<1x152xf32>
    %34 = arith.mulf %32, %33 : vector<1x152xf32>
    %c0_31 = arith.constant 0 : index
    %c0_32 = arith.constant 0 : index
    %35 = vector.load %arg5[%c0_31, %c0_32] : memref<152x152xf32, #tpu.memory_space<vmem>>, vector<152x152xf32>
    %cst_33 = arith.constant dense<0.000000e+00> : vector<1x152xf32>
    %36 = tpu.matmul %30, %35, %cst_33 {dimension_numbers = #tpu.dot_dimension_numbers<[1], [0], [0], [1], [0, 0, 1, 1], [], []>} : vector<1x152xf32>, vector<152x152xf32>, vector<1x152xf32> -> vector<1x152xf32>
    %cst_34 = arith.constant 0.00277008303 : f32
    %37 = vector.broadcast %cst_34 : f32 to vector<1x152xf32>
    %38 = arith.mulf %36, %37 : vector<1x152xf32>
    %39 = arith.mulf %34, %34 : vector<1x152xf32>
    %40 = arith.subf %38, %39 : vector<1x152xf32>
    %cst_35 = arith.constant 0.000000e+00 : f32
    %41 = vector.broadcast %cst_35 : f32 to vector<1x152xf32>
    %42 = arith.maximumf %40, %41 : vector<1x152xf32>
    %43 = vector.broadcast %34 : vector<1x152xf32> to vector<19x152xf32>
    %44 = arith.subf %25, %43 : vector<19x152xf32>
    %cst_36 = arith.constant 9.99999974E-6 : f32
    %45 = vector.broadcast %cst_36 : f32 to vector<1x152xf32>
    %46 = arith.addf %42, %45 : vector<1x152xf32>
    %47 = math.rsqrt %46 : vector<1x152xf32>
    %48 = vector.broadcast %47 : vector<1x152xf32> to vector<19x152xf32>
    %49 = arith.mulf %44, %48 : vector<19x152xf32>
    %cst_37 = arith.constant 0.000000e+00 : f32
    %50 = vector.broadcast %cst_37 : f32 to vector<19x152xf32>
    %51 = arith.cmpf ogt, %49, %50 : vector<19x152xf32>
    %cst_38 = arith.constant 2.000000e-01 : f32
    %52 = vector.broadcast %cst_38 : f32 to vector<19x152xf32>
    %53 = arith.mulf %52, %49 : vector<19x152xf32>
    %54 = arith.select %51, %49, %53 : vector<19x152xi1>, vector<19x152xf32>
    %55 = arith.truncf %54 : vector<19x152xf32> to vector<19x152xbf16>
    %c0_39 = arith.constant 0 : index
    %c0_40 = arith.constant 0 : index
    %c0_41 = arith.constant 0 : index
    %56 = vector.load %arg6[%c0_39, %c0_40, %c0_41] : memref<3x152x80xbf16, #tpu.memory_space<vmem>>, vector<1x152x80xbf16>
    %57 = vector.shape_cast %56 : vector<1x152x80xbf16> to vector<152x80xbf16>
    %cst_42 = arith.constant dense<0.000000e+00> : vector<19x80xf32>
    %58 = tpu.matmul %55, %57, %cst_42 {dimension_numbers = #tpu.dot_dimension_numbers<[1], [0], [0], [1], [0, 0, 1, 1], [], []>} : vector<19x152xbf16>, vector<152x80xbf16>, vector<19x80xf32> -> vector<19x80xf32>
    %c0_43 = arith.constant 0 : index
    %c0_44 = arith.constant 0 : index
    %c0_45 = arith.constant 0 : index
    %59 = vector.load %arg7[%c0_43, %c0_44, %c0_45] : memref<3x10x19xf32, #tpu.memory_space<vmem>>, vector<1x10x19xf32>
    %60 = vector.shape_cast %59 : vector<1x10x19xf32> to vector<10x19xf32>
    %cst_46 = arith.constant dense<0.000000e+00> : vector<10x80xf32>
    %61 = tpu.matmul %60, %58, %cst_46 {dimension_numbers = #tpu.dot_dimension_numbers<[1], [0], [0], [1], [0, 0, 1, 1], [], []>} : vector<10x19xf32>, vector<19x80xf32>, vector<10x80xf32> -> vector<10x80xf32>
    %c1_47 = arith.constant 1 : index
    %c0_48 = arith.constant 0 : index
    %c0_49 = arith.constant 0 : index
    %62 = vector.load %arg6[%c1_47, %c0_48, %c0_49] : memref<3x152x80xbf16, #tpu.memory_space<vmem>>, vector<1x152x80xbf16>
    %63 = vector.shape_cast %62 : vector<1x152x80xbf16> to vector<152x80xbf16>
    %cst_50 = arith.constant dense<0.000000e+00> : vector<19x80xf32>
    %64 = tpu.matmul %55, %63, %cst_50 {dimension_numbers = #tpu.dot_dimension_numbers<[1], [0], [0], [1], [0, 0, 1, 1], [], []>} : vector<19x152xbf16>, vector<152x80xbf16>, vector<19x80xf32> -> vector<19x80xf32>
    %c1_51 = arith.constant 1 : index
    %c0_52 = arith.constant 0 : index
    %c0_53 = arith.constant 0 : index
    %65 = vector.load %arg7[%c1_51, %c0_52, %c0_53] : memref<3x10x19xf32, #tpu.memory_space<vmem>>, vector<1x10x19xf32>
    %66 = vector.shape_cast %65 : vector<1x10x19xf32> to vector<10x19xf32>
    %cst_54 = arith.constant dense<0.000000e+00> : vector<10x80xf32>
    %67 = tpu.matmul %66, %64, %cst_54 {dimension_numbers = #tpu.dot_dimension_numbers<[1], [0], [0], [1], [0, 0, 1, 1], [], []>} : vector<10x19xf32>, vector<19x80xf32>, vector<10x80xf32> -> vector<10x80xf32>
    %68 = arith.addf %61, %67 : vector<10x80xf32>
    %c2_55 = arith.constant 2 : index
    %c0_56 = arith.constant 0 : index
    %c0_57 = arith.constant 0 : index
    %69 = vector.load %arg6[%c2_55, %c0_56, %c0_57] : memref<3x152x80xbf16, #tpu.memory_space<vmem>>, vector<1x152x80xbf16>
    %70 = vector.shape_cast %69 : vector<1x152x80xbf16> to vector<152x80xbf16>
    %cst_58 = arith.constant dense<0.000000e+00> : vector<19x80xf32>
    %71 = tpu.matmul %55, %70, %cst_58 {dimension_numbers = #tpu.dot_dimension_numbers<[1], [0], [0], [1], [0, 0, 1, 1], [], []>} : vector<19x152xbf16>, vector<152x80xbf16>, vector<19x80xf32> -> vector<19x80xf32>
    %c2_59 = arith.constant 2 : index
    %c0_60 = arith.constant 0 : index
    %c0_61 = arith.constant 0 : index
    %72 = vector.load %arg7[%c2_59, %c0_60, %c0_61] : memref<3x10x19xf32, #tpu.memory_space<vmem>>, vector<1x10x19xf32>
    %73 = vector.shape_cast %72 : vector<1x10x19xf32> to vector<10x19xf32>
    %cst_62 = arith.constant dense<0.000000e+00> : vector<10x80xf32>
    %74 = tpu.matmul %73, %71, %cst_62 {dimension_numbers = #tpu.dot_dimension_numbers<[1], [0], [0], [1], [0, 0, 1, 1], [], []>} : vector<10x19xf32>, vector<19x80xf32>, vector<10x80xf32> -> vector<10x80xf32>
    %75 = arith.addf %68, %74 : vector<10x80xf32>
    %c0_63 = arith.constant 0 : index
    %c0_64 = arith.constant 0 : index
    %76 = vector.load %arg8[%c0_63, %c0_64] : memref<1x80xf32, #tpu.memory_space<vmem>>, vector<1x80xf32>
    %77 = vector.broadcast %76 : vector<1x80xf32> to vector<10x80xf32>
    %78 = arith.addf %75, %77 : vector<10x80xf32>
    %cst_65 = arith.constant dense<0.000000e+00> : vector<80xf32>
    %79 = vector.multi_reduction <add>, %78, %cst_65 [0] : vector<10x80xf32> to vector<80xf32>
    %80 = vector.shape_cast %79 : vector<80xf32> to vector<1x80xf32>
    %81 = arith.mulf %78, %78 : vector<10x80xf32>
    %cst_66 = arith.constant dense<0.000000e+00> : vector<80xf32>
    %82 = vector.multi_reduction <add>, %81, %cst_66 [0] : vector<10x80xf32> to vector<80xf32>
    %83 = vector.shape_cast %82 : vector<80xf32> to vector<1x80xf32>
    %c0_67 = arith.constant 0 : index
    %c0_68 = arith.constant 0 : index
    %84 = vector.load %arg9[%c0_67, %c0_68] : memref<80x80xf32, #tpu.memory_space<vmem>>, vector<80x80xf32>
    %cst_69 = arith.constant dense<0.000000e+00> : vector<1x80xf32>
    %85 = tpu.matmul %80, %84, %cst_69 {dimension_numbers = #tpu.dot_dimension_numbers<[1], [0], [0], [1], [0, 0, 1, 1], [], []>} : vector<1x80xf32>, vector<80x80xf32>, vector<1x80xf32> -> vector<1x80xf32>
    %cst_70 = arith.constant 0.00999999977 : f32
    %86 = vector.broadcast %cst_70 : f32 to vector<1x80xf32>
    %87 = arith.mulf %85, %86 : vector<1x80xf32>
    %c0_71 = arith.constant 0 : index
    %c0_72 = arith.constant 0 : index
    %88 = vector.load %arg9[%c0_71, %c0_72] : memref<80x80xf32, #tpu.memory_space<vmem>>, vector<80x80xf32>
    %cst_73 = arith.constant dense<0.000000e+00> : vector<1x80xf32>
    %89 = tpu.matmul %83, %88, %cst_73 {dimension_numbers = #tpu.dot_dimension_numbers<[1], [0], [0], [1], [0, 0, 1, 1], [], []>} : vector<1x80xf32>, vector<80x80xf32>, vector<1x80xf32> -> vector<1x80xf32>
    %cst_74 = arith.constant 0.00999999977 : f32
    %90 = vector.broadcast %cst_74 : f32 to vector<1x80xf32>
    %91 = arith.mulf %89, %90 : vector<1x80xf32>
    %92 = arith.mulf %87, %87 : vector<1x80xf32>
    %93 = arith.subf %91, %92 : vector<1x80xf32>
    %cst_75 = arith.constant 0.000000e+00 : f32
    %94 = vector.broadcast %cst_75 : f32 to vector<1x80xf32>
    %95 = arith.maximumf %93, %94 : vector<1x80xf32>
    %96 = vector.broadcast %87 : vector<1x80xf32> to vector<10x80xf32>
    %97 = arith.subf %78, %96 : vector<10x80xf32>
    %cst_76 = arith.constant 9.99999974E-6 : f32
    %98 = vector.broadcast %cst_76 : f32 to vector<1x80xf32>
    %99 = arith.addf %95, %98 : vector<1x80xf32>
    %100 = math.rsqrt %99 : vector<1x80xf32>
    %101 = vector.broadcast %100 : vector<1x80xf32> to vector<10x80xf32>
    %102 = arith.mulf %97, %101 : vector<10x80xf32>
    %cst_77 = arith.constant 0.000000e+00 : f32
    %103 = vector.broadcast %cst_77 : f32 to vector<10x80xf32>
    %104 = arith.cmpf ogt, %102, %103 : vector<10x80xf32>
    %cst_78 = arith.constant 2.000000e-01 : f32
    %105 = vector.broadcast %cst_78 : f32 to vector<10x80xf32>
    %106 = arith.mulf %105, %102 : vector<10x80xf32>
    %107 = arith.select %104, %102, %106 : vector<10x80xi1>, vector<10x80xf32>
    %108 = arith.truncf %107 : vector<10x80xf32> to vector<10x80xbf16>
    %c0_79 = arith.constant 0 : index
    %c0_80 = arith.constant 0 : index
    %c0_81 = arith.constant 0 : index
    %109 = vector.load %arg10[%c0_79, %c0_80, %c0_81] : memref<3x80x40xbf16, #tpu.memory_space<vmem>>, vector<1x80x40xbf16>
    %110 = vector.shape_cast %109 : vector<1x80x40xbf16> to vector<80x40xbf16>
    %cst_82 = arith.constant dense<0.000000e+00> : vector<10x40xf32>
    %111 = tpu.matmul %108, %110, %cst_82 {dimension_numbers = #tpu.dot_dimension_numbers<[1], [0], [0], [1], [0, 0, 1, 1], [], []>} : vector<10x80xbf16>, vector<80x40xbf16>, vector<10x40xf32> -> vector<10x40xf32>
    %c0_83 = arith.constant 0 : index
    %c0_84 = arith.constant 0 : index
    %c0_85 = arith.constant 0 : index
    %112 = vector.load %arg11[%c0_83, %c0_84, %c0_85] : memref<3x5x10xf32, #tpu.memory_space<vmem>>, vector<1x5x10xf32>
    %113 = vector.shape_cast %112 : vector<1x5x10xf32> to vector<5x10xf32>
    %cst_86 = arith.constant dense<0.000000e+00> : vector<5x40xf32>
    %114 = tpu.matmul %113, %111, %cst_86 {dimension_numbers = #tpu.dot_dimension_numbers<[1], [0], [0], [1], [0, 0, 1, 1], [], []>} : vector<5x10xf32>, vector<10x40xf32>, vector<5x40xf32> -> vector<5x40xf32>
    %c1_87 = arith.constant 1 : index
    %c0_88 = arith.constant 0 : index
    %c0_89 = arith.constant 0 : index
    %115 = vector.load %arg10[%c1_87, %c0_88, %c0_89] : memref<3x80x40xbf16, #tpu.memory_space<vmem>>, vector<1x80x40xbf16>
    %116 = vector.shape_cast %115 : vector<1x80x40xbf16> to vector<80x40xbf16>
    %cst_90 = arith.constant dense<0.000000e+00> : vector<10x40xf32>
    %117 = tpu.matmul %108, %116, %cst_90 {dimension_numbers = #tpu.dot_dimension_numbers<[1], [0], [0], [1], [0, 0, 1, 1], [], []>} : vector<10x80xbf16>, vector<80x40xbf16>, vector<10x40xf32> -> vector<10x40xf32>
    %c1_91 = arith.constant 1 : index
    %c0_92 = arith.constant 0 : index
    %c0_93 = arith.constant 0 : index
    %118 = vector.load %arg11[%c1_91, %c0_92, %c0_93] : memref<3x5x10xf32, #tpu.memory_space<vmem>>, vector<1x5x10xf32>
    %119 = vector.shape_cast %118 : vector<1x5x10xf32> to vector<5x10xf32>
    %cst_94 = arith.constant dense<0.000000e+00> : vector<5x40xf32>
    %120 = tpu.matmul %119, %117, %cst_94 {dimension_numbers = #tpu.dot_dimension_numbers<[1], [0], [0], [1], [0, 0, 1, 1], [], []>} : vector<5x10xf32>, vector<10x40xf32>, vector<5x40xf32> -> vector<5x40xf32>
    %121 = arith.addf %114, %120 : vector<5x40xf32>
    %c2_95 = arith.constant 2 : index
    %c0_96 = arith.constant 0 : index
    %c0_97 = arith.constant 0 : index
    %122 = vector.load %arg10[%c2_95, %c0_96, %c0_97] : memref<3x80x40xbf16, #tpu.memory_space<vmem>>, vector<1x80x40xbf16>
    %123 = vector.shape_cast %122 : vector<1x80x40xbf16> to vector<80x40xbf16>
    %cst_98 = arith.constant dense<0.000000e+00> : vector<10x40xf32>
    %124 = tpu.matmul %108, %123, %cst_98 {dimension_numbers = #tpu.dot_dimension_numbers<[1], [0], [0], [1], [0, 0, 1, 1], [], []>} : vector<10x80xbf16>, vector<80x40xbf16>, vector<10x40xf32> -> vector<10x40xf32>
    %c2_99 = arith.constant 2 : index
    %c0_100 = arith.constant 0 : index
    %c0_101 = arith.constant 0 : index
    %125 = vector.load %arg11[%c2_99, %c0_100, %c0_101] : memref<3x5x10xf32, #tpu.memory_space<vmem>>, vector<1x5x10xf32>
    %126 = vector.shape_cast %125 : vector<1x5x10xf32> to vector<5x10xf32>
    %cst_102 = arith.constant dense<0.000000e+00> : vector<5x40xf32>
    %127 = tpu.matmul %126, %124, %cst_102 {dimension_numbers = #tpu.dot_dimension_numbers<[1], [0], [0], [1], [0, 0, 1, 1], [], []>} : vector<5x10xf32>, vector<10x40xf32>, vector<5x40xf32> -> vector<5x40xf32>
    %128 = arith.addf %121, %127 : vector<5x40xf32>
    %c0_103 = arith.constant 0 : index
    %c0_104 = arith.constant 0 : index
    %129 = vector.load %arg12[%c0_103, %c0_104] : memref<1x40xf32, #tpu.memory_space<vmem>>, vector<1x40xf32>
    %130 = vector.broadcast %129 : vector<1x40xf32> to vector<5x40xf32>
    %131 = arith.addf %128, %130 : vector<5x40xf32>
    %cst_105 = arith.constant dense<0.000000e+00> : vector<40xf32>
    %132 = vector.multi_reduction <add>, %131, %cst_105 [0] : vector<5x40xf32> to vector<40xf32>
    %133 = vector.shape_cast %132 : vector<40xf32> to vector<1x40xf32>
    %134 = arith.mulf %131, %131 : vector<5x40xf32>
    %cst_106 = arith.constant dense<0.000000e+00> : vector<40xf32>
    %135 = vector.multi_reduction <add>, %134, %cst_106 [0] : vector<5x40xf32> to vector<40xf32>
    %136 = vector.shape_cast %135 : vector<40xf32> to vector<1x40xf32>
    %c0_107 = arith.constant 0 : index
    %c0_108 = arith.constant 0 : index
    %137 = vector.load %arg13[%c0_107, %c0_108] : memref<40x40xf32, #tpu.memory_space<vmem>>, vector<40x40xf32>
    %cst_109 = arith.constant dense<0.000000e+00> : vector<1x40xf32>
    %138 = tpu.matmul %133, %137, %cst_109 {dimension_numbers = #tpu.dot_dimension_numbers<[1], [0], [0], [1], [0, 0, 1, 1], [], []>} : vector<1x40xf32>, vector<40x40xf32>, vector<1x40xf32> -> vector<1x40xf32>
    %cst_110 = arith.constant 4.000000e-02 : f32
    %139 = vector.broadcast %cst_110 : f32 to vector<1x40xf32>
    %140 = arith.mulf %138, %139 : vector<1x40xf32>
    %c0_111 = arith.constant 0 : index
    %c0_112 = arith.constant 0 : index
    %141 = vector.load %arg13[%c0_111, %c0_112] : memref<40x40xf32, #tpu.memory_space<vmem>>, vector<40x40xf32>
    %cst_113 = arith.constant dense<0.000000e+00> : vector<1x40xf32>
    %142 = tpu.matmul %136, %141, %cst_113 {dimension_numbers = #tpu.dot_dimension_numbers<[1], [0], [0], [1], [0, 0, 1, 1], [], []>} : vector<1x40xf32>, vector<40x40xf32>, vector<1x40xf32> -> vector<1x40xf32>
    %cst_114 = arith.constant 4.000000e-02 : f32
    %143 = vector.broadcast %cst_114 : f32 to vector<1x40xf32>
    %144 = arith.mulf %142, %143 : vector<1x40xf32>
    %145 = arith.mulf %140, %140 : vector<1x40xf32>
    %146 = arith.subf %144, %145 : vector<1x40xf32>
    %cst_115 = arith.constant 0.000000e+00 : f32
    %147 = vector.broadcast %cst_115 : f32 to vector<1x40xf32>
    %148 = arith.maximumf %146, %147 : vector<1x40xf32>
    %149 = vector.broadcast %140 : vector<1x40xf32> to vector<5x40xf32>
    %150 = arith.subf %131, %149 : vector<5x40xf32>
    %cst_116 = arith.constant 9.99999974E-6 : f32
    %151 = vector.broadcast %cst_116 : f32 to vector<1x40xf32>
    %152 = arith.addf %148, %151 : vector<1x40xf32>
    %153 = math.rsqrt %152 : vector<1x40xf32>
    %154 = vector.broadcast %153 : vector<1x40xf32> to vector<5x40xf32>
    %155 = arith.mulf %150, %154 : vector<5x40xf32>
    %cst_117 = arith.constant 0.000000e+00 : f32
    %156 = vector.broadcast %cst_117 : f32 to vector<5x40xf32>
    %157 = arith.cmpf ogt, %155, %156 : vector<5x40xf32>
    %cst_118 = arith.constant 2.000000e-01 : f32
    %158 = vector.broadcast %cst_118 : f32 to vector<5x40xf32>
    %159 = arith.mulf %158, %155 : vector<5x40xf32>
    %160 = arith.select %157, %155, %159 : vector<5x40xi1>, vector<5x40xf32>
    %161 = arith.truncf %160 : vector<5x40xf32> to vector<5x40xbf16>
    %c0_119 = arith.constant 0 : index
    %c0_120 = arith.constant 0 : index
    %c0_121 = arith.constant 0 : index
    %162 = vector.load %arg14[%c0_119, %c0_120, %c0_121] : memref<3x40x24xbf16, #tpu.memory_space<vmem>>, vector<1x40x24xbf16>
    %163 = vector.shape_cast %162 : vector<1x40x24xbf16> to vector<40x24xbf16>
    %cst_122 = arith.constant dense<0.000000e+00> : vector<5x24xf32>
    %164 = tpu.matmul %161, %163, %cst_122 {dimension_numbers = #tpu.dot_dimension_numbers<[1], [0], [0], [1], [0, 0, 1, 1], [], []>} : vector<5x40xbf16>, vector<40x24xbf16>, vector<5x24xf32> -> vector<5x24xf32>
    %c0_123 = arith.constant 0 : index
    %c0_124 = arith.constant 0 : index
    %c0_125 = arith.constant 0 : index
    %165 = vector.load %arg15[%c0_123, %c0_124, %c0_125] : memref<3x3x5xf32, #tpu.memory_space<vmem>>, vector<1x3x5xf32>
    %166 = vector.shape_cast %165 : vector<1x3x5xf32> to vector<3x5xf32>
    %cst_126 = arith.constant dense<0.000000e+00> : vector<3x24xf32>
    %167 = tpu.matmul %166, %164, %cst_126 {dimension_numbers = #tpu.dot_dimension_numbers<[1], [0], [0], [1], [0, 0, 1, 1], [], []>} : vector<3x5xf32>, vector<5x24xf32>, vector<3x24xf32> -> vector<3x24xf32>
    %c1_127 = arith.constant 1 : index
    %c0_128 = arith.constant 0 : index
    %c0_129 = arith.constant 0 : index
    %168 = vector.load %arg14[%c1_127, %c0_128, %c0_129] : memref<3x40x24xbf16, #tpu.memory_space<vmem>>, vector<1x40x24xbf16>
    %169 = vector.shape_cast %168 : vector<1x40x24xbf16> to vector<40x24xbf16>
    %cst_130 = arith.constant dense<0.000000e+00> : vector<5x24xf32>
    %170 = tpu.matmul %161, %169, %cst_130 {dimension_numbers = #tpu.dot_dimension_numbers<[1], [0], [0], [1], [0, 0, 1, 1], [], []>} : vector<5x40xbf16>, vector<40x24xbf16>, vector<5x24xf32> -> vector<5x24xf32>
    %c1_131 = arith.constant 1 : index
    %c0_132 = arith.constant 0 : index
    %c0_133 = arith.constant 0 : index
    %171 = vector.load %arg15[%c1_131, %c0_132, %c0_133] : memref<3x3x5xf32, #tpu.memory_space<vmem>>, vector<1x3x5xf32>
    %172 = vector.shape_cast %171 : vector<1x3x5xf32> to vector<3x5xf32>
    %cst_134 = arith.constant dense<0.000000e+00> : vector<3x24xf32>
    %173 = tpu.matmul %172, %170, %cst_134 {dimension_numbers = #tpu.dot_dimension_numbers<[1], [0], [0], [1], [0, 0, 1, 1], [], []>} : vector<3x5xf32>, vector<5x24xf32>, vector<3x24xf32> -> vector<3x24xf32>
    %174 = arith.addf %167, %173 : vector<3x24xf32>
    %c2_135 = arith.constant 2 : index
    %c0_136 = arith.constant 0 : index
    %c0_137 = arith.constant 0 : index
    %175 = vector.load %arg14[%c2_135, %c0_136, %c0_137] : memref<3x40x24xbf16, #tpu.memory_space<vmem>>, vector<1x40x24xbf16>
    %176 = vector.shape_cast %175 : vector<1x40x24xbf16> to vector<40x24xbf16>
    %cst_138 = arith.constant dense<0.000000e+00> : vector<5x24xf32>
    %177 = tpu.matmul %161, %176, %cst_138 {dimension_numbers = #tpu.dot_dimension_numbers<[1], [0], [0], [1], [0, 0, 1, 1], [], []>} : vector<5x40xbf16>, vector<40x24xbf16>, vector<5x24xf32> -> vector<5x24xf32>
    %c2_139 = arith.constant 2 : index
    %c0_140 = arith.constant 0 : index
    %c0_141 = arith.constant 0 : index
    %178 = vector.load %arg15[%c2_139, %c0_140, %c0_141] : memref<3x3x5xf32, #tpu.memory_space<vmem>>, vector<1x3x5xf32>
    %179 = vector.shape_cast %178 : vector<1x3x5xf32> to vector<3x5xf32>
    %cst_142 = arith.constant dense<0.000000e+00> : vector<3x24xf32>
    %180 = tpu.matmul %179, %177, %cst_142 {dimension_numbers = #tpu.dot_dimension_numbers<[1], [0], [0], [1], [0, 0, 1, 1], [], []>} : vector<3x5xf32>, vector<5x24xf32>, vector<3x24xf32> -> vector<3x24xf32>
    %181 = arith.addf %174, %180 : vector<3x24xf32>
    %c0_143 = arith.constant 0 : index
    %c0_144 = arith.constant 0 : index
    %182 = vector.load %arg16[%c0_143, %c0_144] : memref<1x24xf32, #tpu.memory_space<vmem>>, vector<1x24xf32>
    %183 = vector.broadcast %182 : vector<1x24xf32> to vector<3x24xf32>
    %184 = arith.addf %181, %183 : vector<3x24xf32>
    %cst_145 = arith.constant dense<0.000000e+00> : vector<24xf32>
    %185 = vector.multi_reduction <add>, %184, %cst_145 [0] : vector<3x24xf32> to vector<24xf32>
    %186 = vector.shape_cast %185 : vector<24xf32> to vector<1x24xf32>
    %187 = arith.mulf %184, %184 : vector<3x24xf32>
    %cst_146 = arith.constant dense<0.000000e+00> : vector<24xf32>
    %188 = vector.multi_reduction <add>, %187, %cst_146 [0] : vector<3x24xf32> to vector<24xf32>
    %189 = vector.shape_cast %188 : vector<24xf32> to vector<1x24xf32>
    %c0_147 = arith.constant 0 : index
    %c0_148 = arith.constant 0 : index
    %190 = vector.load %arg17[%c0_147, %c0_148] : memref<24x24xf32, #tpu.memory_space<vmem>>, vector<24x24xf32>
    %cst_149 = arith.constant dense<0.000000e+00> : vector<1x24xf32>
    %191 = tpu.matmul %186, %190, %cst_149 {dimension_numbers = #tpu.dot_dimension_numbers<[1], [0], [0], [1], [0, 0, 1, 1], [], []>} : vector<1x24xf32>, vector<24x24xf32>, vector<1x24xf32> -> vector<1x24xf32>
    %cst_150 = arith.constant 0.111111112 : f32
    %192 = vector.broadcast %cst_150 : f32 to vector<1x24xf32>
    %193 = arith.mulf %191, %192 : vector<1x24xf32>
    %c0_151 = arith.constant 0 : index
    %c0_152 = arith.constant 0 : index
    %194 = vector.load %arg17[%c0_151, %c0_152] : memref<24x24xf32, #tpu.memory_space<vmem>>, vector<24x24xf32>
    %cst_153 = arith.constant dense<0.000000e+00> : vector<1x24xf32>
    %195 = tpu.matmul %189, %194, %cst_153 {dimension_numbers = #tpu.dot_dimension_numbers<[1], [0], [0], [1], [0, 0, 1, 1], [], []>} : vector<1x24xf32>, vector<24x24xf32>, vector<1x24xf32> -> vector<1x24xf32>
    %cst_154 = arith.constant 0.111111112 : f32
    %196 = vector.broadcast %cst_154 : f32 to vector<1x24xf32>
    %197 = arith.mulf %195, %196 : vector<1x24xf32>
    %198 = arith.mulf %193, %193 : vector<1x24xf32>
    %199 = arith.subf %197, %198 : vector<1x24xf32>
    %cst_155 = arith.constant 0.000000e+00 : f32
    %200 = vector.broadcast %cst_155 : f32 to vector<1x24xf32>
    %201 = arith.maximumf %199, %200 : vector<1x24xf32>
    %202 = vector.broadcast %193 : vector<1x24xf32> to vector<3x24xf32>
    %203 = arith.subf %184, %202 : vector<3x24xf32>
    %cst_156 = arith.constant 9.99999974E-6 : f32
    %204 = vector.broadcast %cst_156 : f32 to vector<1x24xf32>
    %205 = arith.addf %201, %204 : vector<1x24xf32>
    %206 = math.rsqrt %205 : vector<1x24xf32>
    %207 = vector.broadcast %206 : vector<1x24xf32> to vector<3x24xf32>
    %208 = arith.mulf %203, %207 : vector<3x24xf32>
    %cst_157 = arith.constant 0.000000e+00 : f32
    %209 = vector.broadcast %cst_157 : f32 to vector<3x24xf32>
    %210 = arith.cmpf ogt, %208, %209 : vector<3x24xf32>
    %cst_158 = arith.constant 2.000000e-01 : f32
    %211 = vector.broadcast %cst_158 : f32 to vector<3x24xf32>
    %212 = arith.mulf %211, %208 : vector<3x24xf32>
    %213 = arith.select %210, %208, %212 : vector<3x24xi1>, vector<3x24xf32>
    %214 = arith.truncf %213 : vector<3x24xf32> to vector<3x24xbf16>
    %c0_159 = arith.constant 0 : index
    %c0_160 = arith.constant 0 : index
    %c0_161 = arith.constant 0 : index
    %215 = vector.load %arg18[%c0_159, %c0_160, %c0_161] : memref<3x24x1xbf16, #tpu.memory_space<vmem>>, vector<1x24x1xbf16>
    %216 = vector.shape_cast %215 : vector<1x24x1xbf16> to vector<24x1xbf16>
    %cst_162 = arith.constant dense<0.000000e+00> : vector<3x1xf32>
    %217 = tpu.matmul %214, %216, %cst_162 {dimension_numbers = #tpu.dot_dimension_numbers<[1], [0], [0], [1], [0, 0, 1, 1], [], []>} : vector<3x24xbf16>, vector<24x1xbf16>, vector<3x1xf32> -> vector<3x1xf32>
    %c0_163 = arith.constant 0 : index
    %c0_164 = arith.constant 0 : index
    %c0_165 = arith.constant 0 : index
    %218 = vector.load %arg19[%c0_163, %c0_164, %c0_165] : memref<3x1x3xf32, #tpu.memory_space<vmem>>, vector<1x1x3xf32>
    %219 = vector.shape_cast %218 : vector<1x1x3xf32> to vector<1x3xf32>
    %cst_166 = arith.constant dense<0.000000e+00> : vector<1x1xf32>
    %220 = tpu.matmul %219, %217, %cst_166 {dimension_numbers = #tpu.dot_dimension_numbers<[1], [0], [0], [1], [0, 0, 1, 1], [], []>} : vector<1x3xf32>, vector<3x1xf32>, vector<1x1xf32> -> vector<1x1xf32>
    %c1_167 = arith.constant 1 : index
    %c0_168 = arith.constant 0 : index
    %c0_169 = arith.constant 0 : index
    %221 = vector.load %arg18[%c1_167, %c0_168, %c0_169] : memref<3x24x1xbf16, #tpu.memory_space<vmem>>, vector<1x24x1xbf16>
    %222 = vector.shape_cast %221 : vector<1x24x1xbf16> to vector<24x1xbf16>
    %cst_170 = arith.constant dense<0.000000e+00> : vector<3x1xf32>
    %223 = tpu.matmul %214, %222, %cst_170 {dimension_numbers = #tpu.dot_dimension_numbers<[1], [0], [0], [1], [0, 0, 1, 1], [], []>} : vector<3x24xbf16>, vector<24x1xbf16>, vector<3x1xf32> -> vector<3x1xf32>
    %c1_171 = arith.constant 1 : index
    %c0_172 = arith.constant 0 : index
    %c0_173 = arith.constant 0 : index
    %224 = vector.load %arg19[%c1_171, %c0_172, %c0_173] : memref<3x1x3xf32, #tpu.memory_space<vmem>>, vector<1x1x3xf32>
    %225 = vector.shape_cast %224 : vector<1x1x3xf32> to vector<1x3xf32>
    %cst_174 = arith.constant dense<0.000000e+00> : vector<1x1xf32>
    %226 = tpu.matmul %225, %223, %cst_174 {dimension_numbers = #tpu.dot_dimension_numbers<[1], [0], [0], [1], [0, 0, 1, 1], [], []>} : vector<1x3xf32>, vector<3x1xf32>, vector<1x1xf32> -> vector<1x1xf32>
    %227 = arith.addf %220, %226 : vector<1x1xf32>
    %c2_175 = arith.constant 2 : index
    %c0_176 = arith.constant 0 : index
    %c0_177 = arith.constant 0 : index
    %228 = vector.load %arg18[%c2_175, %c0_176, %c0_177] : memref<3x24x1xbf16, #tpu.memory_space<vmem>>, vector<1x24x1xbf16>
    %229 = vector.shape_cast %228 : vector<1x24x1xbf16> to vector<24x1xbf16>
    %cst_178 = arith.constant dense<0.000000e+00> : vector<3x1xf32>
    %230 = tpu.matmul %214, %229, %cst_178 {dimension_numbers = #tpu.dot_dimension_numbers<[1], [0], [0], [1], [0, 0, 1, 1], [], []>} : vector<3x24xbf16>, vector<24x1xbf16>, vector<3x1xf32> -> vector<3x1xf32>
    %c2_179 = arith.constant 2 : index
    %c0_180 = arith.constant 0 : index
    %c0_181 = arith.constant 0 : index
    %231 = vector.load %arg19[%c2_179, %c0_180, %c0_181] : memref<3x1x3xf32, #tpu.memory_space<vmem>>, vector<1x1x3xf32>
    %232 = vector.shape_cast %231 : vector<1x1x3xf32> to vector<1x3xf32>
    %cst_182 = arith.constant dense<0.000000e+00> : vector<1x1xf32>
    %233 = tpu.matmul %232, %230, %cst_182 {dimension_numbers = #tpu.dot_dimension_numbers<[1], [0], [0], [1], [0, 0, 1, 1], [], []>} : vector<1x3xf32>, vector<3x1xf32>, vector<1x1xf32> -> vector<1x1xf32>
    %234 = arith.addf %227, %233 : vector<1x1xf32>
    %c0_183 = arith.constant 0 : index
    %c0_184 = arith.constant 0 : index
    %235 = vector.load %arg20[%c0_183, %c0_184] : memref<1x1xf32, #tpu.memory_space<vmem>>, vector<1x1xf32>
    %236 = arith.addf %234, %235 : vector<1x1xf32>
    %237 = arith.negf %236 : vector<1x1xf32>
    %238 = math.exp %237 : vector<1x1xf32>
    %cst_185 = arith.constant 1.000000e+00 : f32
    %239 = vector.broadcast %cst_185 : f32 to vector<1x1xf32>
    %240 = arith.addf %239, %238 : vector<1x1xf32>
    %241 = arith.divf %239, %240 : vector<1x1xf32>
    %c0_186 = arith.constant 0 : index
    %c0_187 = arith.constant 0 : index
    %c0_188 = arith.constant 0 : index
    %242 = vector.load %arg21[%c0_186, %c0_187, %c0_188] : memref<1x1x1xf32, #tpu.memory_space<vmem>>, vector<1x1x1xf32>
    %243 = vector.shape_cast %242 : vector<1x1x1xf32> to vector<1x1xf32>
    %244 = vector.shape_cast %241 : vector<1x1xf32> to vector<1x1x1xf32>
    tpu.vector_store %arg21[%c0_186, %c0_187, %c0_188], %244 {strides = array<i32>} : memref<1x1x1xf32, #tpu.memory_space<vmem>>, vector<1x1x1xf32>,
    return
  }
  func.func @transform_0(%arg0: i32) -> (i32, i32, i32) {
    %c0_i32 = arith.constant 0 : i32
    %c0_i32_0 = arith.constant 0 : i32
    %c0_i32_1 = arith.constant 0 : i32
    return %arg0, %c0_i32, %c0_i32_0 : i32, i32, i32
  }
  func.func @transform_1(%arg0: i32) -> (i32, i32, i32) {
    %c0_i32 = arith.constant 0 : i32
    %c0_i32_0 = arith.constant 0 : i32
    %c0_i32_1 = arith.constant 0 : i32
    %c0_i32_2 = arith.constant 0 : i32
    return %c0_i32, %c0_i32_0, %c0_i32_1 : i32, i32, i32
  }
  func.func @transform_2(%arg0: i32) -> (i32, i32, i32) {
    %c0_i32 = arith.constant 0 : i32
    %c0_i32_0 = arith.constant 0 : i32
    %c0_i32_1 = arith.constant 0 : i32
    %c0_i32_2 = arith.constant 0 : i32
    return %c0_i32, %c0_i32_0, %c0_i32_1 : i32, i32, i32
  }
  func.func @transform_3(%arg0: i32) -> (i32, i32) {
    %c0_i32 = arith.constant 0 : i32
    %c0_i32_0 = arith.constant 0 : i32
    %c0_i32_1 = arith.constant 0 : i32
    return %c0_i32, %c0_i32_0 : i32, i32
  }
  func.func @transform_4(%arg0: i32) -> (i32, i32) {
    %c0_i32 = arith.constant 0 : i32
    %c0_i32_0 = arith.constant 0 : i32
    %c0_i32_1 = arith.constant 0 : i32
    return %c0_i32, %c0_i32_0 : i32, i32
  }
  func.func @transform_5(%arg0: i32) -> (i32, i32, i32) {
    %c0_i32 = arith.constant 0 : i32
    %c0_i32_0 = arith.constant 0 : i32
    %c0_i32_1 = arith.constant 0 : i32
    %c0_i32_2 = arith.constant 0 : i32
    return %c0_i32, %c0_i32_0, %c0_i32_1 : i32, i32, i32
  }
  func.func @transform_6(%arg0: i32) -> (i32, i32, i32) {
    %c0_i32 = arith.constant 0 : i32
    %c0_i32_0 = arith.constant 0 : i32
    %c0_i32_1 = arith.constant 0 : i32
    %c0_i32_2 = arith.constant 0 : i32
    return %c0_i32, %c0_i32_0, %c0_i32_1 : i32, i32, i32
  }
  func.func @transform_7(%arg0: i32) -> (i32, i32) {
    %c0_i32 = arith.constant 0 : i32
    %c0_i32_0 = arith.constant 0 : i32
    %c0_i32_1 = arith.constant 0 : i32
    return %c0_i32, %c0_i32_0 : i32, i32
  }
  func.func @transform_8(%arg0: i32) -> (i32, i32) {
    %c0_i32 = arith.constant 0 : i32
    %c0_i32_0 = arith.constant 0 : i32
    %c0_i32_1 = arith.constant 0 : i32
    return %c0_i32, %c0_i32_0 : i32, i32
  }
  func.func @transform_9(%arg0: i32) -> (i32, i32, i32) {
    %c0_i32 = arith.constant 0 : i32
    %c0_i32_0 = arith.constant 0 : i32
    %c0_i32_1 = arith.constant 0 : i32
    %c0_i32_2 = arith.constant 0 : i32
    return %c0_i32, %c0_i32_0, %c0_i32_1 : i32, i32, i32
  }
  func.func @transform_10(%arg0: i32) -> (i32, i32, i32) {
    %c0_i32 = arith.constant 0 : i32
    %c0_i32_0 = arith.constant 0 : i32
    %c0_i32_1 = arith.constant 0 : i32
    %c0_i32_2 = arith.constant 0 : i32
    return %c0_i32, %c0_i32_0, %c0_i32_1 : i32, i32, i32
  }
  func.func @transform_11(%arg0: i32) -> (i32, i32) {
    %c0_i32 = arith.constant 0 : i32
    %c0_i32_0 = arith.constant 0 : i32
    %c0_i32_1 = arith.constant 0 : i32
    return %c0_i32, %c0_i32_0 : i32, i32
  }
  func.func @transform_12(%arg0: i32) -> (i32, i32) {
    %c0_i32 = arith.constant 0 : i32
    %c0_i32_0 = arith.constant 0 : i32
    %c0_i32_1 = arith.constant 0 : i32
    return %c0_i32, %c0_i32_0 : i32, i32
  }
  func.func @transform_13(%arg0: i32) -> (i32, i32, i32) {
    %c0_i32 = arith.constant 0 : i32
    %c0_i32_0 = arith.constant 0 : i32
    %c0_i32_1 = arith.constant 0 : i32
    %c0_i32_2 = arith.constant 0 : i32
    return %c0_i32, %c0_i32_0, %c0_i32_1 : i32, i32, i32
  }
  func.func @transform_14(%arg0: i32) -> (i32, i32, i32) {
    %c0_i32 = arith.constant 0 : i32
    %c0_i32_0 = arith.constant 0 : i32
    %c0_i32_1 = arith.constant 0 : i32
    %c0_i32_2 = arith.constant 0 : i32
    return %c0_i32, %c0_i32_0, %c0_i32_1 : i32, i32, i32
  }
  func.func @transform_15(%arg0: i32) -> (i32, i32) {
    %c0_i32 = arith.constant 0 : i32
    %c0_i32_0 = arith.constant 0 : i32
    %c0_i32_1 = arith.constant 0 : i32
    return %c0_i32, %c0_i32_0 : i32, i32
  }
  func.func @transform_16(%arg0: i32) -> (i32, i32) {
    %c0_i32 = arith.constant 0 : i32
    %c0_i32_0 = arith.constant 0 : i32
    %c0_i32_1 = arith.constant 0 : i32
    return %c0_i32, %c0_i32_0 : i32, i32
  }
  func.func @transform_17(%arg0: i32) -> (i32, i32, i32) {
    %c0_i32 = arith.constant 0 : i32
    %c0_i32_0 = arith.constant 0 : i32
    %c0_i32_1 = arith.constant 0 : i32
    %c0_i32_2 = arith.constant 0 : i32
    return %c0_i32, %c0_i32_0, %c0_i32_1 : i32, i32, i32
  }
  func.func @transform_18(%arg0: i32) -> (i32, i32, i32) {
    %c0_i32 = arith.constant 0 : i32
    %c0_i32_0 = arith.constant 0 : i32
    %c0_i32_1 = arith.constant 0 : i32
    %c0_i32_2 = arith.constant 0 : i32
    return %c0_i32, %c0_i32_0, %c0_i32_1 : i32, i32, i32
  }
  func.func @transform_19(%arg0: i32) -> (i32, i32) {
    %c0_i32 = arith.constant 0 : i32
    %c0_i32_0 = arith.constant 0 : i32
    %c0_i32_1 = arith.constant 0 : i32
    return %c0_i32, %c0_i32_0 : i32, i32
  }
  func.func @transform_20(%arg0: i32) -> (i32, i32, i32) {
    %c0_i32 = arith.constant 0 : i32
    %c0_i32_0 = arith.constant 0 : i32
    %c0_i32_1 = arith.constant 0 : i32
    return %arg0, %c0_i32, %c0_i32_0 : i32, i32, i32
  }
}

</mosaic_0001>

<llo_original>
// kernel: forward.1
$region0: #{forward.1}
  #allocation0 [shape = 'u32[]', space=smem, size = 0x4, offset = 0x4, fixed_abs, tag = 'smem constant byte address 0x4 - core index']
  #allocation1 [shape = 'u32[144,128]{1,0:T(1,128)}', space=vmem, size = 0x12000, scoped, tag = 'internal scratch']
  #allocation2 [shape = 'f32[1,1]{1,0:T(1,128)S(1)}', space=vmem, size = 0x200, scoped, tag = 'scoped memory for forward.1']
  %s0 = inlined_call_operand.vmem [shape: f32[2,38,304], index: 0, kind: input, shape index: {}]
  %s1 = inlined_call_operand.vmem [shape: bf16[3,304,152], index: 1, kind: input, shape index: {}]
  %s2 = inlined_call_operand.vmem [shape: f32[3,19,38], index: 2, kind: input, shape index: {}]
  %s3 = inlined_call_operand.vmem [shape: f32[1,152], index: 3, kind: input, shape index: {}]
  %s4 = inlined_call_operand.vmem [shape: f32[152,152], index: 4, kind: input, shape index: {}]
  %s5 = inlined_call_operand.vmem [shape: bf16[3,152,80], index: 5, kind: input, shape index: {}]
  %s6 = inlined_call_operand.vmem [shape: f32[3,10,19], index: 6, kind: input, shape index: {}]
  %s7 = inlined_call_operand.vmem [shape: f32[1,80], index: 7, kind: input, shape index: {}]
  %s8 = inlined_call_operand.vmem [shape: f32[80,80], index: 8, kind: input, shape index: {}]
  %s9 = inlined_call_operand.vmem [shape: bf16[3,80,40], index: 9, kind: input, shape index: {}]
  %s10 = inlined_call_operand.vmem [shape: f32[3,5,10], index: 10, kind: input, shape index: {}]
  %s11 = inlined_call_operand.vmem [shape: f32[1,40], index: 11, kind: input, shape index: {}]
  %s12 = inlined_call_operand.vmem [shape: f32[40,40], index: 12, kind: input, shape index: {}]
  %s13 = inlined_call_operand.vmem [shape: bf16[3,40,24], index: 13, kind: input, shape index: {}]
  %s14 = inlined_call_operand.vmem [shape: f32[3,3,5], index: 14, kind: input, shape index: {}]
  %s15 = inlined_call_operand.vmem [shape: f32[1,24], index: 15, kind: input, shape index: {}]
  %s16 = inlined_call_operand.vmem [shape: f32[24,24], index: 16, kind: input, shape index: {}]
  %s17 = inlined_call_operand.vmem [shape: bf16[3,24,1], index: 17, kind: input, shape index: {}]
  %s18 = inlined_call_operand.vmem [shape: f32[3,1,3], index: 18, kind: input, shape index: {}]
  %s19 = inlined_call_operand.<no memory space> [shape: f32[1,1], index: 19, kind: input, shape index: {}]
  %s20 = inlined_call_operand.vmem [shape: f32[2,1,1], index: 20, kind: output, shape index: {}]
  %s21 = sld [smem:[#allocation0]]
  $region113: #{forward.1} parent=0
    _
  %s23 = ssub.s32 1, %s21
  %s24 = scalar_select 0, %s23, %s21
  %v25 = vstv %s19
  %26 = vst [vmem:[#allocation2] sm:$0x1] %v25
  loop: start=0, step=1, limit=4
  $region2: #{forward.1} parent=0 // loop_pre_header
    _
  $region3: #{forward.1} parent=0 // loop_header
    %s28 = sphi 0, %s32
    %p29 = scmp.ge.s32.totalorder %s28, 4
    %s38 = sphi 0, %s40
    %s41 = sphi 0, %s38
    %s42 = sphi 0, %s41
    %s58 = sphi 0, %s42
    %s62 = sphi 0, %s62
    %s64 = sphi 0, %s62
    %s65 = sphi 0, %s64
    %s79 = sphi 0, %s65
    %s83 = sphi 0, %s83
    %s85 = sphi 0, %s83
    %s86 = sphi 0, %s85
    %s100 = sphi 0, %s86
    %s104 = sphi 0, %s104
    %s106 = sphi 0, %s104
    %s107 = sphi 0, %s106
    %s121 = sphi 0, %s107
    %s125 = sphi 0, %s125
    %s127 = sphi 0, %s125
    %s128 = sphi 0, %s127
    %s142 = sphi 0, %s128
    %s146 = sphi 0, %s146
    %s148 = sphi 0, %s146
    %s149 = sphi 0, %s148
    %s163 = sphi 0, %s149
    %s167 = sphi 0, %s167
    %s169 = sphi 0, %s167
    %s170 = sphi 0, %s169
    %s184 = sphi 0, %s170
    %s188 = sphi 0, %s188
    %s190 = sphi 0, %s188
    %s191 = sphi 0, %s190
    %s205 = sphi 0, %s191
    %s209 = sphi 0, %s209
    %s211 = sphi 0, %s209
    %s212 = sphi 0, %s211
    %s226 = sphi 0, %s212
    %s230 = sphi 0, %s230
    %s232 = sphi 0, %s230
    %s233 = sphi 0, %s232
    %s247 = sphi 0, %s233
    %s251 = sphi 0, %s251
    %s253 = sphi 0, %s251
    %s254 = sphi 0, %s253
    %s268 = sphi 0, %s254
    %s272 = sphi 0, %s272
    %s274 = sphi 0, %s272
    %s275 = sphi 0, %s274
    %s289 = sphi 0, %s275
    %s293 = sphi 0, %s293
    %s295 = sphi 0, %s293
    %s296 = sphi 0, %s295
    %s310 = sphi 0, %s296
    %s314 = sphi 0, %s314
    %s316 = sphi 0, %s314
    %s317 = sphi 0, %s316
    %s331 = sphi 0, %s317
    %s335 = sphi 0, %s335
    %s337 = sphi 0, %s335
    %s338 = sphi 0, %s337
    %s352 = sphi 0, %s338
    %s356 = sphi 0, %s356
    %s358 = sphi 0, %s356
    %s359 = sphi 0, %s358
    %s373 = sphi 0, %s359
    %s377 = sphi 0, %s377
    %s379 = sphi 0, %s377
    %s380 = sphi 0, %s379
    %s394 = sphi 0, %s380
    %s398 = sphi 0, %s398
    %s400 = sphi 0, %s398
    %s401 = sphi 0, %s400
    %s415 = sphi 0, %s401
    %s419 = sphi 0, %s419
    %s421 = sphi 0, %s419
    %s422 = sphi 0, %s421
    %s436 = sphi 0, %s422
    %s440 = sphi 0, %s440
    %s442 = sphi 0, %s440
    %s443 = sphi 0, %s442
    %s457 = sphi 0, %s443
    %s463 = sphi 0, %s465
    %s466 = sphi 0, %s463
    %s467 = sphi 0, %s466
    %s483 = sphi 0, %s467
  $region4: #{forward.1} parent=0 // loop_header_branch
    %31 = sbr.rel (%p29) target = $region8
  $region5: #{forward.1} parent=0 // loop_body
    %s33 = ssub.s32 %s28, 1
    %s34 = ssub.s32 %s28, 2
    %s35 = sadd.s32 %s28, 1
    %s36 = ssub.s32 %s28, %s35
    %p37 = scmp.eq.s32.totalorder %s36, 0
    %s39 = sadd.s32 %s38, 1
    %s40 = scalar_select %p37, %s38, %s39
    %p43 = pneg %p37
    %p44 = scmp.eq.s32.totalorder %s28, 1
    %p45 = por %p43, %p44
    %p46 = scmp.ne.s32.totalorder %s38, %s41
    %p47 = scmp.eq.s32.totalorder %s28, 0
    %p48 = por %p46, %p47
    %p49 = scmp.ne.s32.totalorder %s38, %s41
    %p50 = scmp.eq.s32.totalorder %s33, 1
    %p51 = por %p49, %p50
    %p52 = scmp.ne.s32.totalorder %s41, %s42
    %p53 = scmp.eq.s32.totalorder %s33, 0
    %p54 = por %p52, %p53
    %p55 = scmp.ne.s32.totalorder %s41, %s42
    %p56 = scmp.eq.s32.totalorder %s34, 1
    %p57 = por %p55, %p56
    %p59 = scmp.ne.s32.totalorder %s42, %s58
    %p60 = scmp.eq.s32.totalorder %s34, 0
    %p61 = por %p59, %p60
    %s63 = sadd.s32 %s62, 1
    %p66 = scmp.eq.s32.totalorder %s28, 1
    %p67 = scmp.ne.s32.totalorder %s62, %s64
    %p68 = scmp.eq.s32.totalorder %s28, 0
    %p69 = por %p67, %p68
    %p70 = scmp.ne.s32.totalorder %s62, %s64
    %p71 = scmp.eq.s32.totalorder %s33, 1
    %p72 = por %p70, %p71
    %p73 = scmp.ne.s32.totalorder %s64, %s65
    %p74 = scmp.eq.s32.totalorder %s33, 0
    %p75 = por %p73, %p74
    %p76 = scmp.ne.s32.totalorder %s64, %s65
    %p77 = scmp.eq.s32.totalorder %s34, 1
    %p78 = por %p76, %p77
    %p80 = scmp.ne.s32.totalorder %s65, %s79
    %p81 = scmp.eq.s32.totalorder %s34, 0
    %p82 = por %p80, %p81
    %s84 = sadd.s32 %s83, 1
    %p87 = scmp.eq.s32.totalorder %s28, 1
    %p88 = scmp.ne.s32.totalorder %s83, %s85
    %p89 = scmp.eq.s32.totalorder %s28, 0
    %p90 = por %p88, %p89
    %p91 = scmp.ne.s32.totalorder %s83, %s85
    %p92 = scmp.eq.s32.totalorder %s33, 1
    %p93 = por %p91, %p92
    %p94 = scmp.ne.s32.totalorder %s85, %s86
    %p95 = scmp.eq.s32.totalorder %s33, 0
    %p96 = por %p94, %p95
    %p97 = scmp.ne.s32.totalorder %s85, %s86
    %p98 = scmp.eq.s32.totalorder %s34, 1
    %p99 = por %p97, %p98
    %p101 = scmp.ne.s32.totalorder %s86, %s100
    %p102 = scmp.eq.s32.totalorder %s34, 0
    %p103 = por %p101, %p102
    %s105 = sadd.s32 %s104, 1
    %p108 = scmp.eq.s32.totalorder %s28, 1
    %p109 = scmp.ne.s32.totalorder %s104, %s106
    %p110 = scmp.eq.s32.totalorder %s28, 0
    %p111 = por %p109, %p110
    %p112 = scmp.ne.s32.totalorder %s104, %s106
    %p113 = scmp.eq.s32.totalorder %s33, 1
    %p114 = por %p112, %p113
    %p115 = scmp.ne.s32.totalorder %s106, %s107
    %p116 = scmp.eq.s32.totalorder %s33, 0
    %p117 = por %p115, %p116
    %p118 = scmp.ne.s32.totalorder %s106, %s107
    %p119 = scmp.eq.s32.totalorder %s34, 1
    %p120 = por %p118, %p119
    %p122 = scmp.ne.s32.totalorder %s107, %s121
    %p123 = scmp.eq.s32.totalorder %s34, 0
    %p124 = por %p122, %p123
    %s126 = sadd.s32 %s125, 1
    %p129 = scmp.eq.s32.totalorder %s28, 1
    %p130 = scmp.ne.s32.totalorder %s125, %s127
    %p131 = scmp.eq.s32.totalorder %s28, 0
    %p132 = por %p130, %p131
    %p133 = scmp.ne.s32.totalorder %s125, %s127
    %p134 = scmp.eq.s32.totalorder %s33, 1
    %p135 = por %p133, %p134
    %p136 = scmp.ne.s32.totalorder %s127, %s128
    %p137 = scmp.eq.s32.totalorder %s33, 0
    %p138 = por %p136, %p137
    %p139 = scmp.ne.s32.totalorder %s127, %s128
    %p140 = scmp.eq.s32.totalorder %s34, 1
    %p141 = por %p139, %p140
    %p143 = scmp.ne.s32.totalorder %s128, %s142
    %p144 = scmp.eq.s32.totalorder %s34, 0
    %p145 = por %p143, %p144
    %s147 = sadd.s32 %s146, 1
    %p150 = scmp.eq.s32.totalorder %s28, 1
    %p151 = scmp.ne.s32.totalorder %s146, %s148
    %p152 = scmp.eq.s32.totalorder %s28, 0
    %p153 = por %p151, %p152
    %p154 = scmp.ne.s32.totalorder %s146, %s148
    %p155 = scmp.eq.s32.totalorder %s33, 1
    %p156 = por %p154, %p155
    %p157 = scmp.ne.s32.totalorder %s148, %s149
    %p158 = scmp.eq.s32.totalorder %s33, 0
    %p159 = por %p157, %p158
    %p160 = scmp.ne.s32.totalorder %s148, %s149
    %p161 = scmp.eq.s32.totalorder %s34, 1
    %p162 = por %p160, %p161
    %p164 = scmp.ne.s32.totalorder %s149, %s163
    %p165 = scmp.eq.s32.totalorder %s34, 0
    %p166 = por %p164, %p165
    %s168 = sadd.s32 %s167, 1
    %p171 = scmp.eq.s32.totalorder %s28, 1
    %p172 = scmp.ne.s32.totalorder %s167, %s169
    %p173 = scmp.eq.s32.totalorder %s28, 0
    %p174 = por %p172, %p173
    %p175 = scmp.ne.s32.totalorder %s167, %s169
    %p176 = scmp.eq.s32.totalorder %s33, 1
    %p177 = por %p175, %p176
    %p178 = scmp.ne.s32.totalorder %s169, %s170
    %p179 = scmp.eq.s32.totalorder %s33, 0
    %p180 = por %p178, %p179
    %p181 = scmp.ne.s32.totalorder %s169, %s170
    %p182 = scmp.eq.s32.totalorder %s34, 1
    %p183 = por %p181, %p182
    %p185 = scmp.ne.s32.totalorder %s170, %s184
    %p186 = scmp.eq.s32.totalorder %s34, 0
    %p187 = por %p185, %p186
    %s189 = sadd.s32 %s188, 1
    %p192 = scmp.eq.s32.totalorder %s28, 1
    %p193 = scmp.ne.s32.totalorder %s188, %s190
    %p194 = scmp.eq.s32.totalorder %s28, 0
    %p195 = por %p193, %p194
    %p196 = scmp.ne.s32.totalorder %s188, %s190
    %p197 = scmp.eq.s32.totalorder %s33, 1
    %p198 = por %p196, %p197
    %p199 = scmp.ne.s32.totalorder %s190, %s191
    %p200 = scmp.eq.s32.totalorder %s33, 0
    %p201 = por %p199, %p200
    %p202 = scmp.ne.s32.totalorder %s190, %s191
    %p203 = scmp.eq.s32.totalorder %s34, 1
    %p204 = por %p202, %p203
    %p206 = scmp.ne.s32.totalorder %s191, %s205
    %p207 = scmp.eq.s32.totalorder %s34, 0
    %p208 = por %p206, %p207
    %s210 = sadd.s32 %s209, 1
    %p213 = scmp.eq.s32.totalorder %s28, 1
    %p214 = scmp.ne.s32.totalorder %s209, %s211
    %p215 = scmp.eq.s32.totalorder %s28, 0
    %p216 = por %p214, %p215
    %p217 = scmp.ne.s32.totalorder %s209, %s211
    %p218 = scmp.eq.s32.totalorder %s33, 1
    %p219 = por %p217, %p218
    %p220 = scmp.ne.s32.totalorder %s211, %s212
    %p221 = scmp.eq.s32.totalorder %s33, 0
    %p222 = por %p220, %p221
    %p223 = scmp.ne.s32.totalorder %s211, %s212
    %p224 = scmp.eq.s32.totalorder %s34, 1
    %p225 = por %p223, %p224
    %p227 = scmp.ne.s32.totalorder %s212, %s226
    %p228 = scmp.eq.s32.totalorder %s34, 0
    %p229 = por %p227, %p228
    %s231 = sadd.s32 %s230, 1
    %p234 = scmp.eq.s32.totalorder %s28, 1
    %p235 = scmp.ne.s32.totalorder %s230, %s232
    %p236 = scmp.eq.s32.totalorder %s28, 0
    %p237 = por %p235, %p236
    %p238 = scmp.ne.s32.totalorder %s230, %s232
    %p239 = scmp.eq.s32.totalorder %s33, 1
    %p240 = por %p238, %p239
    %p241 = scmp.ne.s32.totalorder %s232, %s233
    %p242 = scmp.eq.s32.totalorder %s33, 0
    %p243 = por %p241, %p242
    %p244 = scmp.ne.s32.totalorder %s232, %s233
    %p245 = scmp.eq.s32.totalorder %s34, 1
    %p246 = por %p244, %p245
    %p248 = scmp.ne.s32.totalorder %s233, %s247
    %p249 = scmp.eq.s32.totalorder %s34, 0
    %p250 = por %p248, %p249
    %s252 = sadd.s32 %s251, 1
    %p255 = scmp.eq.s32.totalorder %s28, 1
    %p256 = scmp.ne.s32.totalorder %s251, %s253
    %p257 = scmp.eq.s32.totalorder %s28, 0
    %p258 = por %p256, %p257
    %p259 = scmp.ne.s32.totalorder %s251, %s253
    %p260 = scmp.eq.s32.totalorder %s33, 1
    %p261 = por %p259, %p260
    %p262 = scmp.ne.s32.totalorder %s253, %s254
    %p263 = scmp.eq.s32.totalorder %s33, 0
    %p264 = por %p262, %p263
    %p265 = scmp.ne.s32.totalorder %s253, %s254
    %p266 = scmp.eq.s32.totalorder %s34, 1
    %p267 = por %p265, %p266
    %p269 = scmp.ne.s32.totalorder %s254, %s268
    %p270 = scmp.eq.s32.totalorder %s34, 0
    %p271 = por %p269, %p270
    %s273 = sadd.s32 %s272, 1
    %p276 = scmp.eq.s32.totalorder %s28, 1
    %p277 = scmp.ne.s32.totalorder %s272, %s274
    %p278 = scmp.eq.s32.totalorder %s28, 0
    %p279 = por %p277, %p278
    %p280 = scmp.ne.s32.totalorder %s272, %s274
    %p281 = scmp.eq.s32.totalorder %s33, 1
    %p282 = por %p280, %p281
    %p283 = scmp.ne.s32.totalorder %s274, %s275
    %p284 = scmp.eq.s32.totalorder %s33, 0
    %p285 = por %p283, %p284
    %p286 = scmp.ne.s32.totalorder %s274, %s275
    %p287 = scmp.eq.s32.totalorder %s34, 1
    %p288 = por %p286, %p287
    %p290 = scmp.ne.s32.totalorder %s275, %s289
    %p291 = scmp.eq.s32.totalorder %s34, 0
    %p292 = por %p290, %p291
    %s294 = sadd.s32 %s293, 1
    %p297 = scmp.eq.s32.totalorder %s28, 1
    %p298 = scmp.ne.s32.totalorder %s293, %s295
    %p299 = scmp.eq.s32.totalorder %s28, 0
    %p300 = por %p298, %p299
    %p301 = scmp.ne.s32.totalorder %s293, %s295
    %p302 = scmp.eq.s32.totalorder %s33, 1
    %p303 = por %p301, %p302
    %p304 = scmp.ne.s32.totalorder %s295, %s296
    %p305 = scmp.eq.s32.totalorder %s33, 0
    %p306 = por %p304, %p305
    %p307 = scmp.ne.s32.totalorder %s295, %s296
    %p308 = scmp.eq.s32.totalorder %s34, 1
    %p309 = por %p307, %p308
    %p311 = scmp.ne.s32.totalorder %s296, %s310
    %p312 = scmp.eq.s32.totalorder %s34, 0
    %p313 = por %p311, %p312
    %s315 = sadd.s32 %s314, 1
    %p318 = scmp.eq.s32.totalorder %s28, 1
    %p319 = scmp.ne.s32.totalorder %s314, %s316
    %p320 = scmp.eq.s32.totalorder %s28, 0
    %p321 = por %p319, %p320
    %p322 = scmp.ne.s32.totalorder %s314, %s316
    %p323 = scmp.eq.s32.totalorder %s33, 1
    %p324 = por %p322, %p323
    %p325 = scmp.ne.s32.totalorder %s316, %s317
    %p326 = scmp.eq.s32.totalorder %s33, 0
    %p327 = por %p325, %p326
    %p328 = scmp.ne.s32.totalorder %s316, %s317
    %p329 = scmp.eq.s32.totalorder %s34, 1
    %p330 = por %p328, %p329
    %p332 = scmp.ne.s32.totalorder %s317, %s331
    %p333 = scmp.eq.s32.totalorder %s34, 0
    %p334 = por %p332, %p333
    %s336 = sadd.s32 %s335, 1
    %p339 = scmp.eq.s32.totalorder %s28, 1
    %p340 = scmp.ne.s32.totalorder %s335, %s337
    %p341 = scmp.eq.s32.totalorder %s28, 0
    %p342 = por %p340, %p341
    %p343 = scmp.ne.s32.totalorder %s335, %s337
    %p344 = scmp.eq.s32.totalorder %s33, 1
    %p345 = por %p343, %p344
    %p346 = scmp.ne.s32.totalorder %s337, %s338
    %p347 = scmp.eq.s32.totalorder %s33, 0
    %p348 = por %p346, %p347
    %p349 = scmp.ne.s32.totalorder %s337, %s338
    %p350 = scmp.eq.s32.totalorder %s34, 1
    %p351 = por %p349, %p350
    %p353 = scmp.ne.s32.totalorder %s338, %s352
    %p354 = scmp.eq.s32.totalorder %s34, 0
    %p355 = por %p353, %p354
    %s357 = sadd.s32 %s356, 1
    %p360 = scmp.eq.s32.totalorder %s28, 1
    %p361 = scmp.ne.s32.totalorder %s356, %s358
    %p362 = scmp.eq.s32.totalorder %s28, 0
    %p363 = por %p361, %p362
    %p364 = scmp.ne.s32.totalorder %s356, %s358
    %p365 = scmp.eq.s32.totalorder %s33, 1
    %p366 = por %p364, %p365
    %p367 = scmp.ne.s32.totalorder %s358, %s359
    %p368 = scmp.eq.s32.totalorder %s33, 0
    %p369 = por %p367, %p368
    %p370 = scmp.ne.s32.totalorder %s358, %s359
    %p371 = scmp.eq.s32.totalorder %s34, 1
    %p372 = por %p370, %p371
    %p374 = scmp.ne.s32.totalorder %s359, %s373
    %p375 = scmp.eq.s32.totalorder %s34, 0
    %p376 = por %p374, %p375
    %s378 = sadd.s32 %s377, 1
    %p381 = scmp.eq.s32.totalorder %s28, 1
    %p382 = scmp.ne.s32.totalorder %s377, %s379
    %p383 = scmp.eq.s32.totalorder %s28, 0
    %p384 = por %p382, %p383
    %p385 = scmp.ne.s32.totalorder %s377, %s379
    %p386 = scmp.eq.s32.totalorder %s33, 1
    %p387 = por %p385, %p386
    %p388 = scmp.ne.s32.totalorder %s379, %s380
    %p389 = scmp.eq.s32.totalorder %s33, 0
    %p390 = por %p388, %p389
    %p391 = scmp.ne.s32.totalorder %s379, %s380
    %p392 = scmp.eq.s32.totalorder %s34, 1
    %p393 = por %p391, %p392
    %p395 = scmp.ne.s32.totalorder %s380, %s394
    %p396 = scmp.eq.s32.totalorder %s34, 0
    %p397 = por %p395, %p396
    %s399 = sadd.s32 %s398, 1
    %p402 = scmp.eq.s32.totalorder %s28, 1
    %p403 = scmp.ne.s32.totalorder %s398, %s400
    %p404 = scmp.eq.s32.totalorder %s28, 0
    %p405 = por %p403, %p404
    %p406 = scmp.ne.s32.totalorder %s398, %s400
    %p407 = scmp.eq.s32.totalorder %s33, 1
    %p408 = por %p406, %p407
    %p409 = scmp.ne.s32.totalorder %s400, %s401
    %p410 = scmp.eq.s32.totalorder %s33, 0
    %p411 = por %p409, %p410
    %p412 = scmp.ne.s32.totalorder %s400, %s401
    %p413 = scmp.eq.s32.totalorder %s34, 1
    %p414 = por %p412, %p413
    %p416 = scmp.ne.s32.totalorder %s401, %s415
    %p417 = scmp.eq.s32.totalorder %s34, 0
    %p418 = por %p416, %p417
    %s420 = sadd.s32 %s419, 1
    %p423 = scmp.eq.s32.totalorder %s28, 1
    %p424 = scmp.ne.s32.totalorder %s419, %s421
    %p425 = scmp.eq.s32.totalorder %s28, 0
    %p426 = por %p424, %p425
    %p427 = scmp.ne.s32.totalorder %s419, %s421
    %p428 = scmp.eq.s32.totalorder %s33, 1
    %p429 = por %p427, %p428
    %p430 = scmp.ne.s32.totalorder %s421, %s422
    %p431 = scmp.eq.s32.totalorder %s33, 0
    %p432 = por %p430, %p431
    %p433 = scmp.ne.s32.totalorder %s421, %s422
    %p434 = scmp.eq.s32.totalorder %s34, 1
    %p435 = por %p433, %p434
    %p437 = scmp.ne.s32.totalorder %s422, %s436
    %p438 = scmp.eq.s32.totalorder %s34, 0
    %p439 = por %p437, %p438
    %s441 = sadd.s32 %s440, 1
    %p444 = scmp.eq.s32.totalorder %s28, 1
    %p445 = scmp.ne.s32.totalorder %s440, %s442
    %p446 = scmp.eq.s32.totalorder %s28, 0
    %p447 = por %p445, %p446
    %p448 = scmp.ne.s32.totalorder %s440, %s442
    %p449 = scmp.eq.s32.totalorder %s33, 1
    %p450 = por %p448, %p449
    %p451 = scmp.ne.s32.totalorder %s442, %s443
    %p452 = scmp.eq.s32.totalorder %s33, 0
    %p453 = por %p451, %p452
    %p454 = scmp.ne.s32.totalorder %s442, %s443
    %p455 = scmp.eq.s32.totalorder %s34, 1
    %p456 = por %p454, %p455
    %p458 = scmp.ne.s32.totalorder %s443, %s457
    %p459 = scmp.eq.s32.totalorder %s34, 0
    %p460 = por %p458, %p459
    %s461 = ssub.s32 %s28, %s35
    %p462 = scmp.eq.s32.totalorder %s461, 0
    %s464 = sadd.s32 %s463, 1
    %s465 = scalar_select %p462, %s463, %s464
    %p468 = pneg %p462
    %p469 = scmp.eq.s32.totalorder %s28, 1
    %p470 = por %p468, %p469
    %p471 = scmp.ne.s32.totalorder %s463, %s466
    %p472 = scmp.eq.s32.totalorder %s28, 0
    %p473 = por %p471, %p472
    %p474 = scmp.ne.s32.totalorder %s463, %s466
    %p475 = scmp.eq.s32.totalorder %s33, 1
    %p476 = por %p474, %p475
    %p477 = scmp.ne.s32.totalorder %s466, %s467
    %p478 = scmp.eq.s32.totalorder %s33, 0
    %p479 = por %p477, %p478
    %p480 = scmp.ne.s32.totalorder %s466, %s467
    %p481 = scmp.eq.s32.totalorder %s34, 1
    %p482 = por %p480, %p481
    %p484 = scmp.ne.s32.totalorder %s467, %s483
    %p485 = scmp.eq.s32.totalorder %s34, 0
    %p486 = por %p484, %p485
    %p487 = scmp.le.s32.totalorder 1, %s28
    %p488 = scmp.lt.s32.totalorder %s28, 3
    %p489 = pnand %p487, %p488
    %p490 = pneg %p489
    // Predicated region
    $region9: #{forward.1} parent=5 // pred_check
      _
    $region10: #{forward.1} parent=5 // pred_check_branch
      %492 = sbr.rel (%p489) target = $region12
    $region11: #{forward.1} parent=5 // pred_region
      %s493 = ssub.s32 %s28, 1
      // Predicated region
      $region13: #{forward.1} parent=11 // pred_check
        %p494 = pneg %p75
      $region14: #{forward.1} parent=11 // pred_check_branch
        %496 = sbr.rel (%p494) target = $region16
      $region15: #{forward.1} parent=11 // pred_region
        _
      $region16: #{forward.1} parent=11 // pred_fallthru
        _
      // Predicated region
      $region17: #{forward.1} parent=11 // pred_check
        %p497 = pneg %p96
      $region18: #{forward.1} parent=11 // pred_check_branch
        %499 = sbr.rel (%p497) target = $region20
      $region19: #{forward.1} parent=11 // pred_region
        _
      $region20: #{forward.1} parent=11 // pred_fallthru
        _
      // Predicated region
      $region21: #{forward.1} parent=11 // pred_check
        %p500 = pneg %p117
      $region22: #{forward.1} parent=11 // pred_check_branch
        %502 = sbr.rel (%p500) target = $region24
      $region23: #{forward.1} parent=11 // pred_region
        _
      $region24: #{forward.1} parent=11 // pred_fallthru
        _
      // Predicated region
      $region25: #{forward.1} parent=11 // pred_check
        %p503 = pneg %p138
      $region26: #{forward.1} parent=11 // pred_check_branch
        %505 = sbr.rel (%p503) target = $region28
      $region27: #{forward.1} parent=11 // pred_region
        _
      $region28: #{forward.1} parent=11 // pred_fallthru
        _
      // Predicated region
      $region29: #{forward.1} parent=11 // pred_check
        %p506 = pneg %p159
      $region30: #{forward.1} parent=11 // pred_check_branch
        %508 = sbr.rel (%p506) target = $region32
      $region31: #{forward.1} parent=11 // pred_region
        _
      $region32: #{forward.1} parent=11 // pred_fallthru
        _
      // Predicated region
      $region33: #{forward.1} parent=11 // pred_check
        %p509 = pneg %p180
      $region34: #{forward.1} parent=11 // pred_check_branch
        %511 = sbr.rel (%p509) target = $region36
      $region35: #{forward.1} parent=11 // pred_region
        _
      $region36: #{forward.1} parent=11 // pred_fallthru
        _
      // Predicated region
      $region37: #{forward.1} parent=11 // pred_check
        %p512 = pneg %p201
      $region38: #{forward.1} parent=11 // pred_check_branch
        %514 = sbr.rel (%p512) target = $region40
      $region39: #{forward.1} parent=11 // pred_region
        _
      $region40: #{forward.1} parent=11 // pred_fallthru
        _
      // Predicated region
      $region41: #{forward.1} parent=11 // pred_check
        %p515 = pneg %p222
      $region42: #{forward.1} parent=11 // pred_check_branch
        %517 = sbr.rel (%p515) target = $region44
      $region43: #{forward.1} parent=11 // pred_region
        _
      $region44: #{forward.1} parent=11 // pred_fallthru
        _
      // Predicated region
      $region45: #{forward.1} parent=11 // pred_check
        %p518 = pneg %p243
      $region46: #{forward.1} parent=11 // pred_check_branch
        %520 = sbr.rel (%p518) target = $region48
      $region47: #{forward.1} parent=11 // pred_region
        _
      $region48: #{forward.1} parent=11 // pred_fallthru
        _
      // Predicated region
      $region49: #{forward.1} parent=11 // pred_check
        %p521 = pneg %p264
      $region50: #{forward.1} parent=11 // pred_check_branch
        %523 = sbr.rel (%p521) target = $region52
      $region51: #{forward.1} parent=11 // pred_region
        _
      $region52: #{forward.1} parent=11 // pred_fallthru
        _
      // Predicated region
      $region53: #{forward.1} parent=11 // pred_check
        %p524 = pneg %p285
      $region54: #{forward.1} parent=11 // pred_check_branch
        %526 = sbr.rel (%p524) target = $region56
      $region55: #{forward.1} parent=11 // pred_region
        _
      $region56: #{forward.1} parent=11 // pred_fallthru
        _
      // Predicated region
      $region57: #{forward.1} parent=11 // pred_check
        %p527 = pneg %p306
      $region58: #{forward.1} parent=11 // pred_check_branch
        %529 = sbr.rel (%p527) target = $region60
      $region59: #{forward.1} parent=11 // pred_region
        _
      $region60: #{forward.1} parent=11 // pred_fallthru
        _
      // Predicated region
      $region61: #{forward.1} parent=11 // pred_check
        %p530 = pneg %p327
      $region62: #{forward.1} parent=11 // pred_check_branch
        %532 = sbr.rel (%p530) target = $region64
      $region63: #{forward.1} parent=11 // pred_region
        _
      $region64: #{forward.1} parent=11 // pred_fallthru
        _
      // Predicated region
      $region65: #{forward.1} parent=11 // pred_check
        %p533 = pneg %p348
      $region66: #{forward.1} parent=11 // pred_check_branch
        %535 = sbr.rel (%p533) target = $region68
      $region67: #{forward.1} parent=11 // pred_region
        _
      $region68: #{forward.1} parent=11 // pred_fallthru
        _
      // Predicated region
      $region69: #{forward.1} parent=11 // pred_check
        %p536 = pneg %p369
      $region70: #{forward.1} parent=11 // pred_check_branch
        %538 = sbr.rel (%p536) target = $region72
      $region71: #{forward.1} parent=11 // pred_region
        _
      $region72: #{forward.1} parent=11 // pred_fallthru
        _
      // Predicated region
      $region73: #{forward.1} parent=11 // pred_check
        %p539 = pneg %p390
      $region74: #{forward.1} parent=11 // pred_check_branch
        %541 = sbr.rel (%p539) target = $region76
      $region75: #{forward.1} parent=11 // pred_region
        _
      $region76: #{forward.1} parent=11 // pred_fallthru
        _
      // Predicated region
      $region77: #{forward.1} parent=11 // pred_check
        %p542 = pneg %p411
      $region78: #{forward.1} parent=11 // pred_check_branch
        %544 = sbr.rel (%p542) target = $region80
      $region79: #{forward.1} parent=11 // pred_region
        _
      $region80: #{forward.1} parent=11 // pred_fallthru
        _
      // Predicated region
      $region81: #{forward.1} parent=11 // pred_check
        %p545 = pneg %p432
      $region82: #{forward.1} parent=11 // pred_check_branch
        %547 = sbr.rel (%p545) target = $region84
      $region83: #{forward.1} parent=11 // pred_region
        _
      $region84: #{forward.1} parent=11 // pred_fallthru
        _
      // Predicated region
      $region85: #{forward.1} parent=11 // pred_check
        %p548 = pneg %p453
      $region86: #{forward.1} parent=11 // pred_check_branch
        %550 = sbr.rel (%p548) target = $region88
      $region87: #{forward.1} parent=11 // pred_region
        _
      $region88: #{forward.1} parent=11 // pred_fallthru
        _
    $region12: #{forward.1} parent=5 // pred_fallthru
      _
    %p551 = scmp.lt.s32.totalorder %s28, 2
    // Predicated region
    $region89: #{forward.1} parent=5 // pred_check
      %p552 = pneg %p551
    $region90: #{forward.1} parent=5 // pred_check_branch
      %554 = sbr.rel (%p552) target = $region92
    $region91: #{forward.1} parent=5 // pred_region
      // Predicated region
      $region93: #{forward.1} parent=91 // pred_check
        %p555 = pneg %p48
      $region94: #{forward.1} parent=91 // pred_check_branch
        %557 = sbr.rel (%p555) target = $region96
      $region95: #{forward.1} parent=91 // pred_region
        %p558 = scmp.lt.s32.totalorder %s28, 1
        %s559 = scalar_select %p558, %s28, 1
        %s560 = smul.addr %s559, 15
        %s561 = smul.addr %s560, 8
        %s562 = scalar_lea.vmem %s0, %s561
      $region96: #{forward.1} parent=91 // pred_fallthru
        _
    $region92: #{forward.1} parent=5 // pred_fallthru
      _
    %p563 = scmp.le.s32.totalorder 1, %s28
    %p564 = scmp.lt.s32.totalorder %s28, 3
    %p565 = pnand %p563, %p564
    %p566 = pneg %p565
    // Predicated region
    $region97: #{forward.1} parent=5 // pred_check
      _
    $region98: #{forward.1} parent=5 // pred_check_branch
      %568 = sbr.rel (%p565) target = $region100
    $region99: #{forward.1} parent=5 // pred_region
      %s569 = ssub.s32 %s28, 1
      %p570 = scmp.lt.s32.totalorder %s33, 1
      %s571 = scalar_select %p570, %s33, 1
      %s572 = smul.addr %s571, 15
      %s573 = smul.addr %s572, 8
      %s574 = scalar_lea.vmem %s0, %s573
      %p575 = pneg %p54
      %p576 = pneg %p51
      %p577 = pneg %p75
      %p578 = pneg %p72
      %p579 = pneg %p96
      %p580 = pneg %p93
      %p581 = pneg %p117
      %p582 = pneg %p114
      %p583 = pneg %p138
      %p584 = pneg %p135
      %p585 = pneg %p159
      %p586 = pneg %p156
      %p587 = pneg %p180
      %p588 = pneg %p177
      %p589 = pneg %p201
      %p590 = pneg %p198
      %p591 = pneg %p222
      %p592 = pneg %p219
      %p593 = pneg %p243
      %p594 = pneg %p240
      %p595 = pneg %p264
      %p596 = pneg %p261
      %p597 = pneg %p285
      %p598 = pneg %p282
      %p599 = pneg %p306
      %p600 = pneg %p303
      %p601 = pneg %p327
      %p602 = pneg %p324
      %p603 = pneg %p348
      %p604 = pneg %p345
      %p605 = pneg %p369
      %p606 = pneg %p366
      %p607 = pneg %p390
      %p608 = pneg %p387
      %p609 = pneg %p411
      %p610 = pneg %p408
      %p611 = pneg %p432
      %p612 = pneg %p429
      %p613 = pneg %p453
      %p614 = pneg %p450
      %p615 = pneg %p479
      %p616 = pneg %p476
      %p617 = scmp.lt.s32.totalorder %s33, 1
      %s618 = scalar_select %p617, %s33, 1
      %s619 = scalar_lea.vmem %s20, %s618
      %p620 = scmp.lt.s32.totalorder %s33, 1
      %s621 = scalar_select %p620, %s33, 1
      %s622 = smul.addr %s621, 15
      %s623 = smul.addr %s622, 8
      %s624 = scalar_lea.vmem %s0, %s623
      %p625 = scmp.lt.s32.totalorder %s33, 1
      %s626 = scalar_select %p625, %s33, 1
      %s627 = scalar_lea.vmem %s20, %s626
      %v629 = vld [vmem:[%s624] sm:$0xff]
      %v630 = vld [vmem:[%s624 + $0x8] sm:$0xff]
      %v631 = vld [vmem:[%s624 + $0x10] sm:$0xff]
      %v632 = vld [vmem:[%s624 + $0x18] sm:$0xff]
      %v633 = vld [vmem:[%s624 + $0x20] sm:$0xff]
      %v634 = vld [vmem:[%s624 + $0x28] sm:$0xff]
      %v635 = vld [vmem:[%s624 + $0x30] sm:$0xff]
      %v636 = vld [vmem:[%s624 + $0x38] sm:$0xff]
      %v637 = vld [vmem:[%s624 + $0x40] sm:$0xff]
      %v638 = vld [vmem:[%s624 + $0x48] sm:$0xff]
      %v639 = vld [vmem:[%s624 + $0x50] sm:$0xff]
      %v640 = vld [vmem:[%s624 + $0x58] sm:$0xff]
      %v641 = vld [vmem:[%s624 + $0x60] sm:$0x3f]
      %v642 = vld [vmem:[%s624 + $0x68] sm:$0x3f]
      %v643 = vld [vmem:[%s624 + $0x70] sm:$0x3f]
      %v644 = vpack.c.bf16 %v632, %v629
      %v645 = vpack.c.bf16 %v633, %v630
      %v646 = vpack.c.bf16 %v634, %v631
      %v647 = vpack.c.bf16 %v638, %v635
      %v648 = vpack.c.bf16 %v639, %v636
      %v649 = vpack.c.bf16 %v640, %v637
      %v650 = vpack.c.bf16 %v641, %v641
      %v651 = vpack.c.bf16 %v642, %v642
      %v652 = vpack.c.bf16 %v643, %v643
      %v653 = vld [vmem:[%s1] sm:$0xff]
      %v654 = vld [vmem:[%s1 + $0x8] sm:$0xff]
      %v655 = vld [vmem:[%s1 + $0x10] sm:$0xff]
      %v656 = vld [vmem:[%s1 + $0x18] sm:$0xff]
      %v657 = vld [vmem:[%s1 + $0x20] sm:$0xff]
      %v658 = vld [vmem:[%s1 + $0x28] sm:$0xff]
      %v659 = vld [vmem:[%s1 + $0x30] sm:$0xff]
      %v660 = vld [vmem:[%s1 + $0x38] sm:$0xff]
      %v661 = vld [vmem:[%s1 + $0x40] sm:$0xff]
      %v662 = vld [vmem:[%s1 + $0x48] sm:$0xff]
      %v663 = vld [vmem:[%s1 + $0x50] sm:$0xff]
      %v664 = vld [vmem:[%s1 + $0x58] sm:$0xff]
      %v665 = vld [vmem:[%s1 + $0x60] sm:$0xff]
      %v666 = vld [vmem:[%s1 + $0x68] sm:$0xff]
      %v667 = vld [vmem:[%s1 + $0x70] sm:$0xff]
      %v668 = vld [vmem:[%s1 + $0x78] sm:$0xff]
      %v669 = vld [vmem:[%s1 + $0x80] sm:$0xff]
      %v670 = vld [vmem:[%s1 + $0x88] sm:$0xff]
      %v671 = vld [vmem:[%s1 + $0x90] sm:$0xff]
      %v672 = vld [vmem:[%s1 + $0x98] sm:$0xff]
      %v673 = vld [vmem:[%s1 + $0xa0] sm:$0xff]
      %v674 = vld [vmem:[%s1 + $0xa8] sm:$0xff]
      %v675 = vld [vmem:[%s1 + $0xb0] sm:$0xff]
      %v676 = vld [vmem:[%s1 + $0xb8] sm:$0xff]
      %v677 = vld [vmem:[%s1 + $0xc0] sm:$0xff]
      %v678 = vld [vmem:[%s1 + $0xc8] sm:$0xff]
      %v679 = vld [vmem:[%s1 + $0xd0] sm:$0xff]
      %v680 = vld [vmem:[%s1 + $0xd8] sm:$0xff]
      %v681 = vld [vmem:[%s1 + $0xe0] sm:$0xff]
      %v682 = vld [vmem:[%s1 + $0xe8] sm:$0xff]
      %v683 = vld [vmem:[%s1 + $0xf0] sm:$0xff]
      %v684 = vld [vmem:[%s1 + $0xf8] sm:$0xff]
      %v685 = vld [vmem:[%s1 + $0x100] sm:$0xff]
      %v686 = vld [vmem:[%s1 + $0x108] sm:$0xff]
      %v687 = vld [vmem:[%s1 + $0x110] sm:$0xff]
      %v688 = vld [vmem:[%s1 + $0x118] sm:$0xff]
      %v689 = vld [vmem:[%s1 + $0x120] sm:$0xff]
      %v690 = vld [vmem:[%s1 + $0x128] sm:$0xff]
      %v729 = vunpack.c.l.b16 %v653
      %v730 = vunpack.c.h.b16 %v653
      %v731 = vunpack.c.l.b16 %v654
      %v732 = vunpack.c.h.b16 %v654
      %v733 = vunpack.c.l.b16 %v655
      %v734 = vunpack.c.h.b16 %v655
      %v735 = vunpack.c.l.b16 %v656
      %v736 = vunpack.c.h.b16 %v656
      %v737 = vunpack.c.l.b16 %v657
      %v738 = vunpack.c.h.b16 %v657
      %v739 = vunpack.c.l.b16 %v658
      %v740 = vunpack.c.h.b16 %v658
      %v741 = vunpack.c.l.b16 %v659
      %v742 = vunpack.c.h.b16 %v659
      %v743 = vunpack.c.l.b16 %v660
      %v744 = vunpack.c.h.b16 %v660
      %v745 = vunpack.c.l.b16 %v661
      %v746 = vunpack.c.h.b16 %v661
      %v747 = vunpack.c.l.b16 %v662
      %v748 = vunpack.c.h.b16 %v662
      %v749 = vunpack.c.l.b16 %v663
      %v750 = vunpack.c.h.b16 %v663
      %v751 = vunpack.c.l.b16 %v664
      %v752 = vunpack.c.h.b16 %v664
      %v753 = vunpack.c.l.b16 %v665
      %v754 = vunpack.c.h.b16 %v665
      %v755 = vunpack.c.l.b16 %v666
      %v756 = vunpack.c.h.b16 %v666
      %v757 = vunpack.c.l.b16 %v667
      %v758 = vunpack.c.h.b16 %v667
      %v759 = vunpack.c.l.b16 %v668
      %v760 = vunpack.c.h.b16 %v668
      %v761 = vunpack.c.l.b16 %v669
      %v762 = vunpack.c.h.b16 %v669
      %v763 = vunpack.c.l.b16 %v670
      %v764 = vunpack.c.h.b16 %v670
      %v765 = vunpack.c.l.b16 %v671
      %v766 = vunpack.c.h.b16 %v671
      %v767 = vunpack.c.l.b16 %v672
      %v768 = vunpack.c.h.b16 %v672
      %v769 = vunpack.c.l.b16 %v673
      %v770 = vunpack.c.h.b16 %v673
      %v771 = vunpack.c.l.b16 %v674
      %v772 = vunpack.c.h.b16 %v674
      %v773 = vunpack.c.l.b16 %v675
      %v774 = vunpack.c.h.b16 %v675
      %v775 = vunpack.c.l.b16 %v676
      %v776 = vunpack.c.h.b16 %v676
      %v777 = vunpack.c.l.b16 %v677
      %v778 = vunpack.c.h.b16 %v677
      %v779 = vunpack.c.l.b16 %v678
      %v780 = vunpack.c.h.b16 %v678
      %v781 = vunpack.c.l.b16 %v679
      %v782 = vunpack.c.h.b16 %v679
      %v783 = vunpack.c.l.b16 %v680
      %v784 = vunpack.c.h.b16 %v680
      %v785 = vunpack.c.l.b16 %v681
      %v786 = vunpack.c.h.b16 %v681
      %v787 = vunpack.c.l.b16 %v682
      %v788 = vunpack.c.h.b16 %v682
      %v789 = vunpack.c.l.b16 %v683
      %v790 = vunpack.c.h.b16 %v683
      %v791 = vunpack.c.l.b16 %v684
      %v792 = vunpack.c.h.b16 %v684
      %v793 = vunpack.c.l.b16 %v685
      %v794 = vunpack.c.h.b16 %v685
      %v795 = vunpack.c.l.b16 %v686
      %v796 = vunpack.c.h.b16 %v686
      %v797 = vunpack.c.l.b16 %v687
      %v798 = vunpack.c.h.b16 %v687
      %v799 = vunpack.c.l.b16 %v688
      %v800 = vunpack.c.h.b16 %v688
      %v801 = vunpack.c.l.b16 %v689
      %v802 = vunpack.c.h.b16 %v689
      %v803 = vunpack.c.l.b16 %v690
      %v804 = vunpack.c.h.b16 %v690
      %v805 = vpack.c.b16 %v731, %v729
      %v806 = vpack.c.b16 %v732, %v730
      %v807 = vpack.c.b16 %v735, %v733
      %v808 = vpack.c.b16 %v736, %v734
      %v809 = vpack.c.b16 %v739, %v737
      %v810 = vpack.c.b16 %v740, %v738
      %v811 = vpack.c.b16 %v743, %v741
      %v812 = vpack.c.b16 %v744, %v742
      %v813 = vpack.c.b16 %v747, %v745
      %v814 = vpack.c.b16 %v748, %v746
      %v815 = vpack.c.b16 %v751, %v749
      %v816 = vpack.c.b16 %v752, %v750
      %v817 = vpack.c.b16 %v755, %v753
      %v818 = vpack.c.b16 %v756, %v754
      %v819 = vpack.c.b16 %v759, %v757
      %v820 = vpack.c.b16 %v760, %v758
      %v821 = vpack.c.b16 %v763, %v761
      %v822 = vpack.c.b16 %v764, %v762
      %v823 = vpack.c.b16 %v767, %v765
      %v824 = vpack.c.b16 %v768, %v766
      %v825 = vpack.c.b16 %v771, %v769
      %v826 = vpack.c.b16 %v772, %v770
      %v827 = vpack.c.b16 %v775, %v773
      %v828 = vpack.c.b16 %v776, %v774
      %v829 = vpack.c.b16 %v779, %v777
      %v830 = vpack.c.b16 %v780, %v778
      %v831 = vpack.c.b16 %v783, %v781
      %v832 = vpack.c.b16 %v784, %v782
      %v833 = vpack.c.b16 %v787, %v785
      %v834 = vpack.c.b16 %v788, %v786
      %v835 = vpack.c.b16 %v791, %v789
      %v836 = vpack.c.b16 %v792, %v790
      %v837 = vpack.c.b16 %v795, %v793
      %v838 = vpack.c.b16 %v796, %v794
      %v839 = vpack.c.b16 %v799, %v797
      %v840 = vpack.c.b16 %v800, %v798
      %v841 = vpack.c.b16 %v803, %v801
      %v842 = vpack.c.b16 %v804, %v802
      %vm881 = vcmask 392192
      %v883 = vsel %vm881, %v646, 0
      %v886 = vsel %vm881, %v649, 0
      %v889 = vsel %vm881, %v652, 0
      %891 = vmatprep.subr.bf16.mxu0 %v806
      %892 = vmatpush1.bf16.msra.mxu0 %v805
      %893 = vmatprep.subr.bf16.mxu0 %v808
      %894 = vmatpush1.bf16.msra.mxu0 %v807
      %895 = vmatprep.subr.bf16.mxu0 %v810
      %896 = vmatpush1.bf16.msra.mxu0 %v809
      %897 = vmatprep.subr.bf16.mxu0 %v812
      %898 = vmatpush1.bf16.msra.mxu0 %v811
      %899 = vmatprep.subr.bf16.mxu0 %v814
      %900 = vmatpush1.bf16.msra.mxu0 %v813
      %901 = vmatprep.subr.bf16.mxu0 %v816
      %902 = vmatpush1.bf16.msra.mxu0 %v815
      %903 = vmatprep.subr.bf16.mxu0 %v818
      %904 = vmatpush1.bf16.msra.mxu0 %v817
      %905 = vmatprep.subr.bf16.mxu0 %v820
      %906 = vmatpush1.bf16.msra.mxu0 %v819
      %907 = vmatprep.subr.bf16.mxu0 %v822
      %908 = vmatpush1.bf16.msra.mxu0 %v821
      %909 = vmatprep.subr.bf16.mxu0 %v824
      %910 = vmatpush1.bf16.msra.mxu0 %v823
      %911 = vmatprep.subr.bf16.mxu0 %v826
      %912 = vmatpush1.bf16.msra.mxu0 %v825
      %913 = vmatprep.subr.bf16.mxu0 %v828
      %914 = vmatpush1.bf16.msra.mxu0 %v827
      %915 = vmatprep.subr.bf16.mxu0 %v830
      %916 = vmatpush1.bf16.msra.mxu0 %v829
      %917 = vmatprep.subr.bf16.mxu0 %v832
      %918 = vmatpush1.bf16.msra.mxu0 %v831
      %919 = vmatprep.subr.bf16.mxu0 %v834
      %920 = vmatpush1.bf16.msra.mxu0 %v833
      %921 = vmatprep.subr.bf16.mxu0 %v836
      %922 = vmatpush1.bf16.msra.mxu0 %v835
      %923 = vmatprep.mubr.bf16.mxu0 %v645
      %924 = vmatmul.mubr.bf16.gmra.mrb[0].mxu0 %v644
      %v925 = vpop.f32.mrb[0].mxu0
      %v926 = vadd.f32 0.0, %v925
      %v927 = vpop.f32.mrb[0].mxu0
      %v928 = vadd.f32 0.0, %v927
      %v929 = vpop.f32.mrb[0].mxu0
      %v930 = vadd.f32 0.0, %v929
      %v931 = vpop.f32.mrb[0].mxu0
      %v932 = vadd.f32 0.0, %v931
      %933 = vmatprep.mubr.bf16.mxu0 %v648
      %934 = vmatmul.mubr.bf16.gmra.mrb[0].mxu0 %v647
      %v935 = vpop.f32.mrb[0].mxu0
      %v936 = vadd.f32 0.0, %v935
      %v937 = vpop.f32.mrb[0].mxu0
      %v938 = vadd.f32 0.0, %v937
      %v939 = vpop.f32.mrb[0].mxu0
      %v940 = vadd.f32 0.0, %v939
      %v941 = vpop.f32.mrb[0].mxu0
      %v942 = vadd.f32 0.0, %v941
      %943 = vmatprep.mubr.bf16.mxu0 %v651
      %944 = vmatmul.mubr.bf16.gmra.mrb[0].mxu0 %v650
      %v945 = vpop.f32.mrb[0].mxu0
      %v946 = vadd.f32 0.0, %v945
      %v947 = vpop.f32.mrb[0].mxu0
      %v948 = vadd.f32 0.0, %v947
      %v949 = vpop.f32.mrb[0].mxu0
      %v950 = vpop.f32.mrb[0].mxu0
      %951 = vdwg.mxu0
      %952 = vmatprep.subr.bf16.mxu0 %v838
      %953 = vmatpush1.bf16.msra.mxu0 %v837
      %954 = vmatprep.subr.bf16.mxu0 %v840
      %955 = vmatpush1.bf16.msra.mxu0 %v839
      %956 = vmatprep.subr.bf16.mxu0 %v842
      %957 = vmatpush1.bf16.msra.mxu0 %v841
      %958 = vmatprep.subr.bf16.mxu0 0
      %959 = vmatpush1.bf16.msra.mxu0 0
      %960 = vmatprep.subr.bf16.mxu0 0
      %961 = vmatpush1.bf16.msra.mxu0 0
      %962 = vmatprep.subr.bf16.mxu0 0
      %963 = vmatpush1.bf16.msra.mxu0 0
      %964 = vmatprep.subr.bf16.mxu0 0
      %965 = vmatpush1.bf16.msra.mxu0 0
      %966 = vmatprep.subr.bf16.mxu0 0
      %967 = vmatpush1.bf16.msra.mxu0 0
      %968 = vmatprep.subr.bf16.mxu0 0
      %969 = vmatpush1.bf16.msra.mxu0 0
      %970 = vmatprep.subr.bf16.mxu0 0
      %971 = vmatpush1.bf16.msra.mxu0 0
      %972 = vmatprep.subr.bf16.mxu0 0
      %973 = vmatpush1.bf16.msra.mxu0 0
      %974 = vmatprep.subr.bf16.mxu0 0
      %975 = vmatpush1.bf16.msra.mxu0 0
      %976 = vmatprep.subr.bf16.mxu0 0
      %977 = vmatpush1.bf16.msra.mxu0 0
      %978 = vmatprep.subr.bf16.mxu0 0
      %979 = vmatpush1.bf16.msra.mxu0 0
      %980 = vmatprep.subr.bf16.mxu0 0
      %981 = vmatpush1.bf16.msra.mxu0 0
      %982 = vmatprep.subr.bf16.mxu0 0
      %983 = vmatpush1.bf16.msra.mxu0 0
      %984 = vmatprep.mubr.bf16.mxu0 0
      %985 = vmatmul.mubr.bf16.gmra.mrb[0].mxu0 %v883
      %v986 = vpop.f32.mrb[0].mxu0
      %v987 = vadd.f32 %v926, %v986
      %v988 = vpop.f32.mrb[0].mxu0
      %v989 = vadd.f32 %v928, %v988
      %v990 = vpop.f32.mrb[0].mxu0
      %v991 = vadd.f32 %v930, %v990
      %v992 = vpop.f32.mrb[0].mxu0
      %v993 = vadd.f32 %v932, %v992
      %994 = vmatprep.mubr.bf16.mxu0 0
      %995 = vmatmul.mubr.bf16.gmra.mrb[0].mxu0 %v886
      %v996 = vpop.f32.mrb[0].mxu0
      %v997 = vadd.f32 %v936, %v996
      %v998 = vpop.f32.mrb[0].mxu0
      %v999 = vadd.f32 %v938, %v998
      %v1000 = vpop.f32.mrb[0].mxu0
      %v1001 = vadd.f32 %v940, %v1000
      %v1002 = vpop.f32.mrb[0].mxu0
      %v1003 = vadd.f32 %v942, %v1002
      %1004 = vmatprep.mubr.bf16.mxu0 0
      %1005 = vmatmul.mubr.bf16.gmra.mrb[0].mxu0 %v889
      %v1006 = vpop.f32.mrb[0].mxu0
      %v1007 = vadd.f32 %v946, %v1006
      %v1008 = vpop.f32.mrb[0].mxu0
      %v1009 = vadd.f32 %v948, %v1008
      %v1010 = vpop.f32.mrb[0].mxu0
      %v1011 = vpop.f32.mrb[0].mxu0
      %1012 = vdwg.mxu0
      %v1013 = vld [vmem:[%s2] sm:$0xff]
      %v1014 = vld [vmem:[%s2 + $0x8] sm:$0xff]
      %v1015 = vld [vmem:[%s2 + $0x10] sm:$0x7]
      %s1016 = scalar_lea.vmem %s1, 304
      %v1017 = vld [vmem:[%s1016] sm:$0xff]
      %v1018 = vld [vmem:[%s1016 + $0x8] sm:$0xff]
      %v1019 = vld [vmem:[%s1016 + $0x10] sm:$0xff]
      %v1020 = vld [vmem:[%s1016 + $0x18] sm:$0xff]
      %v1021 = vld [vmem:[%s1016 + $0x20] sm:$0xff]
      %v1022 = vld [vmem:[%s1016 + $0x28] sm:$0xff]
      %v1023 = vld [vmem:[%s1016 + $0x30] sm:$0xff]
      %v1024 = vld [vmem:[%s1016 + $0x38] sm:$0xff]
      %v1025 = vld [vmem:[%s1016 + $0x40] sm:$0xff]
      %v1026 = vld [vmem:[%s1016 + $0x48] sm:$0xff]
      %v1027 = vld [vmem:[%s1016 + $0x50] sm:$0xff]
      %v1028 = vld [vmem:[%s1016 + $0x58] sm:$0xff]
      %v1029 = vld [vmem:[%s1016 + $0x60] sm:$0xff]
      %v1030 = vld [vmem:[%s1016 + $0x68] sm:$0xff]
      %v1031 = vld [vmem:[%s1016 + $0x70] sm:$0xff]
      %v1032 = vld [vmem:[%s1016 + $0x78] sm:$0xff]
      %v1033 = vld [vmem:[%s1016 + $0x80] sm:$0xff]
      %v1034 = vld [vmem:[%s1016 + $0x88] sm:$0xff]
      %v1035 = vld [vmem:[%s1016 + $0x90] sm:$0xff]
      %v1036 = vld [vmem:[%s1016 + $0x98] sm:$0xff]
      %v1037 = vld [vmem:[%s1016 + $0xa0] sm:$0xff]
      %v1038 = vld [vmem:[%s1016 + $0xa8] sm:$0xff]
      %v1039 = vld [vmem:[%s1016 + $0xb0] sm:$0xff]
      %v1040 = vld [vmem:[%s1016 + $0xb8] sm:$0xff]
      %v1041 = vld [vmem:[%s1016 + $0xc0] sm:$0xff]
      %v1042 = vld [vmem:[%s1016 + $0xc8] sm:$0xff]
      %v1043 = vld [vmem:[%s1016 + $0xd0] sm:$0xff]
      %v1044 = vld [vmem:[%s1016 + $0xd8] sm:$0xff]
      %v1045 = vld [vmem:[%s1016 + $0xe0] sm:$0xff]
      %v1046 = vld [vmem:[%s1016 + $0xe8] sm:$0xff]
      %v1047 = vld [vmem:[%s1016 + $0xf0] sm:$0xff]
      %v1048 = vld [vmem:[%s1016 + $0xf8] sm:$0xff]
      %v1049 = vld [vmem:[%s1016 + $0x100] sm:$0xff]
      %v1050 = vld [vmem:[%s1016 + $0x108] sm:$0xff]
      %v1051 = vld [vmem:[%s1016 + $0x110] sm:$0xff]
      %v1052 = vld [vmem:[%s1016 + $0x118] sm:$0xff]
      %v1053 = vld [vmem:[%s1016 + $0x120] sm:$0xff]
      %v1054 = vld [vmem:[%s1016 + $0x128] sm:$0xff]
      %v1093 = vunpack.c.l.b16 %v1017
      %v1094 = vunpack.c.h.b16 %v1017
      %v1095 = vunpack.c.l.b16 %v1018
      %v1096 = vunpack.c.h.b16 %v1018
      %v1097 = vunpack.c.l.b16 %v1019
      %v1098 = vunpack.c.h.b16 %v1019
      %v1099 = vunpack.c.l.b16 %v1020
      %v1100 = vunpack.c.h.b16 %v1020
      %v1101 = vunpack.c.l.b16 %v1021
      %v1102 = vunpack.c.h.b16 %v1021
      %v1103 = vunpack.c.l.b16 %v1022
      %v1104 = vunpack.c.h.b16 %v1022
      %v1105 = vunpack.c.l.b16 %v1023
      %v1106 = vunpack.c.h.b16 %v1023
      %v1107 = vunpack.c.l.b16 %v1024
      %v1108 = vunpack.c.h.b16 %v1024
      %v1109 = vunpack.c.l.b16 %v1025
      %v1110 = vunpack.c.h.b16 %v1025
      %v1111 = vunpack.c.l.b16 %v1026
      %v1112 = vunpack.c.h.b16 %v1026
      %v1113 = vunpack.c.l.b16 %v1027
      %v1114 = vunpack.c.h.b16 %v1027
      %v1115 = vunpack.c.l.b16 %v1028
      %v1116 = vunpack.c.h.b16 %v1028
      %v1117 = vunpack.c.l.b16 %v1029
      %v1118 = vunpack.c.h.b16 %v1029
      %v1119 = vunpack.c.l.b16 %v1030
      %v1120 = vunpack.c.h.b16 %v1030
      %v1121 = vunpack.c.l.b16 %v1031
      %v1122 = vunpack.c.h.b16 %v1031
      %v1123 = vunpack.c.l.b16 %v1032
      %v1124 = vunpack.c.h.b16 %v1032
      %v1125 = vunpack.c.l.b16 %v1033
      %v1126 = vunpack.c.h.b16 %v1033
      %v1127 = vunpack.c.l.b16 %v1034
      %v1128 = vunpack.c.h.b16 %v1034
      %v1129 = vunpack.c.l.b16 %v1035
      %v1130 = vunpack.c.h.b16 %v1035
      %v1131 = vunpack.c.l.b16 %v1036
      %v1132 = vunpack.c.h.b16 %v1036
      %v1133 = vunpack.c.l.b16 %v1037
      %v1134 = vunpack.c.h.b16 %v1037
      %v1135 = vunpack.c.l.b16 %v1038
      %v1136 = vunpack.c.h.b16 %v1038
      %v1137 = vunpack.c.l.b16 %v1039
      %v1138 = vunpack.c.h.b16 %v1039
      %v1139 = vunpack.c.l.b16 %v1040
      %v1140 = vunpack.c.h.b16 %v1040
      %v1141 = vunpack.c.l.b16 %v1041
      %v1142 = vunpack.c.h.b16 %v1041
      %v1143 = vunpack.c.l.b16 %v1042
      %v1144 = vunpack.c.h.b16 %v1042
      %v1145 = vunpack.c.l.b16 %v1043
      %v1146 = vunpack.c.h.b16 %v1043
      %v1147 = vunpack.c.l.b16 %v1044
      %v1148 = vunpack.c.h.b16 %v1044
      %v1149 = vunpack.c.l.b16 %v1045
      %v1150 = vunpack.c.h.b16 %v1045
      %v1151 = vunpack.c.l.b16 %v1046
      %v1152 = vunpack.c.h.b16 %v1046
      %v1153 = vunpack.c.l.b16 %v1047
      %v1154 = vunpack.c.h.b16 %v1047
      %v1155 = vunpack.c.l.b16 %v1048
      %v1156 = vunpack.c.h.b16 %v1048
      %v1157 = vunpack.c.l.b16 %v1049
      %v1158 = vunpack.c.h.b16 %v1049
      %v1159 = vunpack.c.l.b16 %v1050
      %v1160 = vunpack.c.h.b16 %v1050
      %v1161 = vunpack.c.l.b16 %v1051
      %v1162 = vunpack.c.h.b16 %v1051
      %v1163 = vunpack.c.l.b16 %v1052
      %v1164 = vunpack.c.h.b16 %v1052
      %v1165 = vunpack.c.l.b16 %v1053
      %v1166 = vunpack.c.h.b16 %v1053
      %v1167 = vunpack.c.l.b16 %v1054
      %v1168 = vunpack.c.h.b16 %v1054
      %v1169 = vpack.c.b16 %v1095, %v1093
      %v1170 = vpack.c.b16 %v1096, %v1094
      %v1171 = vpack.c.b16 %v1099, %v1097
      %v1172 = vpack.c.b16 %v1100, %v1098
      %v1173 = vpack.c.b16 %v1103, %v1101
      %v1174 = vpack.c.b16 %v1104, %v1102
      %v1175 = vpack.c.b16 %v1107, %v1105
      %v1176 = vpack.c.b16 %v1108, %v1106
      %v1177 = vpack.c.b16 %v1111, %v1109
      %v1178 = vpack.c.b16 %v1112, %v1110
      %v1179 = vpack.c.b16 %v1115, %v1113
      %v1180 = vpack.c.b16 %v1116, %v1114
      %v1181 = vpack.c.b16 %v1119, %v1117
      %v1182 = vpack.c.b16 %v1120, %v1118
      %v1183 = vpack.c.b16 %v1123, %v1121
      %v1184 = vpack.c.b16 %v1124, %v1122
      %v1185 = vpack.c.b16 %v1127, %v1125
      %v1186 = vpack.c.b16 %v1128, %v1126
      %v1187 = vpack.c.b16 %v1131, %v1129
      %v1188 = vpack.c.b16 %v1132, %v1130
      %v1189 = vpack.c.b16 %v1135, %v1133
      %v1190 = vpack.c.b16 %v1136, %v1134
      %v1191 = vpack.c.b16 %v1139, %v1137
      %v1192 = vpack.c.b16 %v1140, %v1138
      %v1193 = vpack.c.b16 %v1143, %v1141
      %v1194 = vpack.c.b16 %v1144, %v1142
      %v1195 = vpack.c.b16 %v1147, %v1145
      %v1196 = vpack.c.b16 %v1148, %v1146
      %v1197 = vpack.c.b16 %v1151, %v1149
      %v1198 = vpack.c.b16 %v1152, %v1150
      %v1199 = vpack.c.b16 %v1155, %v1153
      %v1200 = vpack.c.b16 %v1156, %v1154
      %v1201 = vpack.c.b16 %v1159, %v1157
      %v1202 = vpack.c.b16 %v1160, %v1158
      %v1203 = vpack.c.b16 %v1163, %v1161
      %v1204 = vpack.c.b16 %v1164, %v1162
      %v1205 = vpack.c.b16 %v1167, %v1165
      %v1206 = vpack.c.b16 %v1168, %v1166
      %1245 = vmatprep.subr.bf16.mxu0 %v1170
      %1246 = vmatpush1.bf16.msra.mxu0 %v1169
      %1247 = vmatprep.subr.bf16.mxu0 %v1172
      %1248 = vmatpush1.bf16.msra.mxu0 %v1171
      %1249 = vmatprep.subr.bf16.mxu0 %v1174
      %1250 = vmatpush1.bf16.msra.mxu0 %v1173
      %1251 = vmatprep.subr.bf16.mxu0 %v1176
      %1252 = vmatpush1.bf16.msra.mxu0 %v1175
      %1253 = vmatprep.subr.bf16.mxu0 %v1178
      %1254 = vmatpush1.bf16.msra.mxu0 %v1177
      %1255 = vmatprep.subr.bf16.mxu0 %v1180
      %1256 = vmatpush1.bf16.msra.mxu0 %v1179
      %1257 = vmatprep.subr.bf16.mxu0 %v1182
      %1258 = vmatpush1.bf16.msra.mxu0 %v1181
      %1259 = vmatprep.subr.bf16.mxu0 %v1184
      %1260 = vmatpush1.bf16.msra.mxu0 %v1183
      %1261 = vmatprep.subr.bf16.mxu0 %v1186
      %1262 = vmatpush1.bf16.msra.mxu0 %v1185
      %1263 = vmatprep.subr.bf16.mxu0 %v1188
      %1264 = vmatpush1.bf16.msra.mxu0 %v1187
      %1265 = vmatprep.subr.bf16.mxu0 %v1190
      %1266 = vmatpush1.bf16.msra.mxu0 %v1189
      %1267 = vmatprep.subr.bf16.mxu0 %v1192
      %1268 = vmatpush1.bf16.msra.mxu0 %v1191
      %1269 = vmatprep.subr.bf16.mxu0 %v1194
      %1270 = vmatpush1.bf16.msra.mxu0 %v1193
      %1271 = vmatprep.subr.bf16.mxu0 %v1196
      %1272 = vmatpush1.bf16.msra.mxu0 %v1195
      %1273 = vmatprep.subr.bf16.mxu0 %v1198
      %1274 = vmatpush1.bf16.msra.mxu0 %v1197
      %1275 = vmatprep.subr.bf16.mxu0 %v1200
      %1276 = vmatpush1.bf16.msra.mxu0 %v1199
      %1277 = vmatprep.mubr.bf16.mxu0 %v645
      %1278 = vmatmul.mubr.bf16.gmra.mrb[0].mxu0 %v644
      %v1279 = vpop.f32.mrb[0].mxu0
      %v1280 = vadd.f32 0.0, %v1279
      %v1281 = vpop.f32.mrb[0].mxu0
      %v1282 = vadd.f32 0.0, %v1281
      %v1283 = vpop.f32.mrb[0].mxu0
      %v1284 = vadd.f32 0.0, %v1283
      %v1285 = vpop.f32.mrb[0].mxu0
      %v1286 = vadd.f32 0.0, %v1285
      %1287 = vmatprep.mubr.bf16.mxu0 %v648
      %1288 = vmatmul.mubr.bf16.gmra.mrb[0].mxu0 %v647
      %v1289 = vpop.f32.mrb[0].mxu0
      %v1290 = vadd.f32 0.0, %v1289
      %v1291 = vpop.f32.mrb[0].mxu0
      %v1292 = vadd.f32 0.0, %v1291
      %v1293 = vpop.f32.mrb[0].mxu0
      %v1294 = vadd.f32 0.0, %v1293
      %v1295 = vpop.f32.mrb[0].mxu0
      %v1296 = vadd.f32 0.0, %v1295
      %1297 = vmatprep.mubr.bf16.mxu0 %v651
      %1298 = vmatmul.mubr.bf16.gmra.mrb[0].mxu0 %v650
      %v1299 = vpop.f32.mrb[0].mxu0
      %v1300 = vadd.f32 0.0, %v1299
      %v1301 = vpop.f32.mrb[0].mxu0
      %v1302 = vadd.f32 0.0, %v1301
      %v1303 = vpop.f32.mrb[0].mxu0
      %v1304 = vpop.f32.mrb[0].mxu0
      %1305 = vdwg.mxu0
      %1306 = vmatprep.subr.bf16.mxu0 %v1202
      %1307 = vmatpush1.bf16.msra.mxu0 %v1201
      %1308 = vmatprep.subr.bf16.mxu0 %v1204
      %1309 = vmatpush1.bf16.msra.mxu0 %v1203
      %1310 = vmatprep.subr.bf16.mxu0 %v1206
      %1311 = vmatpush1.bf16.msra.mxu0 %v1205
      %1312 = vmatprep.subr.bf16.mxu0 0
      %1313 = vmatpush1.bf16.msra.mxu0 0
      %1314 = vmatprep.subr.bf16.mxu0 0
      %1315 = vmatpush1.bf16.msra.mxu0 0
      %1316 = vmatprep.subr.bf16.mxu0 0
      %1317 = vmatpush1.bf16.msra.mxu0 0
      %1318 = vmatprep.subr.bf16.mxu0 0
      %1319 = vmatpush1.bf16.msra.mxu0 0
      %1320 = vmatprep.subr.bf16.mxu0 0
      %1321 = vmatpush1.bf16.msra.mxu0 0
      %1322 = vmatprep.subr.bf16.mxu0 0
      %1323 = vmatpush1.bf16.msra.mxu0 0
      %1324 = vmatprep.subr.bf16.mxu0 0
      %1325 = vmatpush1.bf16.msra.mxu0 0
      %1326 = vmatprep.subr.bf16.mxu0 0
      %1327 = vmatpush1.bf16.msra.mxu0 0
      %1328 = vmatprep.subr.bf16.mxu0 0
      %1329 = vmatpush1.bf16.msra.mxu0 0
      %1330 = vmatprep.subr.bf16.mxu0 0
      %1331 = vmatpush1.bf16.msra.mxu0 0
      %1332 = vmatprep.subr.bf16.mxu0 0
      %1333 = vmatpush1.bf16.msra.mxu0 0
      %1334 = vmatprep.subr.bf16.mxu0 0
      %1335 = vmatpush1.bf16.msra.mxu0 0
      %1336 = vmatprep.subr.bf16.mxu0 0
      %1337 = vmatpush1.bf16.msra.mxu0 0
      %1338 = vmatprep.mubr.bf16.mxu0 0
      %1339 = vmatmul.mubr.bf16.gmra.mrb[0].mxu0 %v883
      %v1340 = vpop.f32.mrb[0].mxu0
      %v1341 = vadd.f32 %v1280, %v1340
      %v1342 = vpop.f32.mrb[0].mxu0
      %v1343 = vadd.f32 %v1282, %v1342
      %v1344 = vpop.f32.mrb[0].mxu0
      %v1345 = vadd.f32 %v1284, %v1344
      %v1346 = vpop.f32.mrb[0].mxu0
      %v1347 = vadd.f32 %v1286, %v1346
      %1348 = vmatprep.mubr.bf16.mxu0 0
      %1349 = vmatmul.mubr.bf16.gmra.mrb[0].mxu0 %v886
      %v1350 = vpop.f32.mrb[0].mxu0
      %v1351 = vadd.f32 %v1290, %v1350
      %v1352 = vpop.f32.mrb[0].mxu0
      %v1353 = vadd.f32 %v1292, %v1352
      %v1354 = vpop.f32.mrb[0].mxu0
      %v1355 = vadd.f32 %v1294, %v1354
      %v1356 = vpop.f32.mrb[0].mxu0
      %v1357 = vadd.f32 %v1296, %v1356
      %1358 = vmatprep.mubr.bf16.mxu0 0
      %1359 = vmatmul.mubr.bf16.gmra.mrb[0].mxu0 %v889
      %v1360 = vpop.f32.mrb[0].mxu0
      %v1361 = vadd.f32 %v1300, %v1360
      %v1362 = vpop.f32.mrb[0].mxu0
      %v1363 = vadd.f32 %v1302, %v1362
      %v1364 = vpop.f32.mrb[0].mxu0
      %v1365 = vpop.f32.mrb[0].mxu0
      %1366 = vdwg.mxu0
      %s1367 = scalar_lea.vmem %s2, 24
      %v1368 = vld [vmem:[%s1367] sm:$0xff]
      %v1369 = vld [vmem:[%s1367 + $0x8] sm:$0xff]
      %v1370 = vld [vmem:[%s1367 + $0x10] sm:$0x7]
      %vm1371 = vcmask 310272
      %v1373 = vsel %vm1371, %v1368, 0
      %v1376 = vsel %vm1371, %v1369, 0
      %v1379 = vsel %vm1371, %v1370, 0
      %vm1381 = vcmask 1045504
      %v1383 = vsel %vm1381, %v1361, 0
      %v1386 = vsel %vm1381, %v1363, 0
      %1388 = vmatprep.subr.mxu0 %v1343
      %1389 = vmatpush1.msra.mxu0 %v1341
      %1390 = vmatprep.subr.mxu0 %v1347
      %1391 = vmatpush1.msra.mxu0 %v1345
      %1392 = vmatprep.subr.mxu0 %v1353
      %1393 = vmatpush1.msra.mxu0 %v1351
      %1394 = vmatprep.subr.mxu0 %v1357
      %1395 = vmatpush1.msra.mxu0 %v1355
      %1396 = vmatprep.subr.mxu0 %v1386
      %1397 = vmatpush1.msra.mxu0 %v1383
      %1398 = vmatprep.subr.mxu0 0.0
      %1399 = vmatpush1.msra.mxu0 0.0
      %1400 = vmatprep.subr.mxu0 0.0
      %1401 = vmatpush1.msra.mxu0 0.0
      %1402 = vmatprep.subr.mxu0 0.0
      %1403 = vmatpush1.msra.mxu0 0.0
      %1404 = vmatprep.subr.mxu0 0.0
      %1405 = vmatpush1.msra.mxu0 0.0
      %1406 = vmatprep.subr.mxu0 0.0
      %1407 = vmatpush1.msra.mxu0 0.0
      %1408 = vmatprep.subr.mxu0 0.0
      %1409 = vmatpush1.msra.mxu0 0.0
      %1410 = vmatprep.subr.mxu0 0.0
      %1411 = vmatpush1.msra.mxu0 0.0
      %1412 = vmatprep.subr.mxu0 0.0
      %1413 = vmatpush1.msra.mxu0 0.0
      %1414 = vmatprep.subr.mxu0 0.0
      %1415 = vmatpush1.msra.mxu0 0.0
      %1416 = vmatprep.subr.mxu0 0.0
      %1417 = vmatpush1.msra.mxu0 0.0
      %1418 = vmatprep.subr.mxu0 0.0
      %1419 = vmatpush1.msra.mxu0 0.0
      %1420 = vmatprep.subr.mxu0 0.0
      %1421 = vmatpush1.msra.mxu0 0.0
      %1422 = vmatprep.subr.mxu0 0.0
      %1423 = vmatpush1.msra.mxu0 0.0
      %1424 = vmatprep.subr.mxu0 0.0
      %1425 = vmatpush1.msra.mxu0 0.0
      %1426 = vmatprep.subr.mxu0 0.0
      %1427 = vmatpush1.msra.mxu0 0.0
      %1428 = vmatprep.subr.mxu0 0.0
      %1429 = vmatpush1.msra.mxu0 0.0
      %1430 = vmatprep.subr.mxu0 0.0
      %1431 = vmatpush1.msra.mxu0 0.0
      %1432 = vmatprep.subr.mxu0 0.0
      %1433 = vmatpush1.msra.mxu0 0.0
      %1434 = vmatprep.subr.mxu0 0.0
      %1435 = vmatpush1.msra.mxu0 0.0
      %1436 = vmatprep.subr.mxu0 0.0
      %1437 = vmatpush1.msra.mxu0 0.0
      %1438 = vmatprep.subr.mxu0 0.0
      %1439 = vmatpush1.msra.mxu0 0.0
      %1440 = vmatprep.subr.mxu0 0.0
      %1441 = vmatpush1.msra.mxu0 0.0
      %1442 = vmatprep.subr.mxu0 0.0
      %1443 = vmatpush1.msra.mxu0 0.0
      %1444 = vmatprep.subr.mxu0 0.0
      %1445 = vmatpush1.msra.mxu0 0.0
      %1446 = vmatprep.subr.mxu0 0.0
      %1447 = vmatpush1.msra.mxu0 0.0
      %1448 = vmatprep.subr.mxu0 0.0
      %1449 = vmatpush1.msra.mxu0 0.0
      %1450 = vmatprep.subr.mxu0 0.0
      %1451 = vmatpush1.msra.mxu0 0.0
      %1452 = vmatprep.mubr.f32.mxu0 0.0
      %1453 = vmatmul.mubr.f32.gmra.mrb[0].mxu0 %v1373
      %v1454 = vpop.f32.mrb[0].mxu0
      %v1455 = vadd.f32 0.0, %v1454
      %v1456 = vpop.f32.mrb[0].mxu0
      %v1457 = vadd.f32 0.0, %v1456
      %1458 = vmatprep.mubr.f32.mxu0 0.0
      %1459 = vmatmul.mubr.f32.gmra.mrb[0].mxu0 %v1376
      %v1460 = vpop.f32.mrb[0].mxu0
      %v1461 = vadd.f32 0.0, %v1460
      %v1462 = vpop.f32.mrb[0].mxu0
      %v1463 = vadd.f32 0.0, %v1462
      %1464 = vmatprep.mubr.f32.mxu0 0.0
      %1465 = vmatmul.mubr.f32.gmra.mrb[0].mxu0 %v1379
      %v1466 = vpop.f32.mrb[0].mxu0
      %v1467 = vadd.f32 0.0, %v1466
      %v1468 = vpop.f32.mrb[0].mxu0
      %v1469 = vadd.f32 0.0, %v1468
      %1470 = vdwg.mxu0
      %v1472 = vsel %vm1371, %v1013, 0
      %v1475 = vsel %vm1371, %v1014, 0
      %v1478 = vsel %vm1371, %v1015, 0
      %v1481 = vsel %vm1381, %v1007, 0
      %v1484 = vsel %vm1381, %v1009, 0
      %1486 = vmatprep.subr.mxu0 %v989
      %1487 = vmatpush1.msra.mxu0 %v987
      %1488 = vmatprep.subr.mxu0 %v993
      %1489 = vmatpush1.msra.mxu0 %v991
      %1490 = vmatprep.subr.mxu0 %v999
      %1491 = vmatpush1.msra.mxu0 %v997
      %1492 = vmatprep.subr.mxu0 %v1003
      %1493 = vmatpush1.msra.mxu0 %v1001
      %1494 = vmatprep.subr.mxu0 %v1484
      %1495 = vmatpush1.msra.mxu0 %v1481
      %1496 = vmatprep.subr.mxu0 0.0
      %1497 = vmatpush1.msra.mxu0 0.0
      %1498 = vmatprep.subr.mxu0 0.0
      %1499 = vmatpush1.msra.mxu0 0.0
      %1500 = vmatprep.subr.mxu0 0.0
      %1501 = vmatpush1.msra.mxu0 0.0
      %1502 = vmatprep.subr.mxu0 0.0
      %1503 = vmatpush1.msra.mxu0 0.0
      %1504 = vmatprep.subr.mxu0 0.0
      %1505 = vmatpush1.msra.mxu0 0.0
      %1506 = vmatprep.subr.mxu0 0.0
      %1507 = vmatpush1.msra.mxu0 0.0
      %1508 = vmatprep.subr.mxu0 0.0
      %1509 = vmatpush1.msra.mxu0 0.0
      %1510 = vmatprep.subr.mxu0 0.0
      %1511 = vmatpush1.msra.mxu0 0.0
      %1512 = vmatprep.subr.mxu0 0.0
      %1513 = vmatpush1.msra.mxu0 0.0
      %1514 = vmatprep.subr.mxu0 0.0
      %1515 = vmatpush1.msra.mxu0 0.0
      %1516 = vmatprep.subr.mxu0 0.0
      %1517 = vmatpush1.msra.mxu0 0.0
      %1518 = vmatprep.subr.mxu0 0.0
      %1519 = vmatpush1.msra.mxu0 0.0
      %1520 = vmatprep.subr.mxu0 0.0
      %1521 = vmatpush1.msra.mxu0 0.0
      %1522 = vmatprep.subr.mxu0 0.0
      %1523 = vmatpush1.msra.mxu0 0.0
      %1524 = vmatprep.subr.mxu0 0.0
      %1525 = vmatpush1.msra.mxu0 0.0
      %1526 = vmatprep.subr.mxu0 0.0
      %1527 = vmatpush1.msra.mxu0 0.0
      %1528 = vmatprep.subr.mxu0 0.0
      %1529 = vmatpush1.msra.mxu0 0.0
      %1530 = vmatprep.subr.mxu0 0.0
      %1531 = vmatpush1.msra.mxu0 0.0
      %1532 = vmatprep.subr.mxu0 0.0
      %1533 = vmatpush1.msra.mxu0 0.0
      %1534 = vmatprep.subr.mxu0 0.0
      %1535 = vmatpush1.msra.mxu0 0.0
      %1536 = vmatprep.subr.mxu0 0.0
      %1537 = vmatpush1.msra.mxu0 0.0
      %1538 = vmatprep.subr.mxu0 0.0
      %1539 = vmatpush1.msra.mxu0 0.0
      %1540 = vmatprep.subr.mxu0 0.0
      %1541 = vmatpush1.msra.mxu0 0.0
      %1542 = vmatprep.subr.mxu0 0.0
      %1543 = vmatpush1.msra.mxu0 0.0
      %1544 = vmatprep.subr.mxu0 0.0
      %1545 = vmatpush1.msra.mxu0 0.0
      %1546 = vmatprep.subr.mxu0 0.0
      %1547 = vmatpush1.msra.mxu0 0.0
      %1548 = vmatprep.subr.mxu0 0.0
      %1549 = vmatpush1.msra.mxu0 0.0
      %1550 = vmatprep.mubr.f32.mxu0 0.0
      %1551 = vmatmul.mubr.f32.gmra.mrb[0].mxu0 %v1472
      %v1552 = vpop.f32.mrb[0].mxu0
      %v1553 = vadd.f32 %v1455, %v1552
      %v1554 = vpop.f32.mrb[0].mxu0
      %v1555 = vadd.f32 %v1457, %v1554
      %1556 = vmatprep.mubr.f32.mxu0 0.0
      %1557 = vmatmul.mubr.f32.gmra.mrb[0].mxu0 %v1475
      %v1558 = vpop.f32.mrb[0].mxu0
      %v1559 = vadd.f32 %v1461, %v1558
      %v1560 = vpop.f32.mrb[0].mxu0
      %v1561 = vadd.f32 %v1463, %v1560
      %1562 = vmatprep.mubr.f32.mxu0 0.0
      %1563 = vmatmul.mubr.f32.gmra.mrb[0].mxu0 %v1478
      %v1564 = vpop.f32.mrb[0].mxu0
      %v1565 = vadd.f32 %v1467, %v1564
      %v1566 = vpop.f32.mrb[0].mxu0
      %v1567 = vadd.f32 %v1469, %v1566
      %1568 = vdwg.mxu0
      %s1569 = scalar_lea.vmem %s1, 608
      %v1570 = vld [vmem:[%s1569] sm:$0xff]
      %v1571 = vld [vmem:[%s1569 + $0x8] sm:$0xff]
      %v1572 = vld [vmem:[%s1569 + $0x10] sm:$0xff]
      %v1573 = vld [vmem:[%s1569 + $0x18] sm:$0xff]
      %v1574 = vld [vmem:[%s1569 + $0x20] sm:$0xff]
      %v1575 = vld [vmem:[%s1569 + $0x28] sm:$0xff]
      %v1576 = vld [vmem:[%s1569 + $0x30] sm:$0xff]
      %v1577 = vld [vmem:[%s1569 + $0x38] sm:$0xff]
      %v1578 = vld [vmem:[%s1569 + $0x40] sm:$0xff]
      %v1579 = vld [vmem:[%s1569 + $0x48] sm:$0xff]
      %v1580 = vld [vmem:[%s1569 + $0x50] sm:$0xff]
      %v1581 = vld [vmem:[%s1569 + $0x58] sm:$0xff]
      %v1582 = vld [vmem:[%s1569 + $0x60] sm:$0xff]
      %v1583 = vld [vmem:[%s1569 + $0x68] sm:$0xff]
      %v1584 = vld [vmem:[%s1569 + $0x70] sm:$0xff]
      %v1585 = vld [vmem:[%s1569 + $0x78] sm:$0xff]
      %v1586 = vld [vmem:[%s1569 + $0x80] sm:$0xff]
      %v1587 = vld [vmem:[%s1569 + $0x88] sm:$0xff]
      %v1588 = vld [vmem:[%s1569 + $0x90] sm:$0xff]
      %v1589 = vld [vmem:[%s1569 + $0x98] sm:$0xff]
      %v1590 = vld [vmem:[%s1569 + $0xa0] sm:$0xff]
      %v1591 = vld [vmem:[%s1569 + $0xa8] sm:$0xff]
      %v1592 = vld [vmem:[%s1569 + $0xb0] sm:$0xff]
      %v1593 = vld [vmem:[%s1569 + $0xb8] sm:$0xff]
      %v1594 = vld [vmem:[%s1569 + $0xc0] sm:$0xff]
      %v1595 = vld [vmem:[%s1569 + $0xc8] sm:$0xff]
      %v1596 = vld [vmem:[%s1569 + $0xd0] sm:$0xff]
      %v1597 = vld [vmem:[%s1569 + $0xd8] sm:$0xff]
      %v1598 = vld [vmem:[%s1569 + $0xe0] sm:$0xff]
      %v1599 = vld [vmem:[%s1569 + $0xe8] sm:$0xff]
      %v1600 = vld [vmem:[%s1569 + $0xf0] sm:$0xff]
      %v1601 = vld [vmem:[%s1569 + $0xf8] sm:$0xff]
      %v1602 = vld [vmem:[%s1569 + $0x100] sm:$0xff]
      %v1603 = vld [vmem:[%s1569 + $0x108] sm:$0xff]
      %v1604 = vld [vmem:[%s1569 + $0x110] sm:$0xff]
      %v1605 = vld [vmem:[%s1569 + $0x118] sm:$0xff]
      %v1606 = vld [vmem:[%s1569 + $0x120] sm:$0xff]
      %v1607 = vld [vmem:[%s1569 + $0x128] sm:$0xff]
      %v1646 = vunpack.c.l.b16 %v1570
      %v1647 = vunpack.c.h.b16 %v1570
      %v1648 = vunpack.c.l.b16 %v1571
      %v1649 = vunpack.c.h.b16 %v1571
      %v1650 = vunpack.c.l.b16 %v1572
      %v1651 = vunpack.c.h.b16 %v1572
      %v1652 = vunpack.c.l.b16 %v1573
      %v1653 = vunpack.c.h.b16 %v1573
      %v1654 = vunpack.c.l.b16 %v1574
      %v1655 = vunpack.c.h.b16 %v1574
      %v1656 = vunpack.c.l.b16 %v1575
      %v1657 = vunpack.c.h.b16 %v1575
      %v1658 = vunpack.c.l.b16 %v1576
      %v1659 = vunpack.c.h.b16 %v1576
      %v1660 = vunpack.c.l.b16 %v1577
      %v1661 = vunpack.c.h.b16 %v1577
      %v1662 = vunpack.c.l.b16 %v1578
      %v1663 = vunpack.c.h.b16 %v1578
      %v1664 = vunpack.c.l.b16 %v1579
      %v1665 = vunpack.c.h.b16 %v1579
      %v1666 = vunpack.c.l.b16 %v1580
      %v1667 = vunpack.c.h.b16 %v1580
      %v1668 = vunpack.c.l.b16 %v1581
      %v1669 = vunpack.c.h.b16 %v1581
      %v1670 = vunpack.c.l.b16 %v1582
      %v1671 = vunpack.c.h.b16 %v1582
      %v1672 = vunpack.c.l.b16 %v1583
      %v1673 = vunpack.c.h.b16 %v1583
      %v1674 = vunpack.c.l.b16 %v1584
      %v1675 = vunpack.c.h.b16 %v1584
      %v1676 = vunpack.c.l.b16 %v1585
      %v1677 = vunpack.c.h.b16 %v1585
      %v1678 = vunpack.c.l.b16 %v1586
      %v1679 = vunpack.c.h.b16 %v1586
      %v1680 = vunpack.c.l.b16 %v1587
      %v1681 = vunpack.c.h.b16 %v1587
      %v1682 = vunpack.c.l.b16 %v1588
      %v1683 = vunpack.c.h.b16 %v1588
      %v1684 = vunpack.c.l.b16 %v1589
      %v1685 = vunpack.c.h.b16 %v1589
      %v1686 = vunpack.c.l.b16 %v1590
      %v1687 = vunpack.c.h.b16 %v1590
      %v1688 = vunpack.c.l.b16 %v1591
      %v1689 = vunpack.c.h.b16 %v1591
      %v1690 = vunpack.c.l.b16 %v1592
      %v1691 = vunpack.c.h.b16 %v1592
      %v1692 = vunpack.c.l.b16 %v1593
      %v1693 = vunpack.c.h.b16 %v1593
      %v1694 = vunpack.c.l.b16 %v1594
      %v1695 = vunpack.c.h.b16 %v1594
      %v1696 = vunpack.c.l.b16 %v1595
      %v1697 = vunpack.c.h.b16 %v1595
      %v1698 = vunpack.c.l.b16 %v1596
      %v1699 = vunpack.c.h.b16 %v1596
      %v1700 = vunpack.c.l.b16 %v1597
      %v1701 = vunpack.c.h.b16 %v1597
      %v1702 = vunpack.c.l.b16 %v1598
      %v1703 = vunpack.c.h.b16 %v1598
      %v1704 = vunpack.c.l.b16 %v1599
      %v1705 = vunpack.c.h.b16 %v1599
      %v1706 = vunpack.c.l.b16 %v1600
      %v1707 = vunpack.c.h.b16 %v1600
      %v1708 = vunpack.c.l.b16 %v1601
      %v1709 = vunpack.c.h.b16 %v1601
      %v1710 = vunpack.c.l.b16 %v1602
      %v1711 = vunpack.c.h.b16 %v1602
      %v1712 = vunpack.c.l.b16 %v1603
      %v1713 = vunpack.c.h.b16 %v1603
      %v1714 = vunpack.c.l.b16 %v1604
      %v1715 = vunpack.c.h.b16 %v1604
      %v1716 = vunpack.c.l.b16 %v1605
      %v1717 = vunpack.c.h.b16 %v1605
      %v1718 = vunpack.c.l.b16 %v1606
      %v1719 = vunpack.c.h.b16 %v1606
      %v1720 = vunpack.c.l.b16 %v1607
      %v1721 = vunpack.c.h.b16 %v1607
      %v1722 = vpack.c.b16 %v1648, %v1646
      %v1723 = vpack.c.b16 %v1649, %v1647
      %v1724 = vpack.c.b16 %v1652, %v1650
      %v1725 = vpack.c.b16 %v1653, %v1651
      %v1726 = vpack.c.b16 %v1656, %v1654
      %v1727 = vpack.c.b16 %v1657, %v1655
      %v1728 = vpack.c.b16 %v1660, %v1658
      %v1729 = vpack.c.b16 %v1661, %v1659
      %v1730 = vpack.c.b16 %v1664, %v1662
      %v1731 = vpack.c.b16 %v1665, %v1663
      %v1732 = vpack.c.b16 %v1668, %v1666
      %v1733 = vpack.c.b16 %v1669, %v1667
      %v1734 = vpack.c.b16 %v1672, %v1670
      %v1735 = vpack.c.b16 %v1673, %v1671
      %v1736 = vpack.c.b16 %v1676, %v1674
      %v1737 = vpack.c.b16 %v1677, %v1675
      %v1738 = vpack.c.b16 %v1680, %v1678
      %v1739 = vpack.c.b16 %v1681, %v1679
      %v1740 = vpack.c.b16 %v1684, %v1682
      %v1741 = vpack.c.b16 %v1685, %v1683
      %v1742 = vpack.c.b16 %v1688, %v1686
      %v1743 = vpack.c.b16 %v1689, %v1687
      %v1744 = vpack.c.b16 %v1692, %v1690
      %v1745 = vpack.c.b16 %v1693, %v1691
      %v1746 = vpack.c.b16 %v1696, %v1694
      %v1747 = vpack.c.b16 %v1697, %v1695
      %v1748 = vpack.c.b16 %v1700, %v1698
      %v1749 = vpack.c.b16 %v1701, %v1699
      %v1750 = vpack.c.b16 %v1704, %v1702
      %v1751 = vpack.c.b16 %v1705, %v1703
      %v1752 = vpack.c.b16 %v1708, %v1706
      %v1753 = vpack.c.b16 %v1709, %v1707
      %v1754 = vpack.c.b16 %v1712, %v1710
      %v1755 = vpack.c.b16 %v1713, %v1711
      %v1756 = vpack.c.b16 %v1716, %v1714
      %v1757 = vpack.c.b16 %v1717, %v1715
      %v1758 = vpack.c.b16 %v1720, %v1718
      %v1759 = vpack.c.b16 %v1721, %v1719
      %1798 = vmatprep.subr.bf16.mxu0 %v1723
      %1799 = vmatpush1.bf16.msra.mxu0 %v1722
      %1800 = vmatprep.subr.bf16.mxu0 %v1725
      %1801 = vmatpush1.bf16.msra.mxu0 %v1724
      %1802 = vmatprep.subr.bf16.mxu0 %v1727
      %1803 = vmatpush1.bf16.msra.mxu0 %v1726
      %1804 = vmatprep.subr.bf16.mxu0 %v1729
      %1805 = vmatpush1.bf16.msra.mxu0 %v1728
      %1806 = vmatprep.subr.bf16.mxu0 %v1731
      %1807 = vmatpush1.bf16.msra.mxu0 %v1730
      %1808 = vmatprep.subr.bf16.mxu0 %v1733
      %1809 = vmatpush1.bf16.msra.mxu0 %v1732
      %1810 = vmatprep.subr.bf16.mxu0 %v1735
      %1811 = vmatpush1.bf16.msra.mxu0 %v1734
      %1812 = vmatprep.subr.bf16.mxu0 %v1737
      %1813 = vmatpush1.bf16.msra.mxu0 %v1736
      %1814 = vmatprep.subr.bf16.mxu0 %v1739
      %1815 = vmatpush1.bf16.msra.mxu0 %v1738
      %1816 = vmatprep.subr.bf16.mxu0 %v1741
      %1817 = vmatpush1.bf16.msra.mxu0 %v1740
      %1818 = vmatprep.subr.bf16.mxu0 %v1743
      %1819 = vmatpush1.bf16.msra.mxu0 %v1742
      %1820 = vmatprep.subr.bf16.mxu0 %v1745
      %1821 = vmatpush1.bf16.msra.mxu0 %v1744
      %1822 = vmatprep.subr.bf16.mxu0 %v1747
      %1823 = vmatpush1.bf16.msra.mxu0 %v1746
      %1824 = vmatprep.subr.bf16.mxu0 %v1749
      %1825 = vmatpush1.bf16.msra.mxu0 %v1748
      %1826 = vmatprep.subr.bf16.mxu0 %v1751
      %1827 = vmatpush1.bf16.msra.mxu0 %v1750
      %1828 = vmatprep.subr.bf16.mxu0 %v1753
      %1829 = vmatpush1.bf16.msra.mxu0 %v1752
      %1830 = vmatprep.mubr.bf16.mxu0 %v645
      %1831 = vmatmul.mubr.bf16.gmra.mrb[0].mxu0 %v644
      %v1832 = vpop.f32.mrb[0].mxu0
      %v1833 = vadd.f32 0.0, %v1832
      %v1834 = vpop.f32.mrb[0].mxu0
      %v1835 = vadd.f32 0.0, %v1834
      %v1836 = vpop.f32.mrb[0].mxu0
      %v1837 = vadd.f32 0.0, %v1836
      %v1838 = vpop.f32.mrb[0].mxu0
      %v1839 = vadd.f32 0.0, %v1838
      %1840 = vmatprep.mubr.bf16.mxu0 %v648
      %1841 = vmatmul.mubr.bf16.gmra.mrb[0].mxu0 %v647
      %v1842 = vpop.f32.mrb[0].mxu0
      %v1843 = vadd.f32 0.0, %v1842
      %v1844 = vpop.f32.mrb[0].mxu0
      %v1845 = vadd.f32 0.0, %v1844
      %v1846 = vpop.f32.mrb[0].mxu0
      %v1847 = vadd.f32 0.0, %v1846
      %v1848 = vpop.f32.mrb[0].mxu0
      %v1849 = vadd.f32 0.0, %v1848
      %1850 = vmatprep.mubr.bf16.mxu0 %v651
      %1851 = vmatmul.mubr.bf16.gmra.mrb[0].mxu0 %v650
      %v1852 = vpop.f32.mrb[0].mxu0
      %v1853 = vadd.f32 0.0, %v1852
      %v1854 = vpop.f32.mrb[0].mxu0
      %v1855 = vadd.f32 0.0, %v1854
      %v1856 = vpop.f32.mrb[0].mxu0
      %v1857 = vpop.f32.mrb[0].mxu0
      %1858 = vdwg.mxu0
      %1859 = vmatprep.subr.bf16.mxu0 %v1755
      %1860 = vmatpush1.bf16.msra.mxu0 %v1754
      %1861 = vmatprep.subr.bf16.mxu0 %v1757
      %1862 = vmatpush1.bf16.msra.mxu0 %v1756
      %1863 = vmatprep.subr.bf16.mxu0 %v1759
      %1864 = vmatpush1.bf16.msra.mxu0 %v1758
      %1865 = vmatprep.subr.bf16.mxu0 0
      %1866 = vmatpush1.bf16.msra.mxu0 0
      %1867 = vmatprep.subr.bf16.mxu0 0
      %1868 = vmatpush1.bf16.msra.mxu0 0
      %1869 = vmatprep.subr.bf16.mxu0 0
      %1870 = vmatpush1.bf16.msra.mxu0 0
      %1871 = vmatprep.subr.bf16.mxu0 0
      %1872 = vmatpush1.bf16.msra.mxu0 0
      %1873 = vmatprep.subr.bf16.mxu0 0
      %1874 = vmatpush1.bf16.msra.mxu0 0
      %1875 = vmatprep.subr.bf16.mxu0 0
      %1876 = vmatpush1.bf16.msra.mxu0 0
      %1877 = vmatprep.subr.bf16.mxu0 0
      %1878 = vmatpush1.bf16.msra.mxu0 0
      %1879 = vmatprep.subr.bf16.mxu0 0
      %1880 = vmatpush1.bf16.msra.mxu0 0
      %1881 = vmatprep.subr.bf16.mxu0 0
      %1882 = vmatpush1.bf16.msra.mxu0 0
      %1883 = vmatprep.subr.bf16.mxu0 0
      %1884 = vmatpush1.bf16.msra.mxu0 0
      %1885 = vmatprep.subr.bf16.mxu0 0
      %1886 = vmatpush1.bf16.msra.mxu0 0
      %1887 = vmatprep.subr.bf16.mxu0 0
      %1888 = vmatpush1.bf16.msra.mxu0 0
      %1889 = vmatprep.subr.bf16.mxu0 0
      %1890 = vmatpush1.bf16.msra.mxu0 0
      %1891 = vmatprep.mubr.bf16.mxu0 0
      %1892 = vmatmul.mubr.bf16.gmra.mrb[0].mxu0 %v883
      %v1893 = vpop.f32.mrb[0].mxu0
      %v1894 = vadd.f32 %v1833, %v1893
      %v1895 = vpop.f32.mrb[0].mxu0
      %v1896 = vadd.f32 %v1835, %v1895
      %v1897 = vpop.f32.mrb[0].mxu0
      %v1898 = vadd.f32 %v1837, %v1897
      %v1899 = vpop.f32.mrb[0].mxu0
      %v1900 = vadd.f32 %v1839, %v1899
      %1901 = vmatprep.mubr.bf16.mxu0 0
      %1902 = vmatmul.mubr.bf16.gmra.mrb[0].mxu0 %v886
      %v1903 = vpop.f32.mrb[0].mxu0
      %v1904 = vadd.f32 %v1843, %v1903
      %v1905 = vpop.f32.mrb[0].mxu0
      %v1906 = vadd.f32 %v1845, %v1905
      %v1907 = vpop.f32.mrb[0].mxu0
      %v1908 = vadd.f32 %v1847, %v1907
      %v1909 = vpop.f32.mrb[0].mxu0
      %v1910 = vadd.f32 %v1849, %v1909
      %1911 = vmatprep.mubr.bf16.mxu0 0
      %1912 = vmatmul.mubr.bf16.gmra.mrb[0].mxu0 %v889
      %v1913 = vpop.f32.mrb[0].mxu0
      %v1914 = vadd.f32 %v1853, %v1913
      %v1915 = vpop.f32.mrb[0].mxu0
      %v1916 = vadd.f32 %v1855, %v1915
      %v1917 = vpop.f32.mrb[0].mxu0
      %v1918 = vpop.f32.mrb[0].mxu0
      %1919 = vdwg.mxu0
      %s1920 = scalar_lea.vmem %s2, 48
      %v1921 = vld [vmem:[%s1920] sm:$0xff]
      %v1922 = vld [vmem:[%s1920 + $0x8] sm:$0xff]
      %v1923 = vld [vmem:[%s1920 + $0x10] sm:$0x7]
      %v1925 = vsel %vm1371, %v1921, 0
      %v1928 = vsel %vm1371, %v1922, 0
      %v1931 = vsel %vm1371, %v1923, 0
      %v1934 = vsel %vm1381, %v1914, 0
      %v1937 = vsel %vm1381, %v1916, 0
      %1939 = vmatprep.subr.mxu0 %v1896
      %1940 = vmatpush1.msra.mxu0 %v1894
      %1941 = vmatprep.subr.mxu0 %v1900
      %1942 = vmatpush1.msra.mxu0 %v1898
      %1943 = vmatprep.subr.mxu0 %v1906
      %1944 = vmatpush1.msra.mxu0 %v1904
      %1945 = vmatprep.subr.mxu0 %v1910
      %1946 = vmatpush1.msra.mxu0 %v1908
      %1947 = vmatprep.subr.mxu0 %v1937
      %1948 = vmatpush1.msra.mxu0 %v1934
      %1949 = vmatprep.subr.mxu0 0.0
      %1950 = vmatpush1.msra.mxu0 0.0
      %1951 = vmatprep.subr.mxu0 0.0
      %1952 = vmatpush1.msra.mxu0 0.0
      %1953 = vmatprep.subr.mxu0 0.0
      %1954 = vmatpush1.msra.mxu0 0.0
      %1955 = vmatprep.subr.mxu0 0.0
      %1956 = vmatpush1.msra.mxu0 0.0
      %1957 = vmatprep.subr.mxu0 0.0
      %1958 = vmatpush1.msra.mxu0 0.0
      %1959 = vmatprep.subr.mxu0 0.0
      %1960 = vmatpush1.msra.mxu0 0.0
      %1961 = vmatprep.subr.mxu0 0.0
      %1962 = vmatpush1.msra.mxu0 0.0
      %1963 = vmatprep.subr.mxu0 0.0
      %1964 = vmatpush1.msra.mxu0 0.0
      %1965 = vmatprep.subr.mxu0 0.0
      %1966 = vmatpush1.msra.mxu0 0.0
      %1967 = vmatprep.subr.mxu0 0.0
      %1968 = vmatpush1.msra.mxu0 0.0
      %1969 = vmatprep.subr.mxu0 0.0
      %1970 = vmatpush1.msra.mxu0 0.0
      %1971 = vmatprep.subr.mxu0 0.0
      %1972 = vmatpush1.msra.mxu0 0.0
      %1973 = vmatprep.subr.mxu0 0.0
      %1974 = vmatpush1.msra.mxu0 0.0
      %1975 = vmatprep.subr.mxu0 0.0
      %1976 = vmatpush1.msra.mxu0 0.0
      %1977 = vmatprep.subr.mxu0 0.0
      %1978 = vmatpush1.msra.mxu0 0.0
      %1979 = vmatprep.subr.mxu0 0.0
      %1980 = vmatpush1.msra.mxu0 0.0
      %1981 = vmatprep.subr.mxu0 0.0
      %1982 = vmatpush1.msra.mxu0 0.0
      %1983 = vmatprep.subr.mxu0 0.0
      %1984 = vmatpush1.msra.mxu0 0.0
      %1985 = vmatprep.subr.mxu0 0.0
      %1986 = vmatpush1.msra.mxu0 0.0
      %1987 = vmatprep.subr.mxu0 0.0
      %1988 = vmatpush1.msra.mxu0 0.0
      %1989 = vmatprep.subr.mxu0 0.0
      %1990 = vmatpush1.msra.mxu0 0.0
      %1991 = vmatprep.subr.mxu0 0.0
      %1992 = vmatpush1.msra.mxu0 0.0
      %1993 = vmatprep.subr.mxu0 0.0
      %1994 = vmatpush1.msra.mxu0 0.0
      %1995 = vmatprep.subr.mxu0 0.0
      %1996 = vmatpush1.msra.mxu0 0.0
      %1997 = vmatprep.subr.mxu0 0.0
      %1998 = vmatpush1.msra.mxu0 0.0
      %1999 = vmatprep.subr.mxu0 0.0
      %2000 = vmatpush1.msra.mxu0 0.0
      %2001 = vmatprep.subr.mxu0 0.0
      %2002 = vmatpush1.msra.mxu0 0.0
      %2003 = vmatprep.mubr.f32.mxu0 0.0
      %2004 = vmatmul.mubr.f32.gmra.mrb[0].mxu0 %v1925
      %v2005 = vpop.f32.mrb[0].mxu0
      %v2006 = vadd.f32 0.0, %v2005
      %v2007 = vpop.f32.mrb[0].mxu0
      %v2008 = vadd.f32 0.0, %v2007
      %2009 = vmatprep.mubr.f32.mxu0 0.0
      %2010 = vmatmul.mubr.f32.gmra.mrb[0].mxu0 %v1928
      %v2011 = vpop.f32.mrb[0].mxu0
      %v2012 = vadd.f32 0.0, %v2011
      %v2013 = vpop.f32.mrb[0].mxu0
      %v2014 = vadd.f32 0.0, %v2013
      %2015 = vmatprep.mubr.f32.mxu0 0.0
      %2016 = vmatmul.mubr.f32.gmra.mrb[0].mxu0 %v1931
      %v2017 = vpop.f32.mrb[0].mxu0
      %v2018 = vadd.f32 0.0, %v2017
      %v2019 = vpop.f32.mrb[0].mxu0
      %v2020 = vadd.f32 0.0, %v2019
      %2021 = vdwg.mxu0
      %v2022 = vadd.f32 %v1553, %v2006
      %v2023 = vadd.f32 %v1555, %v2008
      %v2024 = vadd.f32 %v1559, %v2012
      %v2025 = vadd.f32 %v1561, %v2014
      %v2026 = vadd.f32 %v1565, %v2018
      %v2027 = vadd.f32 %v1567, %v2020
      %v2028 = vld [vmem:[%s3] sm:$0x3]
      %v2030 = vlaneseq
      %v2031 = vshrl.u32 %v2030, 7
      %v2032 = vsub.s32 0, %v2031
      %v2033 = vrot.slane %v2028, %v2032
      %v2034 = vlaneseq
      %v2035 = vshrl.u32 %v2034, 7
      %v2036 = vsub.s32 1, %v2035
      %v2037 = vrot.slane %v2028, %v2036
      %v2040 = vadd.f32 %v2022, %v2033
      %v2041 = vadd.f32 %v2023, %v2037
      %v2042 = vadd.f32 %v2024, %v2033
      %v2043 = vadd.f32 %v2025, %v2037
      %v2044 = vadd.f32 %v2026, %v2033
      %v2045 = vadd.f32 %v2027, %v2037
      %v2046 = vadd.f32 %v2040, %v2042
      %vm2047 = vcmask 1042432
      %v2048 = vsel %vm2047, %v2044, 0.0
      %v2049 = vadd.f32 %v2046, %v2048
      %v2050 = vrot.slane %v2049, 4
      %v2051 = vadd.f32 %v2049, %v2050
      %v2052 = vrot.slane %v2051, 2
      %v2053 = vadd.f32 %v2051, %v2052
      %v2054 = vrot.slane %v2053, 1
      %v2055 = vadd.f32 %v2053, %v2054
      %vm2056 = vcmask 195584
      %v2057 = vsel %vm2056, %v2041, 0.0
      %v2058 = vsel %vm2056, %v2043, 0.0
      %v2059 = vadd.f32 %v2057, %v2058
      %vm2060 = vcmask 190464
      %v2061 = vsel %vm2060, %v2045, 0.0
      %v2062 = vadd.f32 %v2059, %v2061
      %v2063 = vrot.slane %v2062, 4
      %v2064 = vadd.f32 %v2062, %v2063
      %v2065 = vrot.slane %v2064, 2
      %v2066 = vadd.f32 %v2064, %v2065
      %v2067 = vrot.slane %v2066, 1
      %v2068 = vadd.f32 %v2066, %v2067
      %v2069 = vmul.f32 %v2040, %v2040
      %v2070 = vmul.f32 %v2041, %v2041
      %v2071 = vmul.f32 %v2042, %v2042
      %v2072 = vmul.f32 %v2043, %v2043
      %v2073 = vmul.f32 %v2044, %v2044
      %v2074 = vmul.f32 %v2045, %v2045
      %v2075 = vadd.f32 %v2069, %v2071
      %v2076 = vsel %vm2047, %v2073, 0.0
      %v2077 = vadd.f32 %v2075, %v2076
      %v2078 = vrot.slane %v2077, 4
      %v2079 = vadd.f32 %v2077, %v2078
      %v2080 = vrot.slane %v2079, 2
      %v2081 = vadd.f32 %v2079, %v2080
      %v2082 = vrot.slane %v2081, 1
      %v2083 = vadd.f32 %v2081, %v2082
      %v2084 = vsel %vm2056, %v2070, 0.0
      %v2085 = vsel %vm2056, %v2072, 0.0
      %v2086 = vadd.f32 %v2084, %v2085
      %v2087 = vsel %vm2060, %v2074, 0.0
      %v2088 = vadd.f32 %v2086, %v2087
      %v2089 = vrot.slane %v2088, 4
      %v2090 = vadd.f32 %v2088, %v2089
      %v2091 = vrot.slane %v2090, 2
      %v2092 = vadd.f32 %v2090, %v2091
      %v2093 = vrot.slane %v2092, 1
      %v2094 = vadd.f32 %v2092, %v2093
      %v2095 = vld [vmem:[%s4] sm:$0xff]
      %v2096 = vld [vmem:[%s4 + $0x8] sm:$0xff]
      %v2097 = vld [vmem:[%s4 + $0x10] sm:$0xff]
      %v2098 = vld [vmem:[%s4 + $0x18] sm:$0xff]
      %v2099 = vld [vmem:[%s4 + $0x20] sm:$0xff]
      %v2100 = vld [vmem:[%s4 + $0x28] sm:$0xff]
      %v2101 = vld [vmem:[%s4 + $0x30] sm:$0xff]
      %v2102 = vld [vmem:[%s4 + $0x38] sm:$0xff]
      %v2103 = vld [vmem:[%s4 + $0x40] sm:$0xff]
      %v2104 = vld [vmem:[%s4 + $0x48] sm:$0xff]
      %v2105 = vld [vmem:[%s4 + $0x50] sm:$0xff]
      %v2106 = vld [vmem:[%s4 + $0x58] sm:$0xff]
      %v2107 = vld [vmem:[%s4 + $0x60] sm:$0xff]
      %v2108 = vld [vmem:[%s4 + $0x68] sm:$0xff]
      %v2109 = vld [vmem:[%s4 + $0x70] sm:$0xff]
      %v2110 = vld [vmem:[%s4 + $0x78] sm:$0xff]
      %v2111 = vld [vmem:[%s4 + $0x80] sm:$0xff]
      %v2112 = vld [vmem:[%s4 + $0x88] sm:$0xff]
      %v2113 = vld [vmem:[%s4 + $0x90] sm:$0xff]
      %v2114 = vld [vmem:[%s4 + $0x98] sm:$0xff]
      %v2115 = vld [vmem:[%s4 + $0xa0] sm:$0xff]
      %v2116 = vld [vmem:[%s4 + $0xa8] sm:$0xff]
      %v2117 = vld [vmem:[%s4 + $0xb0] sm:$0xff]
      %v2118 = vld [vmem:[%s4 + $0xb8] sm:$0xff]
      %v2119 = vld [vmem:[%s4 + $0xc0] sm:$0xff]
      %v2120 = vld [vmem:[%s4 + $0xc8] sm:$0xff]
      %v2121 = vld [vmem:[%s4 + $0xd0] sm:$0xff]
      %v2122 = vld [vmem:[%s4 + $0xd8] sm:$0xff]
      %v2123 = vld [vmem:[%s4 + $0xe0] sm:$0xff]
      %v2124 = vld [vmem:[%s4 + $0xe8] sm:$0xff]
      %v2125 = vld [vmem:[%s4 + $0xf0] sm:$0xff]
      %v2126 = vld [vmem:[%s4 + $0xf8] sm:$0xff]
      %v2127 = vld [vmem:[%s4 + $0x100] sm:$0xff]
      %v2128 = vld [vmem:[%s4 + $0x108] sm:$0xff]
      %v2129 = vld [vmem:[%s4 + $0x110] sm:$0xff]
      %v2130 = vld [vmem:[%s4 + $0x118] sm:$0xff]
      %v2131 = vld [vmem:[%s4 + $0x120] sm:$0xff]
      %v2132 = vld [vmem:[%s4 + $0x128] sm:$0xff]
      %v2134 = vsel %vm2056, %v2068, 0
      %2136 = vmatprep.subr.mxu0 %v2096
      %2137 = vmatpush1.msra.mxu0 %v2095
      %2138 = vmatprep.subr.mxu0 %v2098
      %2139 = vmatpush1.msra.mxu0 %v2097
      %2140 = vmatprep.subr.mxu0 %v2100
      %2141 = vmatpush1.msra.mxu0 %v2099
      %2142 = vmatprep.subr.mxu0 %v2102
      %2143 = vmatpush1.msra.mxu0 %v2101
      %2144 = vmatprep.subr.mxu0 %v2104
      %2145 = vmatpush1.msra.mxu0 %v2103
      %2146 = vmatprep.subr.mxu0 %v2106
      %2147 = vmatpush1.msra.mxu0 %v2105
      %2148 = vmatprep.subr.mxu0 %v2108
      %2149 = vmatpush1.msra.mxu0 %v2107
      %2150 = vmatprep.subr.mxu0 %v2110
      %2151 = vmatpush1.msra.mxu0 %v2109
      %2152 = vmatprep.subr.mxu0 %v2112
      %2153 = vmatpush1.msra.mxu0 %v2111
      %2154 = vmatprep.subr.mxu0 %v2114
      %2155 = vmatpush1.msra.mxu0 %v2113
      %2156 = vmatprep.subr.mxu0 %v2116
      %2157 = vmatpush1.msra.mxu0 %v2115
      %2158 = vmatprep.subr.mxu0 %v2118
      %2159 = vmatpush1.msra.mxu0 %v2117
      %2160 = vmatprep.subr.mxu0 %v2120
      %2161 = vmatpush1.msra.mxu0 %v2119
      %2162 = vmatprep.subr.mxu0 %v2122
      %2163 = vmatpush1.msra.mxu0 %v2121
      %2164 = vmatprep.subr.mxu0 %v2124
      %2165 = vmatpush1.msra.mxu0 %v2123
      %2166 = vmatprep.subr.mxu0 %v2126
      %2167 = vmatpush1.msra.mxu0 %v2125
      %2168 = vmatprep.subr.mxu0 %v2128
      %2169 = vmatpush1.msra.mxu0 %v2127
      %2170 = vmatprep.subr.mxu0 %v2130
      %2171 = vmatpush1.msra.mxu0 %v2129
      %2172 = vmatprep.subr.mxu0 %v2132
      %2173 = vmatpush1.msra.mxu0 %v2131
      %2174 = vmatprep.subr.mxu0 0.0
      %2175 = vmatpush1.msra.mxu0 0.0
      %2176 = vmatprep.subr.mxu0 0.0
      %2177 = vmatpush1.msra.mxu0 0.0
      %2178 = vmatprep.subr.mxu0 0.0
      %2179 = vmatpush1.msra.mxu0 0.0
      %2180 = vmatprep.subr.mxu0 0.0
      %2181 = vmatpush1.msra.mxu0 0.0
      %2182 = vmatprep.subr.mxu0 0.0
      %2183 = vmatpush1.msra.mxu0 0.0
      %2184 = vmatprep.subr.mxu0 0.0
      %2185 = vmatpush1.msra.mxu0 0.0
      %2186 = vmatprep.subr.mxu0 0.0
      %2187 = vmatpush1.msra.mxu0 0.0
      %2188 = vmatprep.subr.mxu0 0.0
      %2189 = vmatpush1.msra.mxu0 0.0
      %2190 = vmatprep.subr.mxu0 0.0
      %2191 = vmatpush1.msra.mxu0 0.0
      %2192 = vmatprep.subr.mxu0 0.0
      %2193 = vmatpush1.msra.mxu0 0.0
      %2194 = vmatprep.subr.mxu0 0.0
      %2195 = vmatpush1.msra.mxu0 0.0
      %2196 = vmatprep.subr.mxu0 0.0
      %2197 = vmatpush1.msra.mxu0 0.0
      %2198 = vmatprep.subr.mxu0 0.0
      %2199 = vmatpush1.msra.mxu0 0.0
      %2200 = vmatprep.mubr.f32.mxu0 %v2134
      %2201 = vmatmul.mubr.f32.gmra.mrb[0].mxu0 %v2055
      %v2202 = vpop.f32.mrb[0].mxu0
      %v2203 = vadd.f32 0.0, %v2202
      %v2204 = vpop.f32.mrb[0].mxu0
      %v2205 = vadd.f32 0.0, %v2204
      %2206 = vdwg.mxu0
      %v2207 = vmul.f32 %v2203, 0.002770083
      %v2208 = vmul.f32 %v2205, 0.002770083
      %v2210 = vsel %vm2056, %v2094, 0
      %2212 = vmatprep.subr.mxu0 %v2096
      %2213 = vmatpush1.msra.mxu0 %v2095
      %2214 = vmatprep.subr.mxu0 %v2098
      %2215 = vmatpush1.msra.mxu0 %v2097
      %2216 = vmatprep.subr.mxu0 %v2100
      %2217 = vmatpush1.msra.mxu0 %v2099
      %2218 = vmatprep.subr.mxu0 %v2102
      %2219 = vmatpush1.msra.mxu0 %v2101
      %2220 = vmatprep.subr.mxu0 %v2104
      %2221 = vmatpush1.msra.mxu0 %v2103
      %2222 = vmatprep.subr.mxu0 %v2106
      %2223 = vmatpush1.msra.mxu0 %v2105
      %2224 = vmatprep.subr.mxu0 %v2108
      %2225 = vmatpush1.msra.mxu0 %v2107
      %2226 = vmatprep.subr.mxu0 %v2110
      %2227 = vmatpush1.msra.mxu0 %v2109
      %2228 = vmatprep.subr.mxu0 %v2112
      %2229 = vmatpush1.msra.mxu0 %v2111
      %2230 = vmatprep.subr.mxu0 %v2114
      %2231 = vmatpush1.msra.mxu0 %v2113
      %2232 = vmatprep.subr.mxu0 %v2116
      %2233 = vmatpush1.msra.mxu0 %v2115
      %2234 = vmatprep.subr.mxu0 %v2118
      %2235 = vmatpush1.msra.mxu0 %v2117
      %2236 = vmatprep.subr.mxu0 %v2120
      %2237 = vmatpush1.msra.mxu0 %v2119
      %2238 = vmatprep.subr.mxu0 %v2122
      %2239 = vmatpush1.msra.mxu0 %v2121
      %2240 = vmatprep.subr.mxu0 %v2124
      %2241 = vmatpush1.msra.mxu0 %v2123
      %2242 = vmatprep.subr.mxu0 %v2126
      %2243 = vmatpush1.msra.mxu0 %v2125
      %2244 = vmatprep.subr.mxu0 %v2128
      %2245 = vmatpush1.msra.mxu0 %v2127
      %2246 = vmatprep.subr.mxu0 %v2130
      %2247 = vmatpush1.msra.mxu0 %v2129
      %2248 = vmatprep.subr.mxu0 %v2132
      %2249 = vmatpush1.msra.mxu0 %v2131
      %2250 = vmatprep.subr.mxu0 0.0
      %2251 = vmatpush1.msra.mxu0 0.0
      %2252 = vmatprep.subr.mxu0 0.0
      %2253 = vmatpush1.msra.mxu0 0.0
      %2254 = vmatprep.subr.mxu0 0.0
      %2255 = vmatpush1.msra.mxu0 0.0
      %2256 = vmatprep.subr.mxu0 0.0
      %2257 = vmatpush1.msra.mxu0 0.0
      %2258 = vmatprep.subr.mxu0 0.0
      %2259 = vmatpush1.msra.mxu0 0.0
      %2260 = vmatprep.subr.mxu0 0.0
      %2261 = vmatpush1.msra.mxu0 0.0
      %2262 = vmatprep.subr.mxu0 0.0
      %2263 = vmatpush1.msra.mxu0 0.0
      %2264 = vmatprep.subr.mxu0 0.0
      %2265 = vmatpush1.msra.mxu0 0.0
      %2266 = vmatprep.subr.mxu0 0.0
      %2267 = vmatpush1.msra.mxu0 0.0
      %2268 = vmatprep.subr.mxu0 0.0
      %2269 = vmatpush1.msra.mxu0 0.0
      %2270 = vmatprep.subr.mxu0 0.0
      %2271 = vmatpush1.msra.mxu0 0.0
      %2272 = vmatprep.subr.mxu0 0.0
      %2273 = vmatpush1.msra.mxu0 0.0
      %2274 = vmatprep.subr.mxu0 0.0
      %2275 = vmatpush1.msra.mxu0 0.0
      %2276 = vmatprep.mubr.f32.mxu0 %v2210
      %2277 = vmatmul.mubr.f32.gmra.mrb[0].mxu0 %v2083
      %v2278 = vpop.f32.mrb[0].mxu0
      %v2279 = vadd.f32 0.0, %v2278
      %v2280 = vpop.f32.mrb[0].mxu0
      %v2281 = vadd.f32 0.0, %v2280
      %2282 = vdwg.mxu0
      %v2283 = vmul.f32 %v2279, 0.002770083
      %v2284 = vmul.f32 %v2281, 0.002770083
      %v2285 = vmul.f32 %v2207, %v2207
      %v2286 = vmul.f32 %v2208, %v2208
      %v2287 = vsub.f32 %v2283, %v2285
      %v2288 = vsub.f32 %v2284, %v2286
      %v2289 = vmax.f32 %v2287, 0.0
      %v2290 = vmax.f32 %v2288, 0.0
      %v2291 = vlaneseq
      %v2292 = vshrl.u32 %v2291, 7
      %v2293 = vsub.s32 0, %v2292
      %v2294 = vrot.slane %v2207, %v2293
      %v2295 = vlaneseq
      %v2296 = vshrl.u32 %v2295, 7
      %v2297 = vsub.s32 0, %v2296
      %v2298 = vrot.slane %v2208, %v2297
      %v2299 = vsub.f32 %v2040, %v2294
      %v2300 = vsub.f32 %v2041, %v2298
      %v2301 = vsub.f32 %v2042, %v2294
      %v2302 = vsub.f32 %v2043, %v2298
      %v2303 = vsub.f32 %v2044, %v2294
      %v2304 = vsub.f32 %v2045, %v2298
      %v2305 = vadd.f32 %v2289, 1e-05
      %v2306 = vadd.f32 %v2290, 1e-05
      %v2307 = vrsqrt.pop %v2305
      %v2308 = vrsqrt.pop %v2306
      %v2309 = vlaneseq
      %v2310 = vshrl.u32 %v2309, 7
      %v2311 = vsub.s32 0, %v2310
      %v2312 = vrot.slane %v2307, %v2311
      %v2313 = vlaneseq
      %v2314 = vshrl.u32 %v2313, 7
      %v2315 = vsub.s32 0, %v2314
      %v2316 = vrot.slane %v2308, %v2315
      %v2317 = vmul.f32 %v2299, %v2312
      %v2318 = vmul.f32 %v2300, %v2316
      %v2319 = vmul.f32 %v2301, %v2312
      %v2320 = vmul.f32 %v2302, %v2316
      %v2321 = vmul.f32 %v2303, %v2312
      %v2322 = vmul.f32 %v2304, %v2316
      %vm2323 = vcmp.gt.f32.partialorder %v2317, 0.0
      %vm2324 = vcmp.gt.f32.partialorder %v2318, 0.0
      %vm2325 = vcmp.gt.f32.partialorder %v2319, 0.0
      %vm2326 = vcmp.gt.f32.partialorder %v2320, 0.0
      %vm2327 = vcmp.gt.f32.partialorder %v2321, 0.0
      %vm2328 = vcmp.gt.f32.partialorder %v2322, 0.0
      %v2329 = vmul.f32 %v2317, 0.2
      %v2330 = vmul.f32 %v2318, 0.2
      %v2331 = vmul.f32 %v2319, 0.2
      %v2332 = vmul.f32 %v2320, 0.2
      %v2333 = vmul.f32 %v2321, 0.2
      %v2334 = vmul.f32 %v2322, 0.2
      %v2335 = vsel %vm2323, %v2317, %v2329
      %v2336 = vsel %vm2324, %v2318, %v2330
      %v2337 = vsel %vm2325, %v2319, %v2331
      %v2338 = vsel %vm2326, %v2320, %v2332
      %v2339 = vsel %vm2327, %v2321, %v2333
      %v2340 = vsel %vm2328, %v2322, %v2334
      %v2341 = vpack.c.bf16 %v2337, %v2335
      %v2342 = vpack.c.bf16 %v2338, %v2336
      %v2343 = vpack.c.bf16 %v2339, %v2339
      %v2344 = vpack.c.bf16 %v2340, %v2340
      %v2345 = vld [vmem:[%s5] sm:$0xf]
      %v2346 = vld [vmem:[%s5 + $0x4] sm:$0xf]
      %v2347 = vld [vmem:[%s5 + $0x8] sm:$0xf]
      %v2348 = vld [vmem:[%s5 + $0xc] sm:$0xf]
      %v2349 = vld [vmem:[%s5 + $0x10] sm:$0xf]
      %v2350 = vld [vmem:[%s5 + $0x14] sm:$0xf]
      %v2351 = vld [vmem:[%s5 + $0x18] sm:$0xf]
      %v2352 = vld [vmem:[%s5 + $0x1c] sm:$0xf]
      %v2353 = vld [vmem:[%s5 + $0x20] sm:$0xf]
      %v2354 = vld [vmem:[%s5 + $0x24] sm:$0xf]
      %v2355 = vld [vmem:[%s5 + $0x28] sm:$0xf]
      %v2356 = vld [vmem:[%s5 + $0x2c] sm:$0xf]
      %v2357 = vld [vmem:[%s5 + $0x30] sm:$0xf]
      %v2358 = vld [vmem:[%s5 + $0x34] sm:$0xf]
      %v2359 = vld [vmem:[%s5 + $0x38] sm:$0xf]
      %v2360 = vld [vmem:[%s5 + $0x3c] sm:$0xf]
      %v2361 = vld [vmem:[%s5 + $0x40] sm:$0xf]
      %v2362 = vld [vmem:[%s5 + $0x44] sm:$0xf]
      %v2363 = vld [vmem:[%s5 + $0x48] sm:$0xf]
      %v2383 = vunpack.c.l.b16 %v2345
      %v2384 = vunpack.c.l.b16 %v2346
      %v2385 = vunpack.c.l.b16 %v2347
      %v2386 = vunpack.c.l.b16 %v2348
      %v2387 = vunpack.c.l.b16 %v2349
      %v2388 = vunpack.c.l.b16 %v2350
      %v2389 = vunpack.c.l.b16 %v2351
      %v2390 = vunpack.c.l.b16 %v2352
      %v2391 = vunpack.c.l.b16 %v2353
      %v2392 = vunpack.c.l.b16 %v2354
      %v2393 = vunpack.c.l.b16 %v2355
      %v2394 = vunpack.c.l.b16 %v2356
      %v2395 = vunpack.c.l.b16 %v2357
      %v2396 = vunpack.c.l.b16 %v2358
      %v2397 = vunpack.c.l.b16 %v2359
      %v2398 = vunpack.c.l.b16 %v2360
      %v2399 = vunpack.c.l.b16 %v2361
      %v2400 = vunpack.c.l.b16 %v2362
      %v2401 = vunpack.c.l.b16 %v2363
      %v2402 = vpack.c.b16 %v2384, %v2383
      %v2403 = vpack.c.b16 %v2386, %v2385
      %v2404 = vpack.c.b16 %v2388, %v2387
      %v2405 = vpack.c.b16 %v2390, %v2389
      %v2406 = vpack.c.b16 %v2392, %v2391
      %v2407 = vpack.c.b16 %v2394, %v2393
      %v2408 = vpack.c.b16 %v2396, %v2395
      %v2409 = vpack.c.b16 %v2398, %v2397
      %v2410 = vpack.c.b16 %v2400, %v2399
      %v2411 = vpack.c.b16 %v2401, %v2401
      %v2422 = vsel %vm2056, %v2342, 0
      %v2425 = vsel %vm2056, %v2344, 0
      %vm2427 = vcmask 1043456
      %v2429 = vsel %vm2427, %v2411, 0
      %2431 = vmatprep.subr.bf16.mxu0 0
      %2432 = vmatpush1.bf16.msra.mxu0 %v2402
      %2433 = vmatprep.subr.bf16.mxu0 0
      %2434 = vmatpush1.bf16.msra.mxu0 %v2403
      %2435 = vmatprep.subr.bf16.mxu0 0
      %2436 = vmatpush1.bf16.msra.mxu0 %v2404
      %2437 = vmatprep.subr.bf16.mxu0 0
      %2438 = vmatpush1.bf16.msra.mxu0 %v2405
      %2439 = vmatprep.subr.bf16.mxu0 0
      %2440 = vmatpush1.bf16.msra.mxu0 %v2406
      %2441 = vmatprep.subr.bf16.mxu0 0
      %2442 = vmatpush1.bf16.msra.mxu0 %v2407
      %2443 = vmatprep.subr.bf16.mxu0 0
      %2444 = vmatpush1.bf16.msra.mxu0 %v2408
      %2445 = vmatprep.subr.bf16.mxu0 0
      %2446 = vmatpush1.bf16.msra.mxu0 %v2409
      %2447 = vmatprep.subr.bf16.mxu0 0
      %2448 = vmatpush1.bf16.msra.mxu0 %v2410
      %2449 = vmatprep.subr.bf16.mxu0 0
      %2450 = vmatpush1.bf16.msra.mxu0 %v2429
      %2451 = vmatprep.subr.bf16.mxu0 0
      %2452 = vmatpush1.bf16.msra.mxu0 0
      %2453 = vmatprep.subr.bf16.mxu0 0
      %2454 = vmatpush1.bf16.msra.mxu0 0
      %2455 = vmatprep.subr.bf16.mxu0 0
      %2456 = vmatpush1.bf16.msra.mxu0 0
      %2457 = vmatprep.subr.bf16.mxu0 0
      %2458 = vmatpush1.bf16.msra.mxu0 0
      %2459 = vmatprep.subr.bf16.mxu0 0
      %2460 = vmatpush1.bf16.msra.mxu0 0
      %2461 = vmatprep.subr.bf16.mxu0 0
      %2462 = vmatpush1.bf16.msra.mxu0 0
      %2463 = vmatprep.mubr.bf16.mxu0 %v2422
      %2464 = vmatmul.mubr.bf16.gmra.mrb[0].mxu0 %v2341
      %v2465 = vpop.f32.mrb[0].mxu0
      %v2466 = vadd.f32 0.0, %v2465
      %v2467 = vpop.f32.mrb[0].mxu0
      %v2468 = vpop.f32.mrb[0].mxu0
      %v2469 = vadd.f32 0.0, %v2468
      %v2470 = vpop.f32.mrb[0].mxu0
      %2471 = vmatprep.mubr.bf16.mxu0 %v2425
      %2472 = vmatmul.mubr.bf16.gmra.mrb[0].mxu0 %v2343
      %v2473 = vpop.f32.mrb[0].mxu0
      %v2474 = vadd.f32 0.0, %v2473
      %v2475 = vpop.f32.mrb[0].mxu0
      %v2476 = vpop.f32.mrb[0].mxu0
      %v2477 = vpop.f32.mrb[0].mxu0
      %2478 = vdwg.mxu0
      %v2479 = vld [vmem:[%s6] sm:$0xff]
      %v2480 = vld [vmem:[%s6 + $0x8] sm:$0x3]
      %s2481 = scalar_lea.vmem %s5, 76
      %v2482 = vld [vmem:[%s2481] sm:$0xf]
      %v2483 = vld [vmem:[%s2481 + $0x4] sm:$0xf]
      %v2484 = vld [vmem:[%s2481 + $0x8] sm:$0xf]
      %v2485 = vld [vmem:[%s2481 + $0xc] sm:$0xf]
      %v2486 = vld [vmem:[%s2481 + $0x10] sm:$0xf]
      %v2487 = vld [vmem:[%s2481 + $0x14] sm:$0xf]
      %v2488 = vld [vmem:[%s2481 + $0x18] sm:$0xf]
      %v2489 = vld [vmem:[%s2481 + $0x1c] sm:$0xf]
      %v2490 = vld [vmem:[%s2481 + $0x20] sm:$0xf]
      %v2491 = vld [vmem:[%s2481 + $0x24] sm:$0xf]
      %v2492 = vld [vmem:[%s2481 + $0x28] sm:$0xf]
      %v2493 = vld [vmem:[%s2481 + $0x2c] sm:$0xf]
      %v2494 = vld [vmem:[%s2481 + $0x30] sm:$0xf]
      %v2495 = vld [vmem:[%s2481 + $0x34] sm:$0xf]
      %v2496 = vld [vmem:[%s2481 + $0x38] sm:$0xf]
      %v2497 = vld [vmem:[%s2481 + $0x3c] sm:$0xf]
      %v2498 = vld [vmem:[%s2481 + $0x40] sm:$0xf]
      %v2499 = vld [vmem:[%s2481 + $0x44] sm:$0xf]
      %v2500 = vld [vmem:[%s2481 + $0x48] sm:$0xf]
      %v2520 = vunpack.c.l.b16 %v2482
      %v2521 = vunpack.c.l.b16 %v2483
      %v2522 = vunpack.c.l.b16 %v2484
      %v2523 = vunpack.c.l.b16 %v2485
      %v2524 = vunpack.c.l.b16 %v2486
      %v2525 = vunpack.c.l.b16 %v2487
      %v2526 = vunpack.c.l.b16 %v2488
      %v2527 = vunpack.c.l.b16 %v2489
      %v2528 = vunpack.c.l.b16 %v2490
      %v2529 = vunpack.c.l.b16 %v2491
      %v2530 = vunpack.c.l.b16 %v2492
      %v2531 = vunpack.c.l.b16 %v2493
      %v2532 = vunpack.c.l.b16 %v2494
      %v2533 = vunpack.c.l.b16 %v2495
      %v2534 = vunpack.c.l.b16 %v2496
      %v2535 = vunpack.c.l.b16 %v2497
      %v2536 = vunpack.c.l.b16 %v2498
      %v2537 = vunpack.c.l.b16 %v2499
      %v2538 = vunpack.c.l.b16 %v2500
      %v2539 = vpack.c.b16 %v2521, %v2520
      %v2540 = vpack.c.b16 %v2523, %v2522
      %v2541 = vpack.c.b16 %v2525, %v2524
      %v2542 = vpack.c.b16 %v2527, %v2526
      %v2543 = vpack.c.b16 %v2529, %v2528
      %v2544 = vpack.c.b16 %v2531, %v2530
      %v2545 = vpack.c.b16 %v2533, %v2532
      %v2546 = vpack.c.b16 %v2535, %v2534
      %v2547 = vpack.c.b16 %v2537, %v2536
      %v2548 = vpack.c.b16 %v2538, %v2538
      %v2559 = vsel %vm2427, %v2548, 0
      %2561 = vmatprep.subr.bf16.mxu0 0
      %2562 = vmatpush1.bf16.msra.mxu0 %v2539
      %2563 = vmatprep.subr.bf16.mxu0 0
      %2564 = vmatpush1.bf16.msra.mxu0 %v2540
      %2565 = vmatprep.subr.bf16.mxu0 0
      %2566 = vmatpush1.bf16.msra.mxu0 %v2541
      %2567 = vmatprep.subr.bf16.mxu0 0
      %2568 = vmatpush1.bf16.msra.mxu0 %v2542
      %2569 = vmatprep.subr.bf16.mxu0 0
      %2570 = vmatpush1.bf16.msra.mxu0 %v2543
      %2571 = vmatprep.subr.bf16.mxu0 0
      %2572 = vmatpush1.bf16.msra.mxu0 %v2544
      %2573 = vmatprep.subr.bf16.mxu0 0
      %2574 = vmatpush1.bf16.msra.mxu0 %v2545
      %2575 = vmatprep.subr.bf16.mxu0 0
      %2576 = vmatpush1.bf16.msra.mxu0 %v2546
      %2577 = vmatprep.subr.bf16.mxu0 0
      %2578 = vmatpush1.bf16.msra.mxu0 %v2547
      %2579 = vmatprep.subr.bf16.mxu0 0
      %2580 = vmatpush1.bf16.msra.mxu0 %v2559
      %2581 = vmatprep.subr.bf16.mxu0 0
      %2582 = vmatpush1.bf16.msra.mxu0 0
      %2583 = vmatprep.subr.bf16.mxu0 0
      %2584 = vmatpush1.bf16.msra.mxu0 0
      %2585 = vmatprep.subr.bf16.mxu0 0
      %2586 = vmatpush1.bf16.msra.mxu0 0
      %2587 = vmatprep.subr.bf16.mxu0 0
      %2588 = vmatpush1.bf16.msra.mxu0 0
      %2589 = vmatprep.subr.bf16.mxu0 0
      %2590 = vmatpush1.bf16.msra.mxu0 0
      %2591 = vmatprep.subr.bf16.mxu0 0
      %2592 = vmatpush1.bf16.msra.mxu0 0
      %2593 = vmatprep.mubr.bf16.mxu0 %v2422
      %2594 = vmatmul.mubr.bf16.gmra.mrb[0].mxu0 %v2341
      %v2595 = vpop.f32.mrb[0].mxu0
      %v2596 = vadd.f32 0.0, %v2595
      %v2597 = vpop.f32.mrb[0].mxu0
      %v2598 = vpop.f32.mrb[0].mxu0
      %v2599 = vadd.f32 0.0, %v2598
      %v2600 = vpop.f32.mrb[0].mxu0
      %2601 = vmatprep.mubr.bf16.mxu0 %v2425
      %2602 = vmatmul.mubr.bf16.gmra.mrb[0].mxu0 %v2343
      %v2603 = vpop.f32.mrb[0].mxu0
      %v2604 = vadd.f32 0.0, %v2603
      %v2605 = vpop.f32.mrb[0].mxu0
      %v2606 = vpop.f32.mrb[0].mxu0
      %v2607 = vpop.f32.mrb[0].mxu0
      %2608 = vdwg.mxu0
      %s2609 = scalar_lea.vmem %s6, 16
      %v2610 = vld [vmem:[%s2609] sm:$0xff]
      %v2611 = vld [vmem:[%s2609 + $0x8] sm:$0x3]
      %vm2612 = vcmask 154624
      %v2614 = vsel %vm2612, %v2610, 0
      %v2617 = vsel %vm2612, %v2611, 0
      %v2620 = vsel %vm2047, %v2604, 0
      %2622 = vmatprep.subr.mxu0 0.0
      %2623 = vmatpush1.msra.mxu0 %v2596
      %2624 = vmatprep.subr.mxu0 0.0
      %2625 = vmatpush1.msra.mxu0 %v2599
      %2626 = vmatprep.subr.mxu0 0.0
      %2627 = vmatpush1.msra.mxu0 %v2620
      %2628 = vmatprep.subr.mxu0 0.0
      %2629 = vmatpush1.msra.mxu0 0.0
      %2630 = vmatprep.subr.mxu0 0.0
      %2631 = vmatpush1.msra.mxu0 0.0
      %2632 = vmatprep.subr.mxu0 0.0
      %2633 = vmatpush1.msra.mxu0 0.0
      %2634 = vmatprep.subr.mxu0 0.0
      %2635 = vmatpush1.msra.mxu0 0.0
      %2636 = vmatprep.subr.mxu0 0.0
      %2637 = vmatpush1.msra.mxu0 0.0
      %2638 = vmatprep.subr.mxu0 0.0
      %2639 = vmatpush1.msra.mxu0 0.0
      %2640 = vmatprep.subr.mxu0 0.0
      %2641 = vmatpush1.msra.mxu0 0.0
      %2642 = vmatprep.subr.mxu0 0.0
      %2643 = vmatpush1.msra.mxu0 0.0
      %2644 = vmatprep.subr.mxu0 0.0
      %2645 = vmatpush1.msra.mxu0 0.0
      %2646 = vmatprep.subr.mxu0 0.0
      %2647 = vmatpush1.msra.mxu0 0.0
      %2648 = vmatprep.subr.mxu0 0.0
      %2649 = vmatpush1.msra.mxu0 0.0
      %2650 = vmatprep.subr.mxu0 0.0
      %2651 = vmatpush1.msra.mxu0 0.0
      %2652 = vmatprep.subr.mxu0 0.0
      %2653 = vmatpush1.msra.mxu0 0.0
      %2654 = vmatprep.subr.mxu0 0.0
      %2655 = vmatpush1.msra.mxu0 0.0
      %2656 = vmatprep.subr.mxu0 0.0
      %2657 = vmatpush1.msra.mxu0 0.0
      %2658 = vmatprep.subr.mxu0 0.0
      %2659 = vmatpush1.msra.mxu0 0.0
      %2660 = vmatprep.subr.mxu0 0.0
      %2661 = vmatpush1.msra.mxu0 0.0
      %2662 = vmatprep.subr.mxu0 0.0
      %2663 = vmatpush1.msra.mxu0 0.0
      %2664 = vmatprep.subr.mxu0 0.0
      %2665 = vmatpush1.msra.mxu0 0.0
      %2666 = vmatprep.subr.mxu0 0.0
      %2667 = vmatpush1.msra.mxu0 0.0
      %2668 = vmatprep.subr.mxu0 0.0
      %2669 = vmatpush1.msra.mxu0 0.0
      %2670 = vmatprep.subr.mxu0 0.0
      %2671 = vmatpush1.msra.mxu0 0.0
      %2672 = vmatprep.subr.mxu0 0.0
      %2673 = vmatpush1.msra.mxu0 0.0
      %2674 = vmatprep.subr.mxu0 0.0
      %2675 = vmatpush1.msra.mxu0 0.0
      %2676 = vmatprep.subr.mxu0 0.0
      %2677 = vmatpush1.msra.mxu0 0.0
      %2678 = vmatprep.subr.mxu0 0.0
      %2679 = vmatpush1.msra.mxu0 0.0
      %2680 = vmatprep.subr.mxu0 0.0
      %2681 = vmatpush1.msra.mxu0 0.0
      %2682 = vmatprep.subr.mxu0 0.0
      %2683 = vmatpush1.msra.mxu0 0.0
      %2684 = vmatprep.subr.mxu0 0.0
      %2685 = vmatpush1.msra.mxu0 0.0
      %2686 = vmatprep.mubr.f32.mxu0 0.0
      %2687 = vmatmul.mubr.f32.gmra.mrb[0].mxu0 %v2614
      %v2688 = vpop.f32.mrb[0].mxu0
      %v2689 = vadd.f32 0.0, %v2688
      %v2690 = vpop.f32.mrb[0].mxu0
      %2691 = vmatprep.mubr.f32.mxu0 0.0
      %2692 = vmatmul.mubr.f32.gmra.mrb[0].mxu0 %v2617
      %v2693 = vpop.f32.mrb[0].mxu0
      %v2694 = vadd.f32 0.0, %v2693
      %v2695 = vpop.f32.mrb[0].mxu0
      %2696 = vdwg.mxu0
      %v2698 = vsel %vm2612, %v2479, 0
      %v2701 = vsel %vm2612, %v2480, 0
      %v2704 = vsel %vm2047, %v2474, 0
      %2706 = vmatprep.subr.mxu0 0.0
      %2707 = vmatpush1.msra.mxu0 %v2466
      %2708 = vmatprep.subr.mxu0 0.0
      %2709 = vmatpush1.msra.mxu0 %v2469
      %2710 = vmatprep.subr.mxu0 0.0
      %2711 = vmatpush1.msra.mxu0 %v2704
      %2712 = vmatprep.subr.mxu0 0.0
      %2713 = vmatpush1.msra.mxu0 0.0
      %2714 = vmatprep.subr.mxu0 0.0
      %2715 = vmatpush1.msra.mxu0 0.0
      %2716 = vmatprep.subr.mxu0 0.0
      %2717 = vmatpush1.msra.mxu0 0.0
      %2718 = vmatprep.subr.mxu0 0.0
      %2719 = vmatpush1.msra.mxu0 0.0
      %2720 = vmatprep.subr.mxu0 0.0
      %2721 = vmatpush1.msra.mxu0 0.0
      %2722 = vmatprep.subr.mxu0 0.0
      %2723 = vmatpush1.msra.mxu0 0.0
      %2724 = vmatprep.subr.mxu0 0.0
      %2725 = vmatpush1.msra.mxu0 0.0
      %2726 = vmatprep.subr.mxu0 0.0
      %2727 = vmatpush1.msra.mxu0 0.0
      %2728 = vmatprep.subr.mxu0 0.0
      %2729 = vmatpush1.msra.mxu0 0.0
      %2730 = vmatprep.subr.mxu0 0.0
      %2731 = vmatpush1.msra.mxu0 0.0
      %2732 = vmatprep.subr.mxu0 0.0
      %2733 = vmatpush1.msra.mxu0 0.0
      %2734 = vmatprep.subr.mxu0 0.0
      %2735 = vmatpush1.msra.mxu0 0.0
      %2736 = vmatprep.subr.mxu0 0.0
      %2737 = vmatpush1.msra.mxu0 0.0
      %2738 = vmatprep.subr.mxu0 0.0
      %2739 = vmatpush1.msra.mxu0 0.0
      %2740 = vmatprep.subr.mxu0 0.0
      %2741 = vmatpush1.msra.mxu0 0.0
      %2742 = vmatprep.subr.mxu0 0.0
      %2743 = vmatpush1.msra.mxu0 0.0
      %2744 = vmatprep.subr.mxu0 0.0
      %2745 = vmatpush1.msra.mxu0 0.0
      %2746 = vmatprep.subr.mxu0 0.0
      %2747 = vmatpush1.msra.mxu0 0.0
      %2748 = vmatprep.subr.mxu0 0.0
      %2749 = vmatpush1.msra.mxu0 0.0
      %2750 = vmatprep.subr.mxu0 0.0
      %2751 = vmatpush1.msra.mxu0 0.0
      %2752 = vmatprep.subr.mxu0 0.0
      %2753 = vmatpush1.msra.mxu0 0.0
      %2754 = vmatprep.subr.mxu0 0.0
      %2755 = vmatpush1.msra.mxu0 0.0
      %2756 = vmatprep.subr.mxu0 0.0
      %2757 = vmatpush1.msra.mxu0 0.0
      %2758 = vmatprep.subr.mxu0 0.0
      %2759 = vmatpush1.msra.mxu0 0.0
      %2760 = vmatprep.subr.mxu0 0.0
      %2761 = vmatpush1.msra.mxu0 0.0
      %2762 = vmatprep.subr.mxu0 0.0
      %2763 = vmatpush1.msra.mxu0 0.0
      %2764 = vmatprep.subr.mxu0 0.0
      %2765 = vmatpush1.msra.mxu0 0.0
      %2766 = vmatprep.subr.mxu0 0.0
      %2767 = vmatpush1.msra.mxu0 0.0
      %2768 = vmatprep.subr.mxu0 0.0
      %2769 = vmatpush1.msra.mxu0 0.0
      %2770 = vmatprep.mubr.f32.mxu0 0.0
      %2771 = vmatmul.mubr.f32.gmra.mrb[0].mxu0 %v2698
      %v2772 = vpop.f32.mrb[0].mxu0
      %v2773 = vadd.f32 %v2689, %v2772
      %v2774 = vpop.f32.mrb[0].mxu0
      %2775 = vmatprep.mubr.f32.mxu0 0.0
      %2776 = vmatmul.mubr.f32.gmra.mrb[0].mxu0 %v2701
      %v2777 = vpop.f32.mrb[0].mxu0
      %v2778 = vadd.f32 %v2694, %v2777
      %v2779 = vpop.f32.mrb[0].mxu0
      %2780 = vdwg.mxu0
      %s2781 = scalar_lea.vmem %s5, 152
      %v2782 = vld [vmem:[%s2781] sm:$0xf]
      %v2783 = vld [vmem:[%s2781 + $0x4] sm:$0xf]
      %v2784 = vld [vmem:[%s2781 + $0x8] sm:$0xf]
      %v2785 = vld [vmem:[%s2781 + $0xc] sm:$0xf]
      %v2786 = vld [vmem:[%s2781 + $0x10] sm:$0xf]
      %v2787 = vld [vmem:[%s2781 + $0x14] sm:$0xf]
      %v2788 = vld [vmem:[%s2781 + $0x18] sm:$0xf]
      %v2789 = vld [vmem:[%s2781 + $0x1c] sm:$0xf]
      %v2790 = vld [vmem:[%s2781 + $0x20] sm:$0xf]
      %v2791 = vld [vmem:[%s2781 + $0x24] sm:$0xf]
      %v2792 = vld [vmem:[%s2781 + $0x28] sm:$0xf]
      %v2793 = vld [vmem:[%s2781 + $0x2c] sm:$0xf]
      %v2794 = vld [vmem:[%s2781 + $0x30] sm:$0xf]
      %v2795 = vld [vmem:[%s2781 + $0x34] sm:$0xf]
      %v2796 = vld [vmem:[%s2781 + $0x38] sm:$0xf]
      %v2797 = vld [vmem:[%s2781 + $0x3c] sm:$0xf]
      %v2798 = vld [vmem:[%s2781 + $0x40] sm:$0xf]
      %v2799 = vld [vmem:[%s2781 + $0x44] sm:$0xf]
      %v2800 = vld [vmem:[%s2781 + $0x48] sm:$0xf]
      %v2820 = vunpack.c.l.b16 %v2782
      %v2821 = vunpack.c.l.b16 %v2783
      %v2822 = vunpack.c.l.b16 %v2784
      %v2823 = vunpack.c.l.b16 %v2785
      %v2824 = vunpack.c.l.b16 %v2786
      %v2825 = vunpack.c.l.b16 %v2787
      %v2826 = vunpack.c.l.b16 %v2788
      %v2827 = vunpack.c.l.b16 %v2789
      %v2828 = vunpack.c.l.b16 %v2790
      %v2829 = vunpack.c.l.b16 %v2791
      %v2830 = vunpack.c.l.b16 %v2792
      %v2831 = vunpack.c.l.b16 %v2793
      %v2832 = vunpack.c.l.b16 %v2794
      %v2833 = vunpack.c.l.b16 %v2795
      %v2834 = vunpack.c.l.b16 %v2796
      %v2835 = vunpack.c.l.b16 %v2797
      %v2836 = vunpack.c.l.b16 %v2798
      %v2837 = vunpack.c.l.b16 %v2799
      %v2838 = vunpack.c.l.b16 %v2800
      %v2839 = vpack.c.b16 %v2821, %v2820
      %v2840 = vpack.c.b16 %v2823, %v2822
      %v2841 = vpack.c.b16 %v2825, %v2824
      %v2842 = vpack.c.b16 %v2827, %v2826
      %v2843 = vpack.c.b16 %v2829, %v2828
      %v2844 = vpack.c.b16 %v2831, %v2830
      %v2845 = vpack.c.b16 %v2833, %v2832
      %v2846 = vpack.c.b16 %v2835, %v2834
      %v2847 = vpack.c.b16 %v2837, %v2836
      %v2848 = vpack.c.b16 %v2838, %v2838
      %v2859 = vsel %vm2427, %v2848, 0
      %2861 = vmatprep.subr.bf16.mxu0 0
      %2862 = vmatpush1.bf16.msra.mxu0 %v2839
      %2863 = vmatprep.subr.bf16.mxu0 0
      %2864 = vmatpush1.bf16.msra.mxu0 %v2840
      %2865 = vmatprep.subr.bf16.mxu0 0
      %2866 = vmatpush1.bf16.msra.mxu0 %v2841
      %2867 = vmatprep.subr.bf16.mxu0 0
      %2868 = vmatpush1.bf16.msra.mxu0 %v2842
      %2869 = vmatprep.subr.bf16.mxu0 0
      %2870 = vmatpush1.bf16.msra.mxu0 %v2843
      %2871 = vmatprep.subr.bf16.mxu0 0
      %2872 = vmatpush1.bf16.msra.mxu0 %v2844
      %2873 = vmatprep.subr.bf16.mxu0 0
      %2874 = vmatpush1.bf16.msra.mxu0 %v2845
      %2875 = vmatprep.subr.bf16.mxu0 0
      %2876 = vmatpush1.bf16.msra.mxu0 %v2846
      %2877 = vmatprep.subr.bf16.mxu0 0
      %2878 = vmatpush1.bf16.msra.mxu0 %v2847
      %2879 = vmatprep.subr.bf16.mxu0 0
      %2880 = vmatpush1.bf16.msra.mxu0 %v2859
      %2881 = vmatprep.subr.bf16.mxu0 0
      %2882 = vmatpush1.bf16.msra.mxu0 0
      %2883 = vmatprep.subr.bf16.mxu0 0
      %2884 = vmatpush1.bf16.msra.mxu0 0
      %2885 = vmatprep.subr.bf16.mxu0 0
      %2886 = vmatpush1.bf16.msra.mxu0 0
      %2887 = vmatprep.subr.bf16.mxu0 0
      %2888 = vmatpush1.bf16.msra.mxu0 0
      %2889 = vmatprep.subr.bf16.mxu0 0
      %2890 = vmatpush1.bf16.msra.mxu0 0
      %2891 = vmatprep.subr.bf16.mxu0 0
      %2892 = vmatpush1.bf16.msra.mxu0 0
      %2893 = vmatprep.mubr.bf16.mxu0 %v2422
      %2894 = vmatmul.mubr.bf16.gmra.mrb[0].mxu0 %v2341
      %v2895 = vpop.f32.mrb[0].mxu0
      %v2896 = vadd.f32 0.0, %v2895
      %v2897 = vpop.f32.mrb[0].mxu0
      %v2898 = vpop.f32.mrb[0].mxu0
      %v2899 = vadd.f32 0.0, %v2898
      %v2900 = vpop.f32.mrb[0].mxu0
      %2901 = vmatprep.mubr.bf16.mxu0 %v2425
      %2902 = vmatmul.mubr.bf16.gmra.mrb[0].mxu0 %v2343
      %v2903 = vpop.f32.mrb[0].mxu0
      %v2904 = vadd.f32 0.0, %v2903
      %v2905 = vpop.f32.mrb[0].mxu0
      %v2906 = vpop.f32.mrb[0].mxu0
      %v2907 = vpop.f32.mrb[0].mxu0
      %2908 = vdwg.mxu0
      %s2909 = scalar_lea.vmem %s6, 32
      %v2910 = vld [vmem:[%s2909] sm:$0xff]
      %v2911 = vld [vmem:[%s2909 + $0x8] sm:$0x3]
      %v2913 = vsel %vm2612, %v2910, 0
      %v2916 = vsel %vm2612, %v2911, 0
      %v2919 = vsel %vm2047, %v2904, 0
      %2921 = vmatprep.subr.mxu0 0.0
      %2922 = vmatpush1.msra.mxu0 %v2896
      %2923 = vmatprep.subr.mxu0 0.0
      %2924 = vmatpush1.msra.mxu0 %v2899
      %2925 = vmatprep.subr.mxu0 0.0
      %2926 = vmatpush1.msra.mxu0 %v2919
      %2927 = vmatprep.subr.mxu0 0.0
      %2928 = vmatpush1.msra.mxu0 0.0
      %2929 = vmatprep.subr.mxu0 0.0
      %2930 = vmatpush1.msra.mxu0 0.0
      %2931 = vmatprep.subr.mxu0 0.0
      %2932 = vmatpush1.msra.mxu0 0.0
      %2933 = vmatprep.subr.mxu0 0.0
      %2934 = vmatpush1.msra.mxu0 0.0
      %2935 = vmatprep.subr.mxu0 0.0
      %2936 = vmatpush1.msra.mxu0 0.0
      %2937 = vmatprep.subr.mxu0 0.0
      %2938 = vmatpush1.msra.mxu0 0.0
      %2939 = vmatprep.subr.mxu0 0.0
      %2940 = vmatpush1.msra.mxu0 0.0
      %2941 = vmatprep.subr.mxu0 0.0
      %2942 = vmatpush1.msra.mxu0 0.0
      %2943 = vmatprep.subr.mxu0 0.0
      %2944 = vmatpush1.msra.mxu0 0.0
      %2945 = vmatprep.subr.mxu0 0.0
      %2946 = vmatpush1.msra.mxu0 0.0
      %2947 = vmatprep.subr.mxu0 0.0
      %2948 = vmatpush1.msra.mxu0 0.0
      %2949 = vmatprep.subr.mxu0 0.0
      %2950 = vmatpush1.msra.mxu0 0.0
      %2951 = vmatprep.subr.mxu0 0.0
      %2952 = vmatpush1.msra.mxu0 0.0
      %2953 = vmatprep.subr.mxu0 0.0
      %2954 = vmatpush1.msra.mxu0 0.0
      %2955 = vmatprep.subr.mxu0 0.0
      %2956 = vmatpush1.msra.mxu0 0.0
      %2957 = vmatprep.subr.mxu0 0.0
      %2958 = vmatpush1.msra.mxu0 0.0
      %2959 = vmatprep.subr.mxu0 0.0
      %2960 = vmatpush1.msra.mxu0 0.0
      %2961 = vmatprep.subr.mxu0 0.0
      %2962 = vmatpush1.msra.mxu0 0.0
      %2963 = vmatprep.subr.mxu0 0.0
      %2964 = vmatpush1.msra.mxu0 0.0
      %2965 = vmatprep.subr.mxu0 0.0
      %2966 = vmatpush1.msra.mxu0 0.0
      %2967 = vmatprep.subr.mxu0 0.0
      %2968 = vmatpush1.msra.mxu0 0.0
      %2969 = vmatprep.subr.mxu0 0.0
      %2970 = vmatpush1.msra.mxu0 0.0
      %2971 = vmatprep.subr.mxu0 0.0
      %2972 = vmatpush1.msra.mxu0 0.0
      %2973 = vmatprep.subr.mxu0 0.0
      %2974 = vmatpush1.msra.mxu0 0.0
      %2975 = vmatprep.subr.mxu0 0.0
      %2976 = vmatpush1.msra.mxu0 0.0
      %2977 = vmatprep.subr.mxu0 0.0
      %2978 = vmatpush1.msra.mxu0 0.0
      %2979 = vmatprep.subr.mxu0 0.0
      %2980 = vmatpush1.msra.mxu0 0.0
      %2981 = vmatprep.subr.mxu0 0.0
      %2982 = vmatpush1.msra.mxu0 0.0
      %2983 = vmatprep.subr.mxu0 0.0
      %2984 = vmatpush1.msra.mxu0 0.0
      %2985 = vmatprep.mubr.f32.mxu0 0.0
      %2986 = vmatmul.mubr.f32.gmra.mrb[0].mxu0 %v2913
      %v2987 = vpop.f32.mrb[0].mxu0
      %v2988 = vadd.f32 0.0, %v2987
      %v2989 = vpop.f32.mrb[0].mxu0
      %2990 = vmatprep.mubr.f32.mxu0 0.0
      %2991 = vmatmul.mubr.f32.gmra.mrb[0].mxu0 %v2916
      %v2992 = vpop.f32.mrb[0].mxu0
      %v2993 = vadd.f32 0.0, %v2992
      %v2994 = vpop.f32.mrb[0].mxu0
      %2995 = vdwg.mxu0
      %v2996 = vadd.f32 %v2773, %v2988
      %v2997 = vadd.f32 %v2778, %v2993
      %v2998 = vld [vmem:[%s7] sm:$0x1]
      %v3000 = vlaneseq
      %v3001 = vshrl.u32 %v3000, 7
      %v3002 = vsub.s32 0, %v3001
      %v3003 = vrot.slane %v2998, %v3002
      %v3005 = vadd.f32 %v2996, %v3003
      %v3006 = vadd.f32 %v2997, %v3003
      %vm3007 = vcmask 654336
      %v3008 = vsel %vm3007, %v3005, 0.0
      %vm3009 = vcmask 648192
      %v3010 = vsel %vm3009, %v3006, 0.0
      %v3011 = vadd.f32 %v3008, %v3010
      %v3012 = vrot.slane %v3011, 4
      %v3013 = vadd.f32 %v3011, %v3012
      %v3014 = vrot.slane %v3013, 2
      %v3015 = vadd.f32 %v3013, %v3014
      %v3016 = vrot.slane %v3015, 1
      %v3017 = vadd.f32 %v3015, %v3016
      %v3018 = vmul.f32 %v3005, %v3005
      %v3019 = vmul.f32 %v3006, %v3006
      %v3020 = vsel %vm3007, %v3018, 0.0
      %v3021 = vsel %vm3009, %v3019, 0.0
      %v3022 = vadd.f32 %v3020, %v3021
      %v3023 = vrot.slane %v3022, 4
      %v3024 = vadd.f32 %v3022, %v3023
      %v3025 = vrot.slane %v3024, 2
      %v3026 = vadd.f32 %v3024, %v3025
      %v3027 = vrot.slane %v3026, 1
      %v3028 = vadd.f32 %v3026, %v3027
      %v3029 = vld [vmem:[%s8] sm:$0xff]
      %v3030 = vld [vmem:[%s8 + $0x8] sm:$0xff]
      %v3031 = vld [vmem:[%s8 + $0x10] sm:$0xff]
      %v3032 = vld [vmem:[%s8 + $0x18] sm:$0xff]
      %v3033 = vld [vmem:[%s8 + $0x20] sm:$0xff]
      %v3034 = vld [vmem:[%s8 + $0x28] sm:$0xff]
      %v3035 = vld [vmem:[%s8 + $0x30] sm:$0xff]
      %v3036 = vld [vmem:[%s8 + $0x38] sm:$0xff]
      %v3037 = vld [vmem:[%s8 + $0x40] sm:$0xff]
      %v3038 = vld [vmem:[%s8 + $0x48] sm:$0xff]
      %v3040 = vsel %vm3007, %v3017, 0
      %3042 = vmatprep.subr.mxu0 0.0
      %3043 = vmatpush1.msra.mxu0 %v3029
      %3044 = vmatprep.subr.mxu0 0.0
      %3045 = vmatpush1.msra.mxu0 %v3030
      %3046 = vmatprep.subr.mxu0 0.0
      %3047 = vmatpush1.msra.mxu0 %v3031
      %3048 = vmatprep.subr.mxu0 0.0
      %3049 = vmatpush1.msra.mxu0 %v3032
      %3050 = vmatprep.subr.mxu0 0.0
      %3051 = vmatpush1.msra.mxu0 %v3033
      %3052 = vmatprep.subr.mxu0 0.0
      %3053 = vmatpush1.msra.mxu0 %v3034
      %3054 = vmatprep.subr.mxu0 0.0
      %3055 = vmatpush1.msra.mxu0 %v3035
      %3056 = vmatprep.subr.mxu0 0.0
      %3057 = vmatpush1.msra.mxu0 %v3036
      %3058 = vmatprep.subr.mxu0 0.0
      %3059 = vmatpush1.msra.mxu0 %v3037
      %3060 = vmatprep.subr.mxu0 0.0
      %3061 = vmatpush1.msra.mxu0 %v3038
      %3062 = vmatprep.subr.mxu0 0.0
      %3063 = vmatpush1.msra.mxu0 0.0
      %3064 = vmatprep.subr.mxu0 0.0
      %3065 = vmatpush1.msra.mxu0 0.0
      %3066 = vmatprep.subr.mxu0 0.0
      %3067 = vmatpush1.msra.mxu0 0.0
      %3068 = vmatprep.subr.mxu0 0.0
      %3069 = vmatpush1.msra.mxu0 0.0
      %3070 = vmatprep.subr.mxu0 0.0
      %3071 = vmatpush1.msra.mxu0 0.0
      %3072 = vmatprep.subr.mxu0 0.0
      %3073 = vmatpush1.msra.mxu0 0.0
      %3074 = vmatprep.subr.mxu0 0.0
      %3075 = vmatpush1.msra.mxu0 0.0
      %3076 = vmatprep.subr.mxu0 0.0
      %3077 = vmatpush1.msra.mxu0 0.0
      %3078 = vmatprep.subr.mxu0 0.0
      %3079 = vmatpush1.msra.mxu0 0.0
      %3080 = vmatprep.subr.mxu0 0.0
      %3081 = vmatpush1.msra.mxu0 0.0
      %3082 = vmatprep.subr.mxu0 0.0
      %3083 = vmatpush1.msra.mxu0 0.0
      %3084 = vmatprep.subr.mxu0 0.0
      %3085 = vmatpush1.msra.mxu0 0.0
      %3086 = vmatprep.subr.mxu0 0.0
      %3087 = vmatpush1.msra.mxu0 0.0
      %3088 = vmatprep.subr.mxu0 0.0
      %3089 = vmatpush1.msra.mxu0 0.0
      %3090 = vmatprep.subr.mxu0 0.0
      %3091 = vmatpush1.msra.mxu0 0.0
      %3092 = vmatprep.subr.mxu0 0.0
      %3093 = vmatpush1.msra.mxu0 0.0
      %3094 = vmatprep.subr.mxu0 0.0
      %3095 = vmatpush1.msra.mxu0 0.0
      %3096 = vmatprep.subr.mxu0 0.0
      %3097 = vmatpush1.msra.mxu0 0.0
      %3098 = vmatprep.subr.mxu0 0.0
      %3099 = vmatpush1.msra.mxu0 0.0
      %3100 = vmatprep.subr.mxu0 0.0
      %3101 = vmatpush1.msra.mxu0 0.0
      %3102 = vmatprep.subr.mxu0 0.0
      %3103 = vmatpush1.msra.mxu0 0.0
      %3104 = vmatprep.subr.mxu0 0.0
      %3105 = vmatpush1.msra.mxu0 0.0
      %3106 = vmatprep.mubr.f32.mxu0 0.0
      %3107 = vmatmul.mubr.f32.gmra.mrb[0].mxu0 %v3040
      %v3108 = vpop.f32.mrb[0].mxu0
      %v3109 = vadd.f32 0.0, %v3108
      %v3110 = vpop.f32.mrb[0].mxu0
      %3111 = vdwg.mxu0
      %v3112 = vmul.f32 %v3109, 0.01
      %v3114 = vsel %vm3007, %v3028, 0
      %3116 = vmatprep.subr.mxu0 0.0
      %3117 = vmatpush1.msra.mxu0 %v3029
      %3118 = vmatprep.subr.mxu0 0.0
      %3119 = vmatpush1.msra.mxu0 %v3030
      %3120 = vmatprep.subr.mxu0 0.0
      %3121 = vmatpush1.msra.mxu0 %v3031
      %3122 = vmatprep.subr.mxu0 0.0
      %3123 = vmatpush1.msra.mxu0 %v3032
      %3124 = vmatprep.subr.mxu0 0.0
      %3125 = vmatpush1.msra.mxu0 %v3033
      %3126 = vmatprep.subr.mxu0 0.0
      %3127 = vmatpush1.msra.mxu0 %v3034
      %3128 = vmatprep.subr.mxu0 0.0
      %3129 = vmatpush1.msra.mxu0 %v3035
      %3130 = vmatprep.subr.mxu0 0.0
      %3131 = vmatpush1.msra.mxu0 %v3036
      %3132 = vmatprep.subr.mxu0 0.0
      %3133 = vmatpush1.msra.mxu0 %v3037
      %3134 = vmatprep.subr.mxu0 0.0
      %3135 = vmatpush1.msra.mxu0 %v3038
      %3136 = vmatprep.subr.mxu0 0.0
      %3137 = vmatpush1.msra.mxu0 0.0
      %3138 = vmatprep.subr.mxu0 0.0
      %3139 = vmatpush1.msra.mxu0 0.0
      %3140 = vmatprep.subr.mxu0 0.0
      %3141 = vmatpush1.msra.mxu0 0.0
      %3142 = vmatprep.subr.mxu0 0.0
      %3143 = vmatpush1.msra.mxu0 0.0
      %3144 = vmatprep.subr.mxu0 0.0
      %3145 = vmatpush1.msra.mxu0 0.0
      %3146 = vmatprep.subr.mxu0 0.0
      %3147 = vmatpush1.msra.mxu0 0.0
      %3148 = vmatprep.subr.mxu0 0.0
      %3149 = vmatpush1.msra.mxu0 0.0
      %3150 = vmatprep.subr.mxu0 0.0
      %3151 = vmatpush1.msra.mxu0 0.0
      %3152 = vmatprep.subr.mxu0 0.0
      %3153 = vmatpush1.msra.mxu0 0.0
      %3154 = vmatprep.subr.mxu0 0.0
      %3155 = vmatpush1.msra.mxu0 0.0
      %3156 = vmatprep.subr.mxu0 0.0
      %3157 = vmatpush1.msra.mxu0 0.0
      %3158 = vmatprep.subr.mxu0 0.0
      %3159 = vmatpush1.msra.mxu0 0.0
      %3160 = vmatprep.subr.mxu0 0.0
      %3161 = vmatpush1.msra.mxu0 0.0
      %3162 = vmatprep.subr.mxu0 0.0
      %3163 = vmatpush1.msra.mxu0 0.0
      %3164 = vmatprep.subr.mxu0 0.0
      %3165 = vmatpush1.msra.mxu0 0.0
      %3166 = vmatprep.subr.mxu0 0.0
      %3167 = vmatpush1.msra.mxu0 0.0
      %3168 = vmatprep.subr.mxu0 0.0
      %3169 = vmatpush1.msra.mxu0 0.0
      %3170 = vmatprep.subr.mxu0 0.0
      %3171 = vmatpush1.msra.mxu0 0.0
      %3172 = vmatprep.subr.mxu0 0.0
      %3173 = vmatpush1.msra.mxu0 0.0
      %3174 = vmatprep.subr.mxu0 0.0
      %3175 = vmatpush1.msra.mxu0 0.0
      %3176 = vmatprep.subr.mxu0 0.0
      %3177 = vmatpush1.msra.mxu0 0.0
      %3178 = vmatprep.subr.mxu0 0.0
      %3179 = vmatpush1.msra.mxu0 0.0
      %3180 = vmatprep.mubr.f32.mxu0 0.0
      %3181 = vmatmul.mubr.f32.gmra.mrb[0].mxu0 %v3114
      %v3182 = vpop.f32.mrb[0].mxu0
      %v3183 = vadd.f32 0.0, %v3182
      %v3184 = vpop.f32.mrb[0].mxu0
      %3185 = vdwg.mxu0
      %v3186 = vmul.f32 %v3183, 0.01
      %v3187 = vmul.f32 %v3112, %v3112
      %v3188 = vsub.f32 %v3186, %v3187
      %v3189 = vmax.f32 %v3188, 0.0
      %v3190 = vlaneseq
      %v3191 = vshrl.u32 %v3190, 7
      %v3192 = vsub.s32 0, %v3191
      %v3193 = vrot.slane %v3112, %v3192
      %v3194 = vsub.f32 %v3005, %v3193
      %v3195 = vsub.f32 %v3006, %v3193
      %v3196 = vadd.f32 %v3189, 1e-05
      %v3197 = vrsqrt.pop %v3196
      %v3198 = vlaneseq
      %v3199 = vshrl.u32 %v3198, 7
      %v3200 = vsub.s32 0, %v3199
      %v3201 = vrot.slane %v3197, %v3200
      %v3202 = vmul.f32 %v3194, %v3201
      %v3203 = vmul.f32 %v3195, %v3201
      %vm3204 = vcmp.gt.f32.partialorder %v3202, 0.0
      %vm3205 = vcmp.gt.f32.partialorder %v3203, 0.0
      %v3206 = vmul.f32 %v3202, 0.2
      %v3207 = vmul.f32 %v3203, 0.2
      %v3208 = vsel %vm3204, %v3202, %v3206
      %v3209 = vsel %vm3205, %v3203, %v3207
      %v3210 = vpack.c.bf16 %v3209, %v3208
      %v3211 = vld [vmem:[%s9] sm:$0xf]
      %v3212 = vld [vmem:[%s9 + $0x4] sm:$0xf]
      %v3213 = vld [vmem:[%s9 + $0x8] sm:$0xf]
      %v3214 = vld [vmem:[%s9 + $0xc] sm:$0xf]
      %v3215 = vld [vmem:[%s9 + $0x10] sm:$0xf]
      %v3216 = vld [vmem:[%s9 + $0x14] sm:$0xf]
      %v3217 = vld [vmem:[%s9 + $0x18] sm:$0xf]
      %v3218 = vld [vmem:[%s9 + $0x1c] sm:$0xf]
      %v3219 = vld [vmem:[%s9 + $0x20] sm:$0xf]
      %v3220 = vld [vmem:[%s9 + $0x24] sm:$0xf]
      %v3231 = vunpack.c.l.b16 %v3211
      %v3232 = vunpack.c.l.b16 %v3212
      %v3233 = vunpack.c.l.b16 %v3213
      %v3234 = vunpack.c.l.b16 %v3214
      %v3235 = vunpack.c.l.b16 %v3215
      %v3236 = vunpack.c.l.b16 %v3216
      %v3237 = vunpack.c.l.b16 %v3217
      %v3238 = vunpack.c.l.b16 %v3218
      %v3239 = vunpack.c.l.b16 %v3219
      %v3240 = vunpack.c.l.b16 %v3220
      %v3241 = vpack.c.b16 %v3232, %v3231
      %v3242 = vpack.c.b16 %v3234, %v3233
      %v3243 = vpack.c.b16 %v3236, %v3235
      %v3244 = vpack.c.b16 %v3238, %v3237
      %v3245 = vpack.c.b16 %v3240, %v3239
      %v3252 = vsel %vm3007, %v3210, 0
      %3254 = vmatprep.subr.bf16.mxu0 0
      %3255 = vmatpush1.bf16.msra.mxu0 %v3241
      %3256 = vmatprep.subr.bf16.mxu0 0
      %3257 = vmatpush1.bf16.msra.mxu0 %v3242
      %3258 = vmatprep.subr.bf16.mxu0 0
      %3259 = vmatpush1.bf16.msra.mxu0 %v3243
      %3260 = vmatprep.subr.bf16.mxu0 0
      %3261 = vmatpush1.bf16.msra.mxu0 %v3244
      %3262 = vmatprep.subr.bf16.mxu0 0
      %3263 = vmatpush1.bf16.msra.mxu0 %v3245
      %3264 = vmatprep.subr.bf16.mxu0 0
      %3265 = vmatpush1.bf16.msra.mxu0 0
      %3266 = vmatprep.subr.bf16.mxu0 0
      %3267 = vmatpush1.bf16.msra.mxu0 0
      %3268 = vmatprep.subr.bf16.mxu0 0
      %3269 = vmatpush1.bf16.msra.mxu0 0
      %3270 = vmatprep.subr.bf16.mxu0 0
      %3271 = vmatpush1.bf16.msra.mxu0 0
      %3272 = vmatprep.subr.bf16.mxu0 0
      %3273 = vmatpush1.bf16.msra.mxu0 0
      %3274 = vmatprep.subr.bf16.mxu0 0
      %3275 = vmatpush1.bf16.msra.mxu0 0
      %3276 = vmatprep.subr.bf16.mxu0 0
      %3277 = vmatpush1.bf16.msra.mxu0 0
      %3278 = vmatprep.subr.bf16.mxu0 0
      %3279 = vmatpush1.bf16.msra.mxu0 0
      %3280 = vmatprep.subr.bf16.mxu0 0
      %3281 = vmatpush1.bf16.msra.mxu0 0
      %3282 = vmatprep.subr.bf16.mxu0 0
      %3283 = vmatpush1.bf16.msra.mxu0 0
      %3284 = vmatprep.subr.bf16.mxu0 0
      %3285 = vmatpush1.bf16.msra.mxu0 0
      %3286 = vmatprep.mubr.bf16.mxu0 0
      %3287 = vmatmul.mubr.bf16.gmra.mrb[0].mxu0 %v3252
      %v3288 = vpop.f32.mrb[0].mxu0
      %v3289 = vadd.f32 0.0, %v3288
      %v3290 = vpop.f32.mrb[0].mxu0
      %v3291 = vpop.f32.mrb[0].mxu0
      %v3292 = vadd.f32 0.0, %v3291
      %v3293 = vpop.f32.mrb[0].mxu0
      %3294 = vdwg.mxu0
      %v3295 = vld [vmem:[%s10] sm:$0x1f]
      %s3296 = scalar_lea.vmem %s9, 40
      %v3297 = vld [vmem:[%s3296] sm:$0xf]
      %v3298 = vld [vmem:[%s3296 + $0x4] sm:$0xf]
      %v3299 = vld [vmem:[%s3296 + $0x8] sm:$0xf]
      %v3300 = vld [vmem:[%s3296 + $0xc] sm:$0xf]
      %v3301 = vld [vmem:[%s3296 + $0x10] sm:$0xf]
      %v3302 = vld [vmem:[%s3296 + $0x14] sm:$0xf]
      %v3303 = vld [vmem:[%s3296 + $0x18] sm:$0xf]
      %v3304 = vld [vmem:[%s3296 + $0x1c] sm:$0xf]
      %v3305 = vld [vmem:[%s3296 + $0x20] sm:$0xf]
      %v3306 = vld [vmem:[%s3296 + $0x24] sm:$0xf]
      %v3317 = vunpack.c.l.b16 %v3297
      %v3318 = vunpack.c.l.b16 %v3298
      %v3319 = vunpack.c.l.b16 %v3299
      %v3320 = vunpack.c.l.b16 %v3300
      %v3321 = vunpack.c.l.b16 %v3301
      %v3322 = vunpack.c.l.b16 %v3302
      %v3323 = vunpack.c.l.b16 %v3303
      %v3324 = vunpack.c.l.b16 %v3304
      %v3325 = vunpack.c.l.b16 %v3305
      %v3326 = vunpack.c.l.b16 %v3306
      %v3327 = vpack.c.b16 %v3318, %v3317
      %v3328 = vpack.c.b16 %v3320, %v3319
      %v3329 = vpack.c.b16 %v3322, %v3321
      %v3330 = vpack.c.b16 %v3324, %v3323
      %v3331 = vpack.c.b16 %v3326, %v3325
      %3337 = vmatprep.subr.bf16.mxu0 0
      %3338 = vmatpush1.bf16.msra.mxu0 %v3327
      %3339 = vmatprep.subr.bf16.mxu0 0
      %3340 = vmatpush1.bf16.msra.mxu0 %v3328
      %3341 = vmatprep.subr.bf16.mxu0 0
      %3342 = vmatpush1.bf16.msra.mxu0 %v3329
      %3343 = vmatprep.subr.bf16.mxu0 0
      %3344 = vmatpush1.bf16.msra.mxu0 %v3330
      %3345 = vmatprep.subr.bf16.mxu0 0
      %3346 = vmatpush1.bf16.msra.mxu0 %v3331
      %3347 = vmatprep.subr.bf16.mxu0 0
      %3348 = vmatpush1.bf16.msra.mxu0 0
      %3349 = vmatprep.subr.bf16.mxu0 0
      %3350 = vmatpush1.bf16.msra.mxu0 0
      %3351 = vmatprep.subr.bf16.mxu0 0
      %3352 = vmatpush1.bf16.msra.mxu0 0
      %3353 = vmatprep.subr.bf16.mxu0 0
      %3354 = vmatpush1.bf16.msra.mxu0 0
      %3355 = vmatprep.subr.bf16.mxu0 0
      %3356 = vmatpush1.bf16.msra.mxu0 0
      %3357 = vmatprep.subr.bf16.mxu0 0
      %3358 = vmatpush1.bf16.msra.mxu0 0
      %3359 = vmatprep.subr.bf16.mxu0 0
      %3360 = vmatpush1.bf16.msra.mxu0 0
      %3361 = vmatprep.subr.bf16.mxu0 0
      %3362 = vmatpush1.bf16.msra.mxu0 0
      %3363 = vmatprep.subr.bf16.mxu0 0
      %3364 = vmatpush1.bf16.msra.mxu0 0
      %3365 = vmatprep.subr.bf16.mxu0 0
      %3366 = vmatpush1.bf16.msra.mxu0 0
      %3367 = vmatprep.subr.bf16.mxu0 0
      %3368 = vmatpush1.bf16.msra.mxu0 0
      %3369 = vmatprep.mubr.bf16.mxu0 0
      %3370 = vmatmul.mubr.bf16.gmra.mrb[0].mxu0 %v3252
      %v3371 = vpop.f32.mrb[0].mxu0
      %v3372 = vadd.f32 0.0, %v3371
      %v3373 = vpop.f32.mrb[0].mxu0
      %v3374 = vpop.f32.mrb[0].mxu0
      %v3375 = vadd.f32 0.0, %v3374
      %v3376 = vpop.f32.mrb[0].mxu0
      %3377 = vdwg.mxu0
      %s3378 = scalar_lea.vmem %s10, 8
      %v3379 = vld [vmem:[%s3378] sm:$0x1f]
      %vm3380 = vcmask 80896
      %v3382 = vsel %vm3380, %v3379, 0
      %vm3384 = vcmask 1041408
      %v3386 = vsel %vm3384, %v3375, 0
      %3388 = vmatprep.subr.mxu0 0.0
      %3389 = vmatpush1.msra.mxu0 %v3372
      %3390 = vmatprep.subr.mxu0 0.0
      %3391 = vmatpush1.msra.mxu0 %v3386
      %3392 = vmatprep.subr.mxu0 0.0
      %3393 = vmatpush1.msra.mxu0 0.0
      %3394 = vmatprep.subr.mxu0 0.0
      %3395 = vmatpush1.msra.mxu0 0.0
      %3396 = vmatprep.subr.mxu0 0.0
      %3397 = vmatpush1.msra.mxu0 0.0
      %3398 = vmatprep.subr.mxu0 0.0
      %3399 = vmatpush1.msra.mxu0 0.0
      %3400 = vmatprep.subr.mxu0 0.0
      %3401 = vmatpush1.msra.mxu0 0.0
      %3402 = vmatprep.subr.mxu0 0.0
      %3403 = vmatpush1.msra.mxu0 0.0
      %3404 = vmatprep.subr.mxu0 0.0
      %3405 = vmatpush1.msra.mxu0 0.0
      %3406 = vmatprep.subr.mxu0 0.0
      %3407 = vmatpush1.msra.mxu0 0.0
      %3408 = vmatprep.subr.mxu0 0.0
      %3409 = vmatpush1.msra.mxu0 0.0
      %3410 = vmatprep.subr.mxu0 0.0
      %3411 = vmatpush1.msra.mxu0 0.0
      %3412 = vmatprep.subr.mxu0 0.0
      %3413 = vmatpush1.msra.mxu0 0.0
      %3414 = vmatprep.subr.mxu0 0.0
      %3415 = vmatpush1.msra.mxu0 0.0
      %3416 = vmatprep.subr.mxu0 0.0
      %3417 = vmatpush1.msra.mxu0 0.0
      %3418 = vmatprep.subr.mxu0 0.0
      %3419 = vmatpush1.msra.mxu0 0.0
      %3420 = vmatprep.subr.mxu0 0.0
      %3421 = vmatpush1.msra.mxu0 0.0
      %3422 = vmatprep.subr.mxu0 0.0
      %3423 = vmatpush1.msra.mxu0 0.0
      %3424 = vmatprep.subr.mxu0 0.0
      %3425 = vmatpush1.msra.mxu0 0.0
      %3426 = vmatprep.subr.mxu0 0.0
      %3427 = vmatpush1.msra.mxu0 0.0
      %3428 = vmatprep.subr.mxu0 0.0
      %3429 = vmatpush1.msra.mxu0 0.0
      %3430 = vmatprep.subr.mxu0 0.0
      %3431 = vmatpush1.msra.mxu0 0.0
      %3432 = vmatprep.subr.mxu0 0.0
      %3433 = vmatpush1.msra.mxu0 0.0
      %3434 = vmatprep.subr.mxu0 0.0
      %3435 = vmatpush1.msra.mxu0 0.0
      %3436 = vmatprep.subr.mxu0 0.0
      %3437 = vmatpush1.msra.mxu0 0.0
      %3438 = vmatprep.subr.mxu0 0.0
      %3439 = vmatpush1.msra.mxu0 0.0
      %3440 = vmatprep.subr.mxu0 0.0
      %3441 = vmatpush1.msra.mxu0 0.0
      %3442 = vmatprep.subr.mxu0 0.0
      %3443 = vmatpush1.msra.mxu0 0.0
      %3444 = vmatprep.subr.mxu0 0.0
      %3445 = vmatpush1.msra.mxu0 0.0
      %3446 = vmatprep.subr.mxu0 0.0
      %3447 = vmatpush1.msra.mxu0 0.0
      %3448 = vmatprep.subr.mxu0 0.0
      %3449 = vmatpush1.msra.mxu0 0.0
      %3450 = vmatprep.subr.mxu0 0.0
      %3451 = vmatpush1.msra.mxu0 0.0
      %3452 = vmatprep.mubr.f32.mxu0 0.0
      %3453 = vmatmul.mubr.f32.gmra.mrb[0].mxu0 %v3382
      %v3454 = vpop.f32.mrb[0].mxu0
      %v3455 = vadd.f32 0.0, %v3454
      %v3456 = vpop.f32.mrb[0].mxu0
      %3457 = vdwg.mxu0
      %v3459 = vsel %vm3380, %v3295, 0
      %v3462 = vsel %vm3384, %v3292, 0
      %3464 = vmatprep.subr.mxu0 0.0
      %3465 = vmatpush1.msra.mxu0 %v3289
      %3466 = vmatprep.subr.mxu0 0.0
      %3467 = vmatpush1.msra.mxu0 %v3462
      %3468 = vmatprep.subr.mxu0 0.0
      %3469 = vmatpush1.msra.mxu0 0.0
      %3470 = vmatprep.subr.mxu0 0.0
      %3471 = vmatpush1.msra.mxu0 0.0
      %3472 = vmatprep.subr.mxu0 0.0
      %3473 = vmatpush1.msra.mxu0 0.0
      %3474 = vmatprep.subr.mxu0 0.0
      %3475 = vmatpush1.msra.mxu0 0.0
      %3476 = vmatprep.subr.mxu0 0.0
      %3477 = vmatpush1.msra.mxu0 0.0
      %3478 = vmatprep.subr.mxu0 0.0
      %3479 = vmatpush1.msra.mxu0 0.0
      %3480 = vmatprep.subr.mxu0 0.0
      %3481 = vmatpush1.msra.mxu0 0.0
      %3482 = vmatprep.subr.mxu0 0.0
      %3483 = vmatpush1.msra.mxu0 0.0
      %3484 = vmatprep.subr.mxu0 0.0
      %3485 = vmatpush1.msra.mxu0 0.0
      %3486 = vmatprep.subr.mxu0 0.0
      %3487 = vmatpush1.msra.mxu0 0.0
      %3488 = vmatprep.subr.mxu0 0.0
      %3489 = vmatpush1.msra.mxu0 0.0
      %3490 = vmatprep.subr.mxu0 0.0
      %3491 = vmatpush1.msra.mxu0 0.0
      %3492 = vmatprep.subr.mxu0 0.0
      %3493 = vmatpush1.msra.mxu0 0.0
      %3494 = vmatprep.subr.mxu0 0.0
      %3495 = vmatpush1.msra.mxu0 0.0
      %3496 = vmatprep.subr.mxu0 0.0
      %3497 = vmatpush1.msra.mxu0 0.0
      %3498 = vmatprep.subr.mxu0 0.0
      %3499 = vmatpush1.msra.mxu0 0.0
      %3500 = vmatprep.subr.mxu0 0.0
      %3501 = vmatpush1.msra.mxu0 0.0
      %3502 = vmatprep.subr.mxu0 0.0
      %3503 = vmatpush1.msra.mxu0 0.0
      %3504 = vmatprep.subr.mxu0 0.0
      %3505 = vmatpush1.msra.mxu0 0.0
      %3506 = vmatprep.subr.mxu0 0.0
      %3507 = vmatpush1.msra.mxu0 0.0
      %3508 = vmatprep.subr.mxu0 0.0
      %3509 = vmatpush1.msra.mxu0 0.0
      %3510 = vmatprep.subr.mxu0 0.0
      %3511 = vmatpush1.msra.mxu0 0.0
      %3512 = vmatprep.subr.mxu0 0.0
      %3513 = vmatpush1.msra.mxu0 0.0
      %3514 = vmatprep.subr.mxu0 0.0
      %3515 = vmatpush1.msra.mxu0 0.0
      %3516 = vmatprep.subr.mxu0 0.0
      %3517 = vmatpush1.msra.mxu0 0.0
      %3518 = vmatprep.subr.mxu0 0.0
      %3519 = vmatpush1.msra.mxu0 0.0
      %3520 = vmatprep.subr.mxu0 0.0
      %3521 = vmatpush1.msra.mxu0 0.0
      %3522 = vmatprep.subr.mxu0 0.0
      %3523 = vmatpush1.msra.mxu0 0.0
      %3524 = vmatprep.subr.mxu0 0.0
      %3525 = vmatpush1.msra.mxu0 0.0
      %3526 = vmatprep.subr.mxu0 0.0
      %3527 = vmatpush1.msra.mxu0 0.0
      %3528 = vmatprep.mubr.f32.mxu0 0.0
      %3529 = vmatmul.mubr.f32.gmra.mrb[0].mxu0 %v3459
      %v3530 = vpop.f32.mrb[0].mxu0
      %v3531 = vadd.f32 %v3455, %v3530
      %v3532 = vpop.f32.mrb[0].mxu0
      %3533 = vdwg.mxu0
      %s3534 = scalar_lea.vmem %s9, 80
      %v3535 = vld [vmem:[%s3534] sm:$0xf]
      %v3536 = vld [vmem:[%s3534 + $0x4] sm:$0xf]
      %v3537 = vld [vmem:[%s3534 + $0x8] sm:$0xf]
      %v3538 = vld [vmem:[%s3534 + $0xc] sm:$0xf]
      %v3539 = vld [vmem:[%s3534 + $0x10] sm:$0xf]
      %v3540 = vld [vmem:[%s3534 + $0x14] sm:$0xf]
      %v3541 = vld [vmem:[%s3534 + $0x18] sm:$0xf]
      %v3542 = vld [vmem:[%s3534 + $0x1c] sm:$0xf]
      %v3543 = vld [vmem:[%s3534 + $0x20] sm:$0xf]
      %v3544 = vld [vmem:[%s3534 + $0x24] sm:$0xf]
      %v3555 = vunpack.c.l.b16 %v3535
      %v3556 = vunpack.c.l.b16 %v3536
      %v3557 = vunpack.c.l.b16 %v3537
      %v3558 = vunpack.c.l.b16 %v3538
      %v3559 = vunpack.c.l.b16 %v3539
      %v3560 = vunpack.c.l.b16 %v3540
      %v3561 = vunpack.c.l.b16 %v3541
      %v3562 = vunpack.c.l.b16 %v3542
      %v3563 = vunpack.c.l.b16 %v3543
      %v3564 = vunpack.c.l.b16 %v3544
      %v3565 = vpack.c.b16 %v3556, %v3555
      %v3566 = vpack.c.b16 %v3558, %v3557
      %v3567 = vpack.c.b16 %v3560, %v3559
      %v3568 = vpack.c.b16 %v3562, %v3561
      %v3569 = vpack.c.b16 %v3564, %v3563
      %3575 = vmatprep.subr.bf16.mxu0 0
      %3576 = vmatpush1.bf16.msra.mxu0 %v3565
      %3577 = vmatprep.subr.bf16.mxu0 0
      %3578 = vmatpush1.bf16.msra.mxu0 %v3566
      %3579 = vmatprep.subr.bf16.mxu0 0
      %3580 = vmatpush1.bf16.msra.mxu0 %v3567
      %3581 = vmatprep.subr.bf16.mxu0 0
      %3582 = vmatpush1.bf16.msra.mxu0 %v3568
      %3583 = vmatprep.subr.bf16.mxu0 0
      %3584 = vmatpush1.bf16.msra.mxu0 %v3569
      %3585 = vmatprep.subr.bf16.mxu0 0
      %3586 = vmatpush1.bf16.msra.mxu0 0
      %3587 = vmatprep.subr.bf16.mxu0 0
      %3588 = vmatpush1.bf16.msra.mxu0 0
      %3589 = vmatprep.subr.bf16.mxu0 0
      %3590 = vmatpush1.bf16.msra.mxu0 0
      %3591 = vmatprep.subr.bf16.mxu0 0
      %3592 = vmatpush1.bf16.msra.mxu0 0
      %3593 = vmatprep.subr.bf16.mxu0 0
      %3594 = vmatpush1.bf16.msra.mxu0 0
      %3595 = vmatprep.subr.bf16.mxu0 0
      %3596 = vmatpush1.bf16.msra.mxu0 0
      %3597 = vmatprep.subr.bf16.mxu0 0
      %3598 = vmatpush1.bf16.msra.mxu0 0
      %3599 = vmatprep.subr.bf16.mxu0 0
      %3600 = vmatpush1.bf16.msra.mxu0 0
      %3601 = vmatprep.subr.bf16.mxu0 0
      %3602 = vmatpush1.bf16.msra.mxu0 0
      %3603 = vmatprep.subr.bf16.mxu0 0
      %3604 = vmatpush1.bf16.msra.mxu0 0
      %3605 = vmatprep.subr.bf16.mxu0 0
      %3606 = vmatpush1.bf16.msra.mxu0 0
      %3607 = vmatprep.mubr.bf16.mxu0 0
      %3608 = vmatmul.mubr.bf16.gmra.mrb[0].mxu0 %v3252
      %v3609 = vpop.f32.mrb[0].mxu0
      %v3610 = vadd.f32 0.0, %v3609
      %v3611 = vpop.f32.mrb[0].mxu0
      %v3612 = vpop.f32.mrb[0].mxu0
      %v3613 = vadd.f32 0.0, %v3612
      %v3614 = vpop.f32.mrb[0].mxu0
      %3615 = vdwg.mxu0
      %s3616 = scalar_lea.vmem %s10, 16
      %v3617 = vld [vmem:[%s3616] sm:$0x1f]
      %v3619 = vsel %vm3380, %v3617, 0
      %v3622 = vsel %vm3384, %v3613, 0
      %3624 = vmatprep.subr.mxu0 0.0
      %3625 = vmatpush1.msra.mxu0 %v3610
      %3626 = vmatprep.subr.mxu0 0.0
      %3627 = vmatpush1.msra.mxu0 %v3622
      %3628 = vmatprep.subr.mxu0 0.0
      %3629 = vmatpush1.msra.mxu0 0.0
      %3630 = vmatprep.subr.mxu0 0.0
      %3631 = vmatpush1.msra.mxu0 0.0
      %3632 = vmatprep.subr.mxu0 0.0
      %3633 = vmatpush1.msra.mxu0 0.0
      %3634 = vmatprep.subr.mxu0 0.0
      %3635 = vmatpush1.msra.mxu0 0.0
      %3636 = vmatprep.subr.mxu0 0.0
      %3637 = vmatpush1.msra.mxu0 0.0
      %3638 = vmatprep.subr.mxu0 0.0
      %3639 = vmatpush1.msra.mxu0 0.0
      %3640 = vmatprep.subr.mxu0 0.0
      %3641 = vmatpush1.msra.mxu0 0.0
      %3642 = vmatprep.subr.mxu0 0.0
      %3643 = vmatpush1.msra.mxu0 0.0
      %3644 = vmatprep.subr.mxu0 0.0
      %3645 = vmatpush1.msra.mxu0 0.0
      %3646 = vmatprep.subr.mxu0 0.0
      %3647 = vmatpush1.msra.mxu0 0.0
      %3648 = vmatprep.subr.mxu0 0.0
      %3649 = vmatpush1.msra.mxu0 0.0
      %3650 = vmatprep.subr.mxu0 0.0
      %3651 = vmatpush1.msra.mxu0 0.0
      %3652 = vmatprep.subr.mxu0 0.0
      %3653 = vmatpush1.msra.mxu0 0.0
      %3654 = vmatprep.subr.mxu0 0.0
      %3655 = vmatpush1.msra.mxu0 0.0
      %3656 = vmatprep.subr.mxu0 0.0
      %3657 = vmatpush1.msra.mxu0 0.0
      %3658 = vmatprep.subr.mxu0 0.0
      %3659 = vmatpush1.msra.mxu0 0.0
      %3660 = vmatprep.subr.mxu0 0.0
      %3661 = vmatpush1.msra.mxu0 0.0
      %3662 = vmatprep.subr.mxu0 0.0
      %3663 = vmatpush1.msra.mxu0 0.0
      %3664 = vmatprep.subr.mxu0 0.0
      %3665 = vmatpush1.msra.mxu0 0.0
      %3666 = vmatprep.subr.mxu0 0.0
      %3667 = vmatpush1.msra.mxu0 0.0
      %3668 = vmatprep.subr.mxu0 0.0
      %3669 = vmatpush1.msra.mxu0 0.0
      %3670 = vmatprep.subr.mxu0 0.0
      %3671 = vmatpush1.msra.mxu0 0.0
      %3672 = vmatprep.subr.mxu0 0.0
      %3673 = vmatpush1.msra.mxu0 0.0
      %3674 = vmatprep.subr.mxu0 0.0
      %3675 = vmatpush1.msra.mxu0 0.0
      %3676 = vmatprep.subr.mxu0 0.0
      %3677 = vmatpush1.msra.mxu0 0.0
      %3678 = vmatprep.subr.mxu0 0.0
      %3679 = vmatpush1.msra.mxu0 0.0
      %3680 = vmatprep.subr.mxu0 0.0
      %3681 = vmatpush1.msra.mxu0 0.0
      %3682 = vmatprep.subr.mxu0 0.0
      %3683 = vmatpush1.msra.mxu0 0.0
      %3684 = vmatprep.subr.mxu0 0.0
      %3685 = vmatpush1.msra.mxu0 0.0
      %3686 = vmatprep.subr.mxu0 0.0
      %3687 = vmatpush1.msra.mxu0 0.0
      %3688 = vmatprep.mubr.f32.mxu0 0.0
      %3689 = vmatmul.mubr.f32.gmra.mrb[0].mxu0 %v3619
      %v3690 = vpop.f32.mrb[0].mxu0
      %v3691 = vadd.f32 0.0, %v3690
      %v3692 = vpop.f32.mrb[0].mxu0
      %3693 = vdwg.mxu0
      %v3694 = vadd.f32 %v3531, %v3691
      %v3695 = vld [vmem:[%s11] sm:$0x1]
      %v3697 = vlaneseq
      %v3698 = vshrl.u32 %v3697, 7
      %v3699 = vsub.s32 0, %v3698
      %v3700 = vrot.slane %v3695, %v3699
      %v3702 = vadd.f32 %v3694, %v3700
      %vm3703 = vcmask 323584
      %v3704 = vsel %vm3703, %v3702, 0.0
      %v3705 = vrot.slane %v3704, 4
      %v3706 = vadd.f32 %v3704, %v3705
      %v3707 = vrot.slane %v3706, 2
      %v3708 = vadd.f32 %v3706, %v3707
      %v3709 = vrot.slane %v3708, 1
      %v3710 = vadd.f32 %v3708, %v3709
      %v3711 = vmul.f32 %v3702, %v3702
      %v3712 = vsel %vm3703, %v3711, 0.0
      %v3713 = vrot.slane %v3712, 4
      %v3714 = vadd.f32 %v3712, %v3713
      %v3715 = vrot.slane %v3714, 2
      %v3716 = vadd.f32 %v3714, %v3715
      %v3717 = vrot.slane %v3716, 1
      %v3718 = vadd.f32 %v3716, %v3717
      %v3719 = vld [vmem:[%s12] sm:$0xff]
      %v3720 = vld [vmem:[%s12 + $0x8] sm:$0xff]
      %v3721 = vld [vmem:[%s12 + $0x10] sm:$0xff]
      %v3722 = vld [vmem:[%s12 + $0x18] sm:$0xff]
      %v3723 = vld [vmem:[%s12 + $0x20] sm:$0xff]
      %vm3724 = vcmask 326656
      %v3726 = vsel %vm3724, %v3710, 0
      %3728 = vmatprep.subr.mxu0 0.0
      %3729 = vmatpush1.msra.mxu0 %v3719
      %3730 = vmatprep.subr.mxu0 0.0
      %3731 = vmatpush1.msra.mxu0 %v3720
      %3732 = vmatprep.subr.mxu0 0.0
      %3733 = vmatpush1.msra.mxu0 %v3721
      %3734 = vmatprep.subr.mxu0 0.0
      %3735 = vmatpush1.msra.mxu0 %v3722
      %3736 = vmatprep.subr.mxu0 0.0
      %3737 = vmatpush1.msra.mxu0 %v3723
      %3738 = vmatprep.subr.mxu0 0.0
      %3739 = vmatpush1.msra.mxu0 0.0
      %3740 = vmatprep.subr.mxu0 0.0
      %3741 = vmatpush1.msra.mxu0 0.0
      %3742 = vmatprep.subr.mxu0 0.0
      %3743 = vmatpush1.msra.mxu0 0.0
      %3744 = vmatprep.subr.mxu0 0.0
      %3745 = vmatpush1.msra.mxu0 0.0
      %3746 = vmatprep.subr.mxu0 0.0
      %3747 = vmatpush1.msra.mxu0 0.0
      %3748 = vmatprep.subr.mxu0 0.0
      %3749 = vmatpush1.msra.mxu0 0.0
      %3750 = vmatprep.subr.mxu0 0.0
      %3751 = vmatpush1.msra.mxu0 0.0
      %3752 = vmatprep.subr.mxu0 0.0
      %3753 = vmatpush1.msra.mxu0 0.0
      %3754 = vmatprep.subr.mxu0 0.0
      %3755 = vmatpush1.msra.mxu0 0.0
      %3756 = vmatprep.subr.mxu0 0.0
      %3757 = vmatpush1.msra.mxu0 0.0
      %3758 = vmatprep.subr.mxu0 0.0
      %3759 = vmatpush1.msra.mxu0 0.0
      %3760 = vmatprep.subr.mxu0 0.0
      %3761 = vmatpush1.msra.mxu0 0.0
      %3762 = vmatprep.subr.mxu0 0.0
      %3763 = vmatpush1.msra.mxu0 0.0
      %3764 = vmatprep.subr.mxu0 0.0
      %3765 = vmatpush1.msra.mxu0 0.0
      %3766 = vmatprep.subr.mxu0 0.0
      %3767 = vmatpush1.msra.mxu0 0.0
      %3768 = vmatprep.subr.mxu0 0.0
      %3769 = vmatpush1.msra.mxu0 0.0
      %3770 = vmatprep.subr.mxu0 0.0
      %3771 = vmatpush1.msra.mxu0 0.0
      %3772 = vmatprep.subr.mxu0 0.0
      %3773 = vmatpush1.msra.mxu0 0.0
      %3774 = vmatprep.subr.mxu0 0.0
      %3775 = vmatpush1.msra.mxu0 0.0
      %3776 = vmatprep.subr.mxu0 0.0
      %3777 = vmatpush1.msra.mxu0 0.0
      %3778 = vmatprep.subr.mxu0 0.0
      %3779 = vmatpush1.msra.mxu0 0.0
      %3780 = vmatprep.subr.mxu0 0.0
      %3781 = vmatpush1.msra.mxu0 0.0
      %3782 = vmatprep.subr.mxu0 0.0
      %3783 = vmatpush1.msra.mxu0 0.0
      %3784 = vmatprep.subr.mxu0 0.0
      %3785 = vmatpush1.msra.mxu0 0.0
      %3786 = vmatprep.subr.mxu0 0.0
      %3787 = vmatpush1.msra.mxu0 0.0
      %3788 = vmatprep.subr.mxu0 0.0
      %3789 = vmatpush1.msra.mxu0 0.0
      %3790 = vmatprep.subr.mxu0 0.0
      %3791 = vmatpush1.msra.mxu0 0.0
      %3792 = vmatprep.mubr.f32.mxu0 0.0
      %3793 = vmatmul.mubr.f32.gmra.mrb[0].mxu0 %v3726
      %v3794 = vpop.f32.mrb[0].mxu0
      %v3795 = vadd.f32 0.0, %v3794
      %v3796 = vpop.f32.mrb[0].mxu0
      %3797 = vdwg.mxu0
      %v3798 = vmul.f32 %v3795, 0.04
      %v3800 = vsel %vm3724, %v3718, 0
      %3802 = vmatprep.subr.mxu0 0.0
      %3803 = vmatpush1.msra.mxu0 %v3719
      %3804 = vmatprep.subr.mxu0 0.0
      %3805 = vmatpush1.msra.mxu0 %v3720
      %3806 = vmatprep.subr.mxu0 0.0
      %3807 = vmatpush1.msra.mxu0 %v3721
      %3808 = vmatprep.subr.mxu0 0.0
      %3809 = vmatpush1.msra.mxu0 %v3722
      %3810 = vmatprep.subr.mxu0 0.0
      %3811 = vmatpush1.msra.mxu0 %v3723
      %3812 = vmatprep.subr.mxu0 0.0
      %3813 = vmatpush1.msra.mxu0 0.0
      %3814 = vmatprep.subr.mxu0 0.0
      %3815 = vmatpush1.msra.mxu0 0.0
      %3816 = vmatprep.subr.mxu0 0.0
      %3817 = vmatpush1.msra.mxu0 0.0
      %3818 = vmatprep.subr.mxu0 0.0
      %3819 = vmatpush1.msra.mxu0 0.0
      %3820 = vmatprep.subr.mxu0 0.0
      %3821 = vmatpush1.msra.mxu0 0.0
      %3822 = vmatprep.subr.mxu0 0.0
      %3823 = vmatpush1.msra.mxu0 0.0
      %3824 = vmatprep.subr.mxu0 0.0
      %3825 = vmatpush1.msra.mxu0 0.0
      %3826 = vmatprep.subr.mxu0 0.0
      %3827 = vmatpush1.msra.mxu0 0.0
      %3828 = vmatprep.subr.mxu0 0.0
      %3829 = vmatpush1.msra.mxu0 0.0
      %3830 = vmatprep.subr.mxu0 0.0
      %3831 = vmatpush1.msra.mxu0 0.0
      %3832 = vmatprep.subr.mxu0 0.0
      %3833 = vmatpush1.msra.mxu0 0.0
      %3834 = vmatprep.subr.mxu0 0.0
      %3835 = vmatpush1.msra.mxu0 0.0
      %3836 = vmatprep.subr.mxu0 0.0
      %3837 = vmatpush1.msra.mxu0 0.0
      %3838 = vmatprep.subr.mxu0 0.0
      %3839 = vmatpush1.msra.mxu0 0.0
      %3840 = vmatprep.subr.mxu0 0.0
      %3841 = vmatpush1.msra.mxu0 0.0
      %3842 = vmatprep.subr.mxu0 0.0
      %3843 = vmatpush1.msra.mxu0 0.0
      %3844 = vmatprep.subr.mxu0 0.0
      %3845 = vmatpush1.msra.mxu0 0.0
      %3846 = vmatprep.subr.mxu0 0.0
      %3847 = vmatpush1.msra.mxu0 0.0
      %3848 = vmatprep.subr.mxu0 0.0
      %3849 = vmatpush1.msra.mxu0 0.0
      %3850 = vmatprep.subr.mxu0 0.0
      %3851 = vmatpush1.msra.mxu0 0.0
      %3852 = vmatprep.subr.mxu0 0.0
      %3853 = vmatpush1.msra.mxu0 0.0
      %3854 = vmatprep.subr.mxu0 0.0
      %3855 = vmatpush1.msra.mxu0 0.0
      %3856 = vmatprep.subr.mxu0 0.0
      %3857 = vmatpush1.msra.mxu0 0.0
      %3858 = vmatprep.subr.mxu0 0.0
      %3859 = vmatpush1.msra.mxu0 0.0
      %3860 = vmatprep.subr.mxu0 0.0
      %3861 = vmatpush1.msra.mxu0 0.0
      %3862 = vmatprep.subr.mxu0 0.0
      %3863 = vmatpush1.msra.mxu0 0.0
      %3864 = vmatprep.subr.mxu0 0.0
      %3865 = vmatpush1.msra.mxu0 0.0
      %3866 = vmatprep.mubr.f32.mxu0 0.0
      %3867 = vmatmul.mubr.f32.gmra.mrb[0].mxu0 %v3800
      %v3868 = vpop.f32.mrb[0].mxu0
      %v3869 = vadd.f32 0.0, %v3868
      %v3870 = vpop.f32.mrb[0].mxu0
      %3871 = vdwg.mxu0
      %v3872 = vmul.f32 %v3869, 0.04
      %v3873 = vmul.f32 %v3798, %v3798
      %v3874 = vsub.f32 %v3872, %v3873
      %v3875 = vmax.f32 %v3874, 0.0
      %v3876 = vlaneseq
      %v3877 = vshrl.u32 %v3876, 7
      %v3878 = vsub.s32 0, %v3877
      %v3879 = vrot.slane %v3798, %v3878
      %v3880 = vsub.f32 %v3702, %v3879
      %v3881 = vadd.f32 %v3875, 1e-05
      %v3882 = vrsqrt.pop %v3881
      %v3883 = vlaneseq
      %v3884 = vshrl.u32 %v3883, 7
      %v3885 = vsub.s32 0, %v3884
      %v3886 = vrot.slane %v3882, %v3885
      %v3887 = vmul.f32 %v3880, %v3886
      %vm3888 = vcmp.gt.f32.partialorder %v3887, 0.0
      %v3889 = vmul.f32 %v3887, 0.2
      %v3890 = vsel %vm3888, %v3887, %v3889
      %v3891 = vpack.c.bf16 %v3890, %v3890
      %v3892 = vld [vmem:[%s13] sm:$0xf]
      %v3893 = vld [vmem:[%s13 + $0x4] sm:$0xf]
      %v3894 = vld [vmem:[%s13 + $0x8] sm:$0xf]
      %v3895 = vld [vmem:[%s13 + $0xc] sm:$0xf]
      %v3896 = vld [vmem:[%s13 + $0x10] sm:$0xf]
      %v3902 = vunpack.c.l.b16 %v3892
      %v3903 = vunpack.c.l.b16 %v3893
      %v3904 = vunpack.c.l.b16 %v3894
      %v3905 = vunpack.c.l.b16 %v3895
      %v3906 = vunpack.c.l.b16 %v3896
      %v3907 = vpack.c.b16 %v3903, %v3902
      %v3908 = vpack.c.b16 %v3905, %v3904
      %v3909 = vpack.c.b16 %v3906, %v3906
      %v3913 = vsel %vm3724, %v3891, 0
      %v3916 = vsel %vm2427, %v3909, 0
      %3918 = vmatprep.subr.bf16.mxu0 0
      %3919 = vmatpush1.bf16.msra.mxu0 %v3907
      %3920 = vmatprep.subr.bf16.mxu0 0
      %3921 = vmatpush1.bf16.msra.mxu0 %v3908
      %3922 = vmatprep.subr.bf16.mxu0 0
      %3923 = vmatpush1.bf16.msra.mxu0 %v3916
      %3924 = vmatprep.subr.bf16.mxu0 0
      %3925 = vmatpush1.bf16.msra.mxu0 0
      %3926 = vmatprep.subr.bf16.mxu0 0
      %3927 = vmatpush1.bf16.msra.mxu0 0
      %3928 = vmatprep.subr.bf16.mxu0 0
      %3929 = vmatpush1.bf16.msra.mxu0 0
      %3930 = vmatprep.subr.bf16.mxu0 0
      %3931 = vmatpush1.bf16.msra.mxu0 0
      %3932 = vmatprep.subr.bf16.mxu0 0
      %3933 = vmatpush1.bf16.msra.mxu0 0
      %3934 = vmatprep.subr.bf16.mxu0 0
      %3935 = vmatpush1.bf16.msra.mxu0 0
      %3936 = vmatprep.subr.bf16.mxu0 0
      %3937 = vmatpush1.bf16.msra.mxu0 0
      %3938 = vmatprep.subr.bf16.mxu0 0
      %3939 = vmatpush1.bf16.msra.mxu0 0
      %3940 = vmatprep.subr.bf16.mxu0 0
      %3941 = vmatpush1.bf16.msra.mxu0 0
      %3942 = vmatprep.subr.bf16.mxu0 0
      %3943 = vmatpush1.bf16.msra.mxu0 0
      %3944 = vmatprep.subr.bf16.mxu0 0
      %3945 = vmatpush1.bf16.msra.mxu0 0
      %3946 = vmatprep.subr.bf16.mxu0 0
      %3947 = vmatpush1.bf16.msra.mxu0 0
      %3948 = vmatprep.subr.bf16.mxu0 0
      %3949 = vmatpush1.bf16.msra.mxu0 0
      %3950 = vmatprep.mubr.bf16.mxu0 0
      %3951 = vmatmul.mubr.bf16.gmra.mrb[0].mxu0 %v3913
      %v3952 = vpop.f32.mrb[0].mxu0
      %v3953 = vadd.f32 0.0, %v3952
      %v3954 = vpop.f32.mrb[0].mxu0
      %v3955 = vpop.f32.mrb[0].mxu0
      %v3956 = vpop.f32.mrb[0].mxu0
      %3957 = vdwg.mxu0
      %v3958 = vld [vmem:[%s14] sm:$0x7]
      %s3959 = scalar_lea.vmem %s13, 20
      %v3960 = vld [vmem:[%s3959] sm:$0xf]
      %v3961 = vld [vmem:[%s3959 + $0x4] sm:$0xf]
      %v3962 = vld [vmem:[%s3959 + $0x8] sm:$0xf]
      %v3963 = vld [vmem:[%s3959 + $0xc] sm:$0xf]
      %v3964 = vld [vmem:[%s3959 + $0x10] sm:$0xf]
      %v3970 = vunpack.c.l.b16 %v3960
      %v3971 = vunpack.c.l.b16 %v3961
      %v3972 = vunpack.c.l.b16 %v3962
      %v3973 = vunpack.c.l.b16 %v3963
      %v3974 = vunpack.c.l.b16 %v3964
      %v3975 = vpack.c.b16 %v3971, %v3970
      %v3976 = vpack.c.b16 %v3973, %v3972
      %v3977 = vpack.c.b16 %v3974, %v3974
      %v3981 = vsel %vm2427, %v3977, 0
      %3983 = vmatprep.subr.bf16.mxu0 0
      %3984 = vmatpush1.bf16.msra.mxu0 %v3975
      %3985 = vmatprep.subr.bf16.mxu0 0
      %3986 = vmatpush1.bf16.msra.mxu0 %v3976
      %3987 = vmatprep.subr.bf16.mxu0 0
      %3988 = vmatpush1.bf16.msra.mxu0 %v3981
      %3989 = vmatprep.subr.bf16.mxu0 0
      %3990 = vmatpush1.bf16.msra.mxu0 0
      %3991 = vmatprep.subr.bf16.mxu0 0
      %3992 = vmatpush1.bf16.msra.mxu0 0
      %3993 = vmatprep.subr.bf16.mxu0 0
      %3994 = vmatpush1.bf16.msra.mxu0 0
      %3995 = vmatprep.subr.bf16.mxu0 0
      %3996 = vmatpush1.bf16.msra.mxu0 0
      %3997 = vmatprep.subr.bf16.mxu0 0
      %3998 = vmatpush1.bf16.msra.mxu0 0
      %3999 = vmatprep.subr.bf16.mxu0 0
      %4000 = vmatpush1.bf16.msra.mxu0 0
      %4001 = vmatprep.subr.bf16.mxu0 0
      %4002 = vmatpush1.bf16.msra.mxu0 0
      %4003 = vmatprep.subr.bf16.mxu0 0
      %4004 = vmatpush1.bf16.msra.mxu0 0
      %4005 = vmatprep.subr.bf16.mxu0 0
      %4006 = vmatpush1.bf16.msra.mxu0 0
      %4007 = vmatprep.subr.bf16.mxu0 0
      %4008 = vmatpush1.bf16.msra.mxu0 0
      %4009 = vmatprep.subr.bf16.mxu0 0
      %4010 = vmatpush1.bf16.msra.mxu0 0
      %4011 = vmatprep.subr.bf16.mxu0 0
      %4012 = vmatpush1.bf16.msra.mxu0 0
      %4013 = vmatprep.subr.bf16.mxu0 0
      %4014 = vmatpush1.bf16.msra.mxu0 0
      %4015 = vmatprep.mubr.bf16.mxu0 0
      %4016 = vmatmul.mubr.bf16.gmra.mrb[0].mxu0 %v3913
      %v4017 = vpop.f32.mrb[0].mxu0
      %v4018 = vadd.f32 0.0, %v4017
      %v4019 = vpop.f32.mrb[0].mxu0
      %v4020 = vpop.f32.mrb[0].mxu0
      %v4021 = vpop.f32.mrb[0].mxu0
      %4022 = vdwg.mxu0
      %s4023 = scalar_lea.vmem %s14, 4
      %v4024 = vld [vmem:[%s4023] sm:$0x7]
      %vm4025 = vcmask 39936
      %v4027 = vsel %vm4025, %v4024, 0
      %vm4029 = vcmask 1044480
      %v4031 = vsel %vm4029, %v4018, 0
      %4033 = vmatprep.subr.mxu0 0.0
      %4034 = vmatpush1.msra.mxu0 %v4031
      %4035 = vmatprep.subr.mxu0 0.0
      %4036 = vmatpush1.msra.mxu0 0.0
      %4037 = vmatprep.subr.mxu0 0.0
      %4038 = vmatpush1.msra.mxu0 0.0
      %4039 = vmatprep.subr.mxu0 0.0
      %4040 = vmatpush1.msra.mxu0 0.0
      %4041 = vmatprep.subr.mxu0 0.0
      %4042 = vmatpush1.msra.mxu0 0.0
      %4043 = vmatprep.subr.mxu0 0.0
      %4044 = vmatpush1.msra.mxu0 0.0
      %4045 = vmatprep.subr.mxu0 0.0
      %4046 = vmatpush1.msra.mxu0 0.0
      %4047 = vmatprep.subr.mxu0 0.0
      %4048 = vmatpush1.msra.mxu0 0.0
      %4049 = vmatprep.subr.mxu0 0.0
      %4050 = vmatpush1.msra.mxu0 0.0
      %4051 = vmatprep.subr.mxu0 0.0
      %4052 = vmatpush1.msra.mxu0 0.0
      %4053 = vmatprep.subr.mxu0 0.0
      %4054 = vmatpush1.msra.mxu0 0.0
      %4055 = vmatprep.subr.mxu0 0.0
      %4056 = vmatpush1.msra.mxu0 0.0
      %4057 = vmatprep.subr.mxu0 0.0
      %4058 = vmatpush1.msra.mxu0 0.0
      %4059 = vmatprep.subr.mxu0 0.0
      %4060 = vmatpush1.msra.mxu0 0.0
      %4061 = vmatprep.subr.mxu0 0.0
      %4062 = vmatpush1.msra.mxu0 0.0
      %4063 = vmatprep.subr.mxu0 0.0
      %4064 = vmatpush1.msra.mxu0 0.0
      %4065 = vmatprep.subr.mxu0 0.0
      %4066 = vmatpush1.msra.mxu0 0.0
      %4067 = vmatprep.subr.mxu0 0.0
      %4068 = vmatpush1.msra.mxu0 0.0
      %4069 = vmatprep.subr.mxu0 0.0
      %4070 = vmatpush1.msra.mxu0 0.0
      %4071 = vmatprep.subr.mxu0 0.0
      %4072 = vmatpush1.msra.mxu0 0.0
      %4073 = vmatprep.subr.mxu0 0.0
      %4074 = vmatpush1.msra.mxu0 0.0
      %4075 = vmatprep.subr.mxu0 0.0
      %4076 = vmatpush1.msra.mxu0 0.0
      %4077 = vmatprep.subr.mxu0 0.0
      %4078 = vmatpush1.msra.mxu0 0.0
      %4079 = vmatprep.subr.mxu0 0.0
      %4080 = vmatpush1.msra.mxu0 0.0
      %4081 = vmatprep.subr.mxu0 0.0
      %4082 = vmatpush1.msra.mxu0 0.0
      %4083 = vmatprep.subr.mxu0 0.0
      %4084 = vmatpush1.msra.mxu0 0.0
      %4085 = vmatprep.subr.mxu0 0.0
      %4086 = vmatpush1.msra.mxu0 0.0
      %4087 = vmatprep.subr.mxu0 0.0
      %4088 = vmatpush1.msra.mxu0 0.0
      %4089 = vmatprep.subr.mxu0 0.0
      %4090 = vmatpush1.msra.mxu0 0.0
      %4091 = vmatprep.subr.mxu0 0.0
      %4092 = vmatpush1.msra.mxu0 0.0
      %4093 = vmatprep.subr.mxu0 0.0
      %4094 = vmatpush1.msra.mxu0 0.0
      %4095 = vmatprep.subr.mxu0 0.0
      %4096 = vmatpush1.msra.mxu0 0.0
      %4097 = vmatprep.mubr.f32.mxu0 0.0
      %4098 = vmatmul.mubr.f32.gmra.mrb[0].mxu0 %v4027
      %v4099 = vpop.f32.mrb[0].mxu0
      %v4100 = vadd.f32 0.0, %v4099
      %v4101 = vpop.f32.mrb[0].mxu0
      %4102 = vdwg.mxu0
      %v4104 = vsel %vm4025, %v3958, 0
      %v4107 = vsel %vm4029, %v3953, 0
      %4109 = vmatprep.subr.mxu0 0.0
      %4110 = vmatpush1.msra.mxu0 %v4107
      %4111 = vmatprep.subr.mxu0 0.0
      %4112 = vmatpush1.msra.mxu0 0.0
      %4113 = vmatprep.subr.mxu0 0.0
      %4114 = vmatpush1.msra.mxu0 0.0
      %4115 = vmatprep.subr.mxu0 0.0
      %4116 = vmatpush1.msra.mxu0 0.0
      %4117 = vmatprep.subr.mxu0 0.0
      %4118 = vmatpush1.msra.mxu0 0.0
      %4119 = vmatprep.subr.mxu0 0.0
      %4120 = vmatpush1.msra.mxu0 0.0
      %4121 = vmatprep.subr.mxu0 0.0
      %4122 = vmatpush1.msra.mxu0 0.0
      %4123 = vmatprep.subr.mxu0 0.0
      %4124 = vmatpush1.msra.mxu0 0.0
      %4125 = vmatprep.subr.mxu0 0.0
      %4126 = vmatpush1.msra.mxu0 0.0
      %4127 = vmatprep.subr.mxu0 0.0
      %4128 = vmatpush1.msra.mxu0 0.0
      %4129 = vmatprep.subr.mxu0 0.0
      %4130 = vmatpush1.msra.mxu0 0.0
      %4131 = vmatprep.subr.mxu0 0.0
      %4132 = vmatpush1.msra.mxu0 0.0
      %4133 = vmatprep.subr.mxu0 0.0
      %4134 = vmatpush1.msra.mxu0 0.0
      %4135 = vmatprep.subr.mxu0 0.0
      %4136 = vmatpush1.msra.mxu0 0.0
      %4137 = vmatprep.subr.mxu0 0.0
      %4138 = vmatpush1.msra.mxu0 0.0
      %4139 = vmatprep.subr.mxu0 0.0
      %4140 = vmatpush1.msra.mxu0 0.0
      %4141 = vmatprep.subr.mxu0 0.0
      %4142 = vmatpush1.msra.mxu0 0.0
      %4143 = vmatprep.subr.mxu0 0.0
      %4144 = vmatpush1.msra.mxu0 0.0
      %4145 = vmatprep.subr.mxu0 0.0
      %4146 = vmatpush1.msra.mxu0 0.0
      %4147 = vmatprep.subr.mxu0 0.0
      %4148 = vmatpush1.msra.mxu0 0.0
      %4149 = vmatprep.subr.mxu0 0.0
      %4150 = vmatpush1.msra.mxu0 0.0
      %4151 = vmatprep.subr.mxu0 0.0
      %4152 = vmatpush1.msra.mxu0 0.0
      %4153 = vmatprep.subr.mxu0 0.0
      %4154 = vmatpush1.msra.mxu0 0.0
      %4155 = vmatprep.subr.mxu0 0.0
      %4156 = vmatpush1.msra.mxu0 0.0
      %4157 = vmatprep.subr.mxu0 0.0
      %4158 = vmatpush1.msra.mxu0 0.0
      %4159 = vmatprep.subr.mxu0 0.0
      %4160 = vmatpush1.msra.mxu0 0.0
      %4161 = vmatprep.subr.mxu0 0.0
      %4162 = vmatpush1.msra.mxu0 0.0
      %4163 = vmatprep.subr.mxu0 0.0
      %4164 = vmatpush1.msra.mxu0 0.0
      %4165 = vmatprep.subr.mxu0 0.0
      %4166 = vmatpush1.msra.mxu0 0.0
      %4167 = vmatprep.subr.mxu0 0.0
      %4168 = vmatpush1.msra.mxu0 0.0
      %4169 = vmatprep.subr.mxu0 0.0
      %4170 = vmatpush1.msra.mxu0 0.0
      %4171 = vmatprep.subr.mxu0 0.0
      %4172 = vmatpush1.msra.mxu0 0.0
      %4173 = vmatprep.mubr.f32.mxu0 0.0
      %4174 = vmatmul.mubr.f32.gmra.mrb[0].mxu0 %v4104
      %v4175 = vpop.f32.mrb[0].mxu0
      %v4176 = vadd.f32 %v4100, %v4175
      %v4177 = vpop.f32.mrb[0].mxu0
      %4178 = vdwg.mxu0
      %s4179 = scalar_lea.vmem %s13, 40
      %v4180 = vld [vmem:[%s4179] sm:$0xf]
      %v4181 = vld [vmem:[%s4179 + $0x4] sm:$0xf]
      %v4182 = vld [vmem:[%s4179 + $0x8] sm:$0xf]
      %v4183 = vld [vmem:[%s4179 + $0xc] sm:$0xf]
      %v4184 = vld [vmem:[%s4179 + $0x10] sm:$0xf]
      %v4190 = vunpack.c.l.b16 %v4180
      %v4191 = vunpack.c.l.b16 %v4181
      %v4192 = vunpack.c.l.b16 %v4182
      %v4193 = vunpack.c.l.b16 %v4183
      %v4194 = vunpack.c.l.b16 %v4184
      %v4195 = vpack.c.b16 %v4191, %v4190
      %v4196 = vpack.c.b16 %v4193, %v4192
      %v4197 = vpack.c.b16 %v4194, %v4194
      %v4201 = vsel %vm2427, %v4197, 0
      %4203 = vmatprep.subr.bf16.mxu0 0
      %4204 = vmatpush1.bf16.msra.mxu0 %v4195
      %4205 = vmatprep.subr.bf16.mxu0 0
      %4206 = vmatpush1.bf16.msra.mxu0 %v4196
      %4207 = vmatprep.subr.bf16.mxu0 0
      %4208 = vmatpush1.bf16.msra.mxu0 %v4201
      %4209 = vmatprep.subr.bf16.mxu0 0
      %4210 = vmatpush1.bf16.msra.mxu0 0
      %4211 = vmatprep.subr.bf16.mxu0 0
      %4212 = vmatpush1.bf16.msra.mxu0 0
      %4213 = vmatprep.subr.bf16.mxu0 0
      %4214 = vmatpush1.bf16.msra.mxu0 0
      %4215 = vmatprep.subr.bf16.mxu0 0
      %4216 = vmatpush1.bf16.msra.mxu0 0
      %4217 = vmatprep.subr.bf16.mxu0 0
      %4218 = vmatpush1.bf16.msra.mxu0 0
      %4219 = vmatprep.subr.bf16.mxu0 0
      %4220 = vmatpush1.bf16.msra.mxu0 0
      %4221 = vmatprep.subr.bf16.mxu0 0
      %4222 = vmatpush1.bf16.msra.mxu0 0
      %4223 = vmatprep.subr.bf16.mxu0 0
      %4224 = vmatpush1.bf16.msra.mxu0 0
      %4225 = vmatprep.subr.bf16.mxu0 0
      %4226 = vmatpush1.bf16.msra.mxu0 0
      %4227 = vmatprep.subr.bf16.mxu0 0
      %4228 = vmatpush1.bf16.msra.mxu0 0
      %4229 = vmatprep.subr.bf16.mxu0 0
      %4230 = vmatpush1.bf16.msra.mxu0 0
      %4231 = vmatprep.subr.bf16.mxu0 0
      %4232 = vmatpush1.bf16.msra.mxu0 0
      %4233 = vmatprep.subr.bf16.mxu0 0
      %4234 = vmatpush1.bf16.msra.mxu0 0
      %4235 = vmatprep.mubr.bf16.mxu0 0
      %4236 = vmatmul.mubr.bf16.gmra.mrb[0].mxu0 %v3913
      %v4237 = vpop.f32.mrb[0].mxu0
      %v4238 = vadd.f32 0.0, %v4237
      %v4239 = vpop.f32.mrb[0].mxu0
      %v4240 = vpop.f32.mrb[0].mxu0
      %v4241 = vpop.f32.mrb[0].mxu0
      %4242 = vdwg.mxu0
      %s4243 = scalar_lea.vmem %s14, 8
      %v4244 = vld [vmem:[%s4243] sm:$0x7]
      %v4246 = vsel %vm4025, %v4244, 0
      %v4249 = vsel %vm4029, %v4238, 0
      %4251 = vmatprep.subr.mxu0 0.0
      %4252 = vmatpush1.msra.mxu0 %v4249
      %4253 = vmatprep.subr.mxu0 0.0
      %4254 = vmatpush1.msra.mxu0 0.0
      %4255 = vmatprep.subr.mxu0 0.0
      %4256 = vmatpush1.msra.mxu0 0.0
      %4257 = vmatprep.subr.mxu0 0.0
      %4258 = vmatpush1.msra.mxu0 0.0
      %4259 = vmatprep.subr.mxu0 0.0
      %4260 = vmatpush1.msra.mxu0 0.0
      %4261 = vmatprep.subr.mxu0 0.0
      %4262 = vmatpush1.msra.mxu0 0.0
      %4263 = vmatprep.subr.mxu0 0.0
      %4264 = vmatpush1.msra.mxu0 0.0
      %4265 = vmatprep.subr.mxu0 0.0
      %4266 = vmatpush1.msra.mxu0 0.0
      %4267 = vmatprep.subr.mxu0 0.0
      %4268 = vmatpush1.msra.mxu0 0.0
      %4269 = vmatprep.subr.mxu0 0.0
      %4270 = vmatpush1.msra.mxu0 0.0
      %4271 = vmatprep.subr.mxu0 0.0
      %4272 = vmatpush1.msra.mxu0 0.0
      %4273 = vmatprep.subr.mxu0 0.0
      %4274 = vmatpush1.msra.mxu0 0.0
      %4275 = vmatprep.subr.mxu0 0.0
      %4276 = vmatpush1.msra.mxu0 0.0
      %4277 = vmatprep.subr.mxu0 0.0
      %4278 = vmatpush1.msra.mxu0 0.0
      %4279 = vmatprep.subr.mxu0 0.0
      %4280 = vmatpush1.msra.mxu0 0.0
      %4281 = vmatprep.subr.mxu0 0.0
      %4282 = vmatpush1.msra.mxu0 0.0
      %4283 = vmatprep.subr.mxu0 0.0
      %4284 = vmatpush1.msra.mxu0 0.0
      %4285 = vmatprep.subr.mxu0 0.0
      %4286 = vmatpush1.msra.mxu0 0.0
      %4287 = vmatprep.subr.mxu0 0.0
      %4288 = vmatpush1.msra.mxu0 0.0
      %4289 = vmatprep.subr.mxu0 0.0
      %4290 = vmatpush1.msra.mxu0 0.0
      %4291 = vmatprep.subr.mxu0 0.0
      %4292 = vmatpush1.msra.mxu0 0.0
      %4293 = vmatprep.subr.mxu0 0.0
      %4294 = vmatpush1.msra.mxu0 0.0
      %4295 = vmatprep.subr.mxu0 0.0
      %4296 = vmatpush1.msra.mxu0 0.0
      %4297 = vmatprep.subr.mxu0 0.0
      %4298 = vmatpush1.msra.mxu0 0.0
      %4299 = vmatprep.subr.mxu0 0.0
      %4300 = vmatpush1.msra.mxu0 0.0
      %4301 = vmatprep.subr.mxu0 0.0
      %4302 = vmatpush1.msra.mxu0 0.0
      %4303 = vmatprep.subr.mxu0 0.0
      %4304 = vmatpush1.msra.mxu0 0.0
      %4305 = vmatprep.subr.mxu0 0.0
      %4306 = vmatpush1.msra.mxu0 0.0
      %4307 = vmatprep.subr.mxu0 0.0
      %4308 = vmatpush1.msra.mxu0 0.0
      %4309 = vmatprep.subr.mxu0 0.0
      %4310 = vmatpush1.msra.mxu0 0.0
      %4311 = vmatprep.subr.mxu0 0.0
      %4312 = vmatpush1.msra.mxu0 0.0
      %4313 = vmatprep.subr.mxu0 0.0
      %4314 = vmatpush1.msra.mxu0 0.0
      %4315 = vmatprep.mubr.f32.mxu0 0.0
      %4316 = vmatmul.mubr.f32.gmra.mrb[0].mxu0 %v4246
      %v4317 = vpop.f32.mrb[0].mxu0
      %v4318 = vadd.f32 0.0, %v4317
      %v4319 = vpop.f32.mrb[0].mxu0
      %4320 = vdwg.mxu0
      %v4321 = vadd.f32 %v4176, %v4318
      %v4322 = vld [vmem:[%s15] sm:$0x1]
      %v4324 = vlaneseq
      %v4325 = vshrl.u32 %v4324, 7
      %v4326 = vsub.s32 0, %v4325
      %v4327 = vrot.slane %v4322, %v4326
      %v4329 = vadd.f32 %v4321, %v4327
      %v4330 = vsel %vm2060, %v4329, 0.0
      %v4331 = vrot.slane %v4330, 4
      %v4332 = vadd.f32 %v4330, %v4331
      %v4333 = vrot.slane %v4332, 2
      %v4334 = vadd.f32 %v4332, %v4333
      %v4335 = vrot.slane %v4334, 1
      %v4336 = vadd.f32 %v4334, %v4335
      %v4337 = vmul.f32 %v4329, %v4329
      %v4338 = vsel %vm2060, %v4337, 0.0
      %v4339 = vrot.slane %v4338, 4
      %v4340 = vadd.f32 %v4338, %v4339
      %v4341 = vrot.slane %v4340, 2
      %v4342 = vadd.f32 %v4340, %v4341
      %v4343 = vrot.slane %v4342, 1
      %v4344 = vadd.f32 %v4342, %v4343
      %v4345 = vld [vmem:[%s16] sm:$0xff]
      %v4346 = vld [vmem:[%s16 + $0x8] sm:$0xff]
      %v4347 = vld [vmem:[%s16 + $0x10] sm:$0xff]
      %v4349 = vsel %vm2056, %v4336, 0
      %4351 = vmatprep.subr.mxu0 0.0
      %4352 = vmatpush1.msra.mxu0 %v4345
      %4353 = vmatprep.subr.mxu0 0.0
      %4354 = vmatpush1.msra.mxu0 %v4346
      %4355 = vmatprep.subr.mxu0 0.0
      %4356 = vmatpush1.msra.mxu0 %v4347
      %4357 = vmatprep.subr.mxu0 0.0
      %4358 = vmatpush1.msra.mxu0 0.0
      %4359 = vmatprep.subr.mxu0 0.0
      %4360 = vmatpush1.msra.mxu0 0.0
      %4361 = vmatprep.subr.mxu0 0.0
      %4362 = vmatpush1.msra.mxu0 0.0
      %4363 = vmatprep.subr.mxu0 0.0
      %4364 = vmatpush1.msra.mxu0 0.0
      %4365 = vmatprep.subr.mxu0 0.0
      %4366 = vmatpush1.msra.mxu0 0.0
      %4367 = vmatprep.subr.mxu0 0.0
      %4368 = vmatpush1.msra.mxu0 0.0
      %4369 = vmatprep.subr.mxu0 0.0
      %4370 = vmatpush1.msra.mxu0 0.0
      %4371 = vmatprep.subr.mxu0 0.0
      %4372 = vmatpush1.msra.mxu0 0.0
      %4373 = vmatprep.subr.mxu0 0.0
      %4374 = vmatpush1.msra.mxu0 0.0
      %4375 = vmatprep.subr.mxu0 0.0
      %4376 = vmatpush1.msra.mxu0 0.0
      %4377 = vmatprep.subr.mxu0 0.0
      %4378 = vmatpush1.msra.mxu0 0.0
      %4379 = vmatprep.subr.mxu0 0.0
      %4380 = vmatpush1.msra.mxu0 0.0
      %4381 = vmatprep.subr.mxu0 0.0
      %4382 = vmatpush1.msra.mxu0 0.0
      %4383 = vmatprep.subr.mxu0 0.0
      %4384 = vmatpush1.msra.mxu0 0.0
      %4385 = vmatprep.subr.mxu0 0.0
      %4386 = vmatpush1.msra.mxu0 0.0
      %4387 = vmatprep.subr.mxu0 0.0
      %4388 = vmatpush1.msra.mxu0 0.0
      %4389 = vmatprep.subr.mxu0 0.0
      %4390 = vmatpush1.msra.mxu0 0.0
      %4391 = vmatprep.subr.mxu0 0.0
      %4392 = vmatpush1.msra.mxu0 0.0
      %4393 = vmatprep.subr.mxu0 0.0
      %4394 = vmatpush1.msra.mxu0 0.0
      %4395 = vmatprep.subr.mxu0 0.0
      %4396 = vmatpush1.msra.mxu0 0.0
      %4397 = vmatprep.subr.mxu0 0.0
      %4398 = vmatpush1.msra.mxu0 0.0
      %4399 = vmatprep.subr.mxu0 0.0
      %4400 = vmatpush1.msra.mxu0 0.0
      %4401 = vmatprep.subr.mxu0 0.0
      %4402 = vmatpush1.msra.mxu0 0.0
      %4403 = vmatprep.subr.mxu0 0.0
      %4404 = vmatpush1.msra.mxu0 0.0
      %4405 = vmatprep.subr.mxu0 0.0
      %4406 = vmatpush1.msra.mxu0 0.0
      %4407 = vmatprep.subr.mxu0 0.0
      %4408 = vmatpush1.msra.mxu0 0.0
      %4409 = vmatprep.subr.mxu0 0.0
      %4410 = vmatpush1.msra.mxu0 0.0
      %4411 = vmatprep.subr.mxu0 0.0
      %4412 = vmatpush1.msra.mxu0 0.0
      %4413 = vmatprep.subr.mxu0 0.0
      %4414 = vmatpush1.msra.mxu0 0.0
      %4415 = vmatprep.mubr.f32.mxu0 0.0
      %4416 = vmatmul.mubr.f32.gmra.mrb[0].mxu0 %v4349
      %v4417 = vpop.f32.mrb[0].mxu0
      %v4418 = vadd.f32 0.0, %v4417
      %v4419 = vpop.f32.mrb[0].mxu0
      %4420 = vdwg.mxu0
      %v4421 = vmul.f32 %v4418, 0.11111111
      %v4423 = vsel %vm2056, %v4344, 0
      %4425 = vmatprep.subr.mxu0 0.0
      %4426 = vmatpush1.msra.mxu0 %v4345
      %4427 = vmatprep.subr.mxu0 0.0
      %4428 = vmatpush1.msra.mxu0 %v4346
      %4429 = vmatprep.subr.mxu0 0.0
      %4430 = vmatpush1.msra.mxu0 %v4347
      %4431 = vmatprep.subr.mxu0 0.0
      %4432 = vmatpush1.msra.mxu0 0.0
      %4433 = vmatprep.subr.mxu0 0.0
      %4434 = vmatpush1.msra.mxu0 0.0
      %4435 = vmatprep.subr.mxu0 0.0
      %4436 = vmatpush1.msra.mxu0 0.0
      %4437 = vmatprep.subr.mxu0 0.0
      %4438 = vmatpush1.msra.mxu0 0.0
      %4439 = vmatprep.subr.mxu0 0.0
      %4440 = vmatpush1.msra.mxu0 0.0
      %4441 = vmatprep.subr.mxu0 0.0
      %4442 = vmatpush1.msra.mxu0 0.0
      %4443 = vmatprep.subr.mxu0 0.0
      %4444 = vmatpush1.msra.mxu0 0.0
      %4445 = vmatprep.subr.mxu0 0.0
      %4446 = vmatpush1.msra.mxu0 0.0
      %4447 = vmatprep.subr.mxu0 0.0
      %4448 = vmatpush1.msra.mxu0 0.0
      %4449 = vmatprep.subr.mxu0 0.0
      %4450 = vmatpush1.msra.mxu0 0.0
      %4451 = vmatprep.subr.mxu0 0.0
      %4452 = vmatpush1.msra.mxu0 0.0
      %4453 = vmatprep.subr.mxu0 0.0
      %4454 = vmatpush1.msra.mxu0 0.0
      %4455 = vmatprep.subr.mxu0 0.0
      %4456 = vmatpush1.msra.mxu0 0.0
      %4457 = vmatprep.subr.mxu0 0.0
      %4458 = vmatpush1.msra.mxu0 0.0
      %4459 = vmatprep.subr.mxu0 0.0
      %4460 = vmatpush1.msra.mxu0 0.0
      %4461 = vmatprep.subr.mxu0 0.0
      %4462 = vmatpush1.msra.mxu0 0.0
      %4463 = vmatprep.subr.mxu0 0.0
      %4464 = vmatpush1.msra.mxu0 0.0
      %4465 = vmatprep.subr.mxu0 0.0
      %4466 = vmatpush1.msra.mxu0 0.0
      %4467 = vmatprep.subr.mxu0 0.0
      %4468 = vmatpush1.msra.mxu0 0.0
      %4469 = vmatprep.subr.mxu0 0.0
      %4470 = vmatpush1.msra.mxu0 0.0
      %4471 = vmatprep.subr.mxu0 0.0
      %4472 = vmatpush1.msra.mxu0 0.0
      %4473 = vmatprep.subr.mxu0 0.0
      %4474 = vmatpush1.msra.mxu0 0.0
      %4475 = vmatprep.subr.mxu0 0.0
      %4476 = vmatpush1.msra.mxu0 0.0
      %4477 = vmatprep.subr.mxu0 0.0
      %4478 = vmatpush1.msra.mxu0 0.0
      %4479 = vmatprep.subr.mxu0 0.0
      %4480 = vmatpush1.msra.mxu0 0.0
      %4481 = vmatprep.subr.mxu0 0.0
      %4482 = vmatpush1.msra.mxu0 0.0
      %4483 = vmatprep.subr.mxu0 0.0
      %4484 = vmatpush1.msra.mxu0 0.0
      %4485 = vmatprep.subr.mxu0 0.0
      %4486 = vmatpush1.msra.mxu0 0.0
      %4487 = vmatprep.subr.mxu0 0.0
      %4488 = vmatpush1.msra.mxu0 0.0
      %4489 = vmatprep.mubr.f32.mxu0 0.0
      %4490 = vmatmul.mubr.f32.gmra.mrb[0].mxu0 %v4423
      %v4491 = vpop.f32.mrb[0].mxu0
      %v4492 = vadd.f32 0.0, %v4491
      %v4493 = vpop.f32.mrb[0].mxu0
      %4494 = vdwg.mxu0
      %v4495 = vmul.f32 %v4492, 0.11111111
      %v4496 = vmul.f32 %v4421, %v4421
      %v4497 = vsub.f32 %v4495, %v4496
      %v4498 = vmax.f32 %v4497, 0.0
      %v4499 = vlaneseq
      %v4500 = vshrl.u32 %v4499, 7
      %v4501 = vsub.s32 0, %v4500
      %v4502 = vrot.slane %v4421, %v4501
      %v4503 = vsub.f32 %v4329, %v4502
      %v4504 = vadd.f32 %v4498, 1e-05
      %v4505 = vrsqrt.pop %v4504
      %v4506 = vlaneseq
      %v4507 = vshrl.u32 %v4506, 7
      %v4508 = vsub.s32 0, %v4507
      %v4509 = vrot.slane %v4505, %v4508
      %v4510 = vmul.f32 %v4503, %v4509
      %vm4511 = vcmp.gt.f32.partialorder %v4510, 0.0
      %v4512 = vmul.f32 %v4510, 0.2
      %v4513 = vsel %vm4511, %v4510, %v4512
      %v4514 = vpack.c.bf16 %v4513, %v4513
      %v4515 = vld [vmem:[%s17] sm:$0xf]
      %v4516 = vld [vmem:[%s17 + $0x4] sm:$0xf]
      %v4517 = vld [vmem:[%s17 + $0x8] sm:$0xf]
      %v4521 = vunpack.c.l.b16 %v4515
      %v4522 = vunpack.c.l.b16 %v4516
      %v4523 = vunpack.c.l.b16 %v4517
      %v4524 = vpack.c.b16 %v4522, %v4521
      %v4525 = vpack.c.b16 %v4523, %v4523
      %v4528 = vsel %vm2056, %v4514, 0
      %v4531 = vsel %vm2427, %v4525, 0
      %4533 = vmatprep.subr.bf16.mxu0 0
      %4534 = vmatpush1.bf16.msra.mxu0 %v4524
      %4535 = vmatprep.subr.bf16.mxu0 0
      %4536 = vmatpush1.bf16.msra.mxu0 %v4531
      %4537 = vmatprep.subr.bf16.mxu0 0
      %4538 = vmatpush1.bf16.msra.mxu0 0
      %4539 = vmatprep.subr.bf16.mxu0 0
      %4540 = vmatpush1.bf16.msra.mxu0 0
      %4541 = vmatprep.subr.bf16.mxu0 0
      %4542 = vmatpush1.bf16.msra.mxu0 0
      %4543 = vmatprep.subr.bf16.mxu0 0
      %4544 = vmatpush1.bf16.msra.mxu0 0
      %4545 = vmatprep.subr.bf16.mxu0 0
      %4546 = vmatpush1.bf16.msra.mxu0 0
      %4547 = vmatprep.subr.bf16.mxu0 0
      %4548 = vmatpush1.bf16.msra.mxu0 0
      %4549 = vmatprep.subr.bf16.mxu0 0
      %4550 = vmatpush1.bf16.msra.mxu0 0
      %4551 = vmatprep.subr.bf16.mxu0 0
      %4552 = vmatpush1.bf16.msra.mxu0 0
      %4553 = vmatprep.subr.bf16.mxu0 0
      %4554 = vmatpush1.bf16.msra.mxu0 0
      %4555 = vmatprep.subr.bf16.mxu0 0
      %4556 = vmatpush1.bf16.msra.mxu0 0
      %4557 = vmatprep.subr.bf16.mxu0 0
      %4558 = vmatpush1.bf16.msra.mxu0 0
      %4559 = vmatprep.subr.bf16.mxu0 0
      %4560 = vmatpush1.bf16.msra.mxu0 0
      %4561 = vmatprep.subr.bf16.mxu0 0
      %4562 = vmatpush1.bf16.msra.mxu0 0
      %4563 = vmatprep.subr.bf16.mxu0 0
      %4564 = vmatpush1.bf16.msra.mxu0 0
      %4565 = vmatprep.mubr.bf16.mxu0 0
      %4566 = vmatmul.mubr.bf16.gmra.mrb[0].mxu0 %v4528
      %v4567 = vpop.f32.mrb[0].mxu0
      %v4568 = vadd.f32 0.0, %v4567
      %v4569 = vpop.f32.mrb[0].mxu0
      %v4570 = vpop.f32.mrb[0].mxu0
      %v4571 = vpop.f32.mrb[0].mxu0
      %4572 = vdwg.mxu0
      %v4573 = vld [vmem:[%s18] sm:$0x1]
      %s4574 = scalar_lea.vmem %s17, 12
      %v4575 = vld [vmem:[%s4574] sm:$0xf]
      %v4576 = vld [vmem:[%s4574 + $0x4] sm:$0xf]
      %v4577 = vld [vmem:[%s4574 + $0x8] sm:$0xf]
      %v4581 = vunpack.c.l.b16 %v4575
      %v4582 = vunpack.c.l.b16 %v4576
      %v4583 = vunpack.c.l.b16 %v4577
      %v4584 = vpack.c.b16 %v4582, %v4581
      %v4585 = vpack.c.b16 %v4583, %v4583
      %v4588 = vsel %vm2427, %v4585, 0
      %4590 = vmatprep.subr.bf16.mxu0 0
      %4591 = vmatpush1.bf16.msra.mxu0 %v4584
      %4592 = vmatprep.subr.bf16.mxu0 0
      %4593 = vmatpush1.bf16.msra.mxu0 %v4588
      %4594 = vmatprep.subr.bf16.mxu0 0
      %4595 = vmatpush1.bf16.msra.mxu0 0
      %4596 = vmatprep.subr.bf16.mxu0 0
      %4597 = vmatpush1.bf16.msra.mxu0 0
      %4598 = vmatprep.subr.bf16.mxu0 0
      %4599 = vmatpush1.bf16.msra.mxu0 0
      %4600 = vmatprep.subr.bf16.mxu0 0
      %4601 = vmatpush1.bf16.msra.mxu0 0
      %4602 = vmatprep.subr.bf16.mxu0 0
      %4603 = vmatpush1.bf16.msra.mxu0 0
      %4604 = vmatprep.subr.bf16.mxu0 0
      %4605 = vmatpush1.bf16.msra.mxu0 0
      %4606 = vmatprep.subr.bf16.mxu0 0
      %4607 = vmatpush1.bf16.msra.mxu0 0
      %4608 = vmatprep.subr.bf16.mxu0 0
      %4609 = vmatpush1.bf16.msra.mxu0 0
      %4610 = vmatprep.subr.bf16.mxu0 0
      %4611 = vmatpush1.bf16.msra.mxu0 0
      %4612 = vmatprep.subr.bf16.mxu0 0
      %4613 = vmatpush1.bf16.msra.mxu0 0
      %4614 = vmatprep.subr.bf16.mxu0 0
      %4615 = vmatpush1.bf16.msra.mxu0 0
      %4616 = vmatprep.subr.bf16.mxu0 0
      %4617 = vmatpush1.bf16.msra.mxu0 0
      %4618 = vmatprep.subr.bf16.mxu0 0
      %4619 = vmatpush1.bf16.msra.mxu0 0
      %4620 = vmatprep.subr.bf16.mxu0 0
      %4621 = vmatpush1.bf16.msra.mxu0 0
      %4622 = vmatprep.mubr.bf16.mxu0 0
      %4623 = vmatmul.mubr.bf16.gmra.mrb[0].mxu0 %v4528
      %v4624 = vpop.f32.mrb[0].mxu0
      %v4625 = vadd.f32 0.0, %v4624
      %v4626 = vpop.f32.mrb[0].mxu0
      %v4627 = vpop.f32.mrb[0].mxu0
      %v4628 = vpop.f32.mrb[0].mxu0
      %4629 = vdwg.mxu0
      %s4630 = scalar_lea.vmem %s18, 1
      %v4631 = vld [vmem:[%s4630] sm:$0x1]
      %vm4632 = vcmask 23552
      %v4634 = vsel %vm4632, %v4631, 0
      %v4637 = vsel %vm2047, %v4625, 0
      %4639 = vmatprep.subr.mxu0 0.0
      %4640 = vmatpush1.msra.mxu0 %v4637
      %4641 = vmatprep.subr.mxu0 0.0
      %4642 = vmatpush1.msra.mxu0 0.0
      %4643 = vmatprep.subr.mxu0 0.0
      %4644 = vmatpush1.msra.mxu0 0.0
      %4645 = vmatprep.subr.mxu0 0.0
      %4646 = vmatpush1.msra.mxu0 0.0
      %4647 = vmatprep.subr.mxu0 0.0
      %4648 = vmatpush1.msra.mxu0 0.0
      %4649 = vmatprep.subr.mxu0 0.0
      %4650 = vmatpush1.msra.mxu0 0.0
      %4651 = vmatprep.subr.mxu0 0.0
      %4652 = vmatpush1.msra.mxu0 0.0
      %4653 = vmatprep.subr.mxu0 0.0
      %4654 = vmatpush1.msra.mxu0 0.0
      %4655 = vmatprep.subr.mxu0 0.0
      %4656 = vmatpush1.msra.mxu0 0.0
      %4657 = vmatprep.subr.mxu0 0.0
      %4658 = vmatpush1.msra.mxu0 0.0
      %4659 = vmatprep.subr.mxu0 0.0
      %4660 = vmatpush1.msra.mxu0 0.0
      %4661 = vmatprep.subr.mxu0 0.0
      %4662 = vmatpush1.msra.mxu0 0.0
      %4663 = vmatprep.subr.mxu0 0.0
      %4664 = vmatpush1.msra.mxu0 0.0
      %4665 = vmatprep.subr.mxu0 0.0
      %4666 = vmatpush1.msra.mxu0 0.0
      %4667 = vmatprep.subr.mxu0 0.0
      %4668 = vmatpush1.msra.mxu0 0.0
      %4669 = vmatprep.subr.mxu0 0.0
      %4670 = vmatpush1.msra.mxu0 0.0
      %4671 = vmatprep.subr.mxu0 0.0
      %4672 = vmatpush1.msra.mxu0 0.0
      %4673 = vmatprep.subr.mxu0 0.0
      %4674 = vmatpush1.msra.mxu0 0.0
      %4675 = vmatprep.subr.mxu0 0.0
      %4676 = vmatpush1.msra.mxu0 0.0
      %4677 = vmatprep.subr.mxu0 0.0
      %4678 = vmatpush1.msra.mxu0 0.0
      %4679 = vmatprep.subr.mxu0 0.0
      %4680 = vmatpush1.msra.mxu0 0.0
      %4681 = vmatprep.subr.mxu0 0.0
      %4682 = vmatpush1.msra.mxu0 0.0
      %4683 = vmatprep.subr.mxu0 0.0
      %4684 = vmatpush1.msra.mxu0 0.0
      %4685 = vmatprep.subr.mxu0 0.0
      %4686 = vmatpush1.msra.mxu0 0.0
      %4687 = vmatprep.subr.mxu0 0.0
      %4688 = vmatpush1.msra.mxu0 0.0
      %4689 = vmatprep.subr.mxu0 0.0
      %4690 = vmatpush1.msra.mxu0 0.0
      %4691 = vmatprep.subr.mxu0 0.0
      %4692 = vmatpush1.msra.mxu0 0.0
      %4693 = vmatprep.subr.mxu0 0.0
      %4694 = vmatpush1.msra.mxu0 0.0
      %4695 = vmatprep.subr.mxu0 0.0
      %4696 = vmatpush1.msra.mxu0 0.0
      %4697 = vmatprep.subr.mxu0 0.0
      %4698 = vmatpush1.msra.mxu0 0.0
      %4699 = vmatprep.subr.mxu0 0.0
      %4700 = vmatpush1.msra.mxu0 0.0
      %4701 = vmatprep.subr.mxu0 0.0
      %4702 = vmatpush1.msra.mxu0 0.0
      %4703 = vmatprep.mubr.f32.mxu0 0.0
      %4704 = vmatmul.mubr.f32.gmra.mrb[0].mxu0 %v4634
      %v4705 = vpop.f32.mrb[0].mxu0
      %v4706 = vadd.f32 0.0, %v4705
      %v4707 = vpop.f32.mrb[0].mxu0
      %4708 = vdwg.mxu0
      %v4710 = vsel %vm4632, %v4573, 0
      %v4713 = vsel %vm2047, %v4568, 0
      %4715 = vmatprep.subr.mxu0 0.0
      %4716 = vmatpush1.msra.mxu0 %v4713
      %4717 = vmatprep.subr.mxu0 0.0
      %4718 = vmatpush1.msra.mxu0 0.0
      %4719 = vmatprep.subr.mxu0 0.0
      %4720 = vmatpush1.msra.mxu0 0.0
      %4721 = vmatprep.subr.mxu0 0.0
      %4722 = vmatpush1.msra.mxu0 0.0
      %4723 = vmatprep.subr.mxu0 0.0
      %4724 = vmatpush1.msra.mxu0 0.0
      %4725 = vmatprep.subr.mxu0 0.0
      %4726 = vmatpush1.msra.mxu0 0.0
      %4727 = vmatprep.subr.mxu0 0.0
      %4728 = vmatpush1.msra.mxu0 0.0
      %4729 = vmatprep.subr.mxu0 0.0
      %4730 = vmatpush1.msra.mxu0 0.0
      %4731 = vmatprep.subr.mxu0 0.0
      %4732 = vmatpush1.msra.mxu0 0.0
      %4733 = vmatprep.subr.mxu0 0.0
      %4734 = vmatpush1.msra.mxu0 0.0
      %4735 = vmatprep.subr.mxu0 0.0
      %4736 = vmatpush1.msra.mxu0 0.0
      %4737 = vmatprep.subr.mxu0 0.0
      %4738 = vmatpush1.msra.mxu0 0.0
      %4739 = vmatprep.subr.mxu0 0.0
      %4740 = vmatpush1.msra.mxu0 0.0
      %4741 = vmatprep.subr.mxu0 0.0
      %4742 = vmatpush1.msra.mxu0 0.0
      %4743 = vmatprep.subr.mxu0 0.0
      %4744 = vmatpush1.msra.mxu0 0.0
      %4745 = vmatprep.subr.mxu0 0.0
      %4746 = vmatpush1.msra.mxu0 0.0
      %4747 = vmatprep.subr.mxu0 0.0
      %4748 = vmatpush1.msra.mxu0 0.0
      %4749 = vmatprep.subr.mxu0 0.0
      %4750 = vmatpush1.msra.mxu0 0.0
      %4751 = vmatprep.subr.mxu0 0.0
      %4752 = vmatpush1.msra.mxu0 0.0
      %4753 = vmatprep.subr.mxu0 0.0
      %4754 = vmatpush1.msra.mxu0 0.0
      %4755 = vmatprep.subr.mxu0 0.0
      %4756 = vmatpush1.msra.mxu0 0.0
      %4757 = vmatprep.subr.mxu0 0.0
      %4758 = vmatpush1.msra.mxu0 0.0
      %4759 = vmatprep.subr.mxu0 0.0
      %4760 = vmatpush1.msra.mxu0 0.0
      %4761 = vmatprep.subr.mxu0 0.0
      %4762 = vmatpush1.msra.mxu0 0.0
      %4763 = vmatprep.subr.mxu0 0.0
      %4764 = vmatpush1.msra.mxu0 0.0
      %4765 = vmatprep.subr.mxu0 0.0
      %4766 = vmatpush1.msra.mxu0 0.0
      %4767 = vmatprep.subr.mxu0 0.0
      %4768 = vmatpush1.msra.mxu0 0.0
      %4769 = vmatprep.subr.mxu0 0.0
      %4770 = vmatpush1.msra.mxu0 0.0
      %4771 = vmatprep.subr.mxu0 0.0
      %4772 = vmatpush1.msra.mxu0 0.0
      %4773 = vmatprep.subr.mxu0 0.0
      %4774 = vmatpush1.msra.mxu0 0.0
      %4775 = vmatprep.subr.mxu0 0.0
      %4776 = vmatpush1.msra.mxu0 0.0
      %4777 = vmatprep.subr.mxu0 0.0
      %4778 = vmatpush1.msra.mxu0 0.0
      %4779 = vmatprep.mubr.f32.mxu0 0.0
      %4780 = vmatmul.mubr.f32.gmra.mrb[0].mxu0 %v4710
      %v4781 = vpop.f32.mrb[0].mxu0
      %v4782 = vadd.f32 %v4706, %v4781
      %v4783 = vpop.f32.mrb[0].mxu0
      %4784 = vdwg.mxu0
      %s4785 = scalar_lea.vmem %s17, 24
      %v4786 = vld [vmem:[%s4785] sm:$0xf]
      %v4787 = vld [vmem:[%s4785 + $0x4] sm:$0xf]
      %v4788 = vld [vmem:[%s4785 + $0x8] sm:$0xf]
      %v4792 = vunpack.c.l.b16 %v4786
      %v4793 = vunpack.c.l.b16 %v4787
      %v4794 = vunpack.c.l.b16 %v4788
      %v4795 = vpack.c.b16 %v4793, %v4792
      %v4796 = vpack.c.b16 %v4794, %v4794
      %v4799 = vsel %vm2427, %v4796, 0
      %4801 = vmatprep.subr.bf16.mxu0 0
      %4802 = vmatpush1.bf16.msra.mxu0 %v4795
      %4803 = vmatprep.subr.bf16.mxu0 0
      %4804 = vmatpush1.bf16.msra.mxu0 %v4799
      %4805 = vmatprep.subr.bf16.mxu0 0
      %4806 = vmatpush1.bf16.msra.mxu0 0
      %4807 = vmatprep.subr.bf16.mxu0 0
      %4808 = vmatpush1.bf16.msra.mxu0 0
      %4809 = vmatprep.subr.bf16.mxu0 0
      %4810 = vmatpush1.bf16.msra.mxu0 0
      %4811 = vmatprep.subr.bf16.mxu0 0
      %4812 = vmatpush1.bf16.msra.mxu0 0
      %4813 = vmatprep.subr.bf16.mxu0 0
      %4814 = vmatpush1.bf16.msra.mxu0 0
      %4815 = vmatprep.subr.bf16.mxu0 0
      %4816 = vmatpush1.bf16.msra.mxu0 0
      %4817 = vmatprep.subr.bf16.mxu0 0
      %4818 = vmatpush1.bf16.msra.mxu0 0
      %4819 = vmatprep.subr.bf16.mxu0 0
      %4820 = vmatpush1.bf16.msra.mxu0 0
      %4821 = vmatprep.subr.bf16.mxu0 0
      %4822 = vmatpush1.bf16.msra.mxu0 0
      %4823 = vmatprep.subr.bf16.mxu0 0
      %4824 = vmatpush1.bf16.msra.mxu0 0
      %4825 = vmatprep.subr.bf16.mxu0 0
      %4826 = vmatpush1.bf16.msra.mxu0 0
      %4827 = vmatprep.subr.bf16.mxu0 0
      %4828 = vmatpush1.bf16.msra.mxu0 0
      %4829 = vmatprep.subr.bf16.mxu0 0
      %4830 = vmatpush1.bf16.msra.mxu0 0
      %4831 = vmatprep.subr.bf16.mxu0 0
      %4832 = vmatpush1.bf16.msra.mxu0 0
      %4833 = vmatprep.mubr.bf16.mxu0 0
      %4834 = vmatmul.mubr.bf16.gmra.mrb[0].mxu0 %v4528
      %v4835 = vpop.f32.mrb[0].mxu0
      %v4836 = vadd.f32 0.0, %v4835
      %v4837 = vpop.f32.mrb[0].mxu0
      %v4838 = vpop.f32.mrb[0].mxu0
      %v4839 = vpop.f32.mrb[0].mxu0
      %4840 = vdwg.mxu0
      %s4841 = scalar_lea.vmem %s18, 2
      %v4842 = vld [vmem:[%s4841] sm:$0x1]
      %v4844 = vsel %vm4632, %v4842, 0
      %v4847 = vsel %vm2047, %v4836, 0
      %4849 = vmatprep.subr.mxu0 0.0
      %4850 = vmatpush1.msra.mxu0 %v4847
      %4851 = vmatprep.subr.mxu0 0.0
      %4852 = vmatpush1.msra.mxu0 0.0
      %4853 = vmatprep.subr.mxu0 0.0
      %4854 = vmatpush1.msra.mxu0 0.0
      %4855 = vmatprep.subr.mxu0 0.0
      %4856 = vmatpush1.msra.mxu0 0.0
      %4857 = vmatprep.subr.mxu0 0.0
      %4858 = vmatpush1.msra.mxu0 0.0
      %4859 = vmatprep.subr.mxu0 0.0
      %4860 = vmatpush1.msra.mxu0 0.0
      %4861 = vmatprep.subr.mxu0 0.0
      %4862 = vmatpush1.msra.mxu0 0.0
      %4863 = vmatprep.subr.mxu0 0.0
      %4864 = vmatpush1.msra.mxu0 0.0
      %4865 = vmatprep.subr.mxu0 0.0
      %4866 = vmatpush1.msra.mxu0 0.0
      %4867 = vmatprep.subr.mxu0 0.0
      %4868 = vmatpush1.msra.mxu0 0.0
      %4869 = vmatprep.subr.mxu0 0.0
      %4870 = vmatpush1.msra.mxu0 0.0
      %4871 = vmatprep.subr.mxu0 0.0
      %4872 = vmatpush1.msra.mxu0 0.0
      %4873 = vmatprep.subr.mxu0 0.0
      %4874 = vmatpush1.msra.mxu0 0.0
      %4875 = vmatprep.subr.mxu0 0.0
      %4876 = vmatpush1.msra.mxu0 0.0
      %4877 = vmatprep.subr.mxu0 0.0
      %4878 = vmatpush1.msra.mxu0 0.0
      %4879 = vmatprep.subr.mxu0 0.0
      %4880 = vmatpush1.msra.mxu0 0.0
      %4881 = vmatprep.subr.mxu0 0.0
      %4882 = vmatpush1.msra.mxu0 0.0
      %4883 = vmatprep.subr.mxu0 0.0
      %4884 = vmatpush1.msra.mxu0 0.0
      %4885 = vmatprep.subr.mxu0 0.0
      %4886 = vmatpush1.msra.mxu0 0.0
      %4887 = vmatprep.subr.mxu0 0.0
      %4888 = vmatpush1.msra.mxu0 0.0
      %4889 = vmatprep.subr.mxu0 0.0
      %4890 = vmatpush1.msra.mxu0 0.0
      %4891 = vmatprep.subr.mxu0 0.0
      %4892 = vmatpush1.msra.mxu0 0.0
      %4893 = vmatprep.subr.mxu0 0.0
      %4894 = vmatpush1.msra.mxu0 0.0
      %4895 = vmatprep.subr.mxu0 0.0
      %4896 = vmatpush1.msra.mxu0 0.0
      %4897 = vmatprep.subr.mxu0 0.0
      %4898 = vmatpush1.msra.mxu0 0.0
      %4899 = vmatprep.subr.mxu0 0.0
      %4900 = vmatpush1.msra.mxu0 0.0
      %4901 = vmatprep.subr.mxu0 0.0
      %4902 = vmatpush1.msra.mxu0 0.0
      %4903 = vmatprep.subr.mxu0 0.0
      %4904 = vmatpush1.msra.mxu0 0.0
      %4905 = vmatprep.subr.mxu0 0.0
      %4906 = vmatpush1.msra.mxu0 0.0
      %4907 = vmatprep.subr.mxu0 0.0
      %4908 = vmatpush1.msra.mxu0 0.0
      %4909 = vmatprep.subr.mxu0 0.0
      %4910 = vmatpush1.msra.mxu0 0.0
      %4911 = vmatprep.subr.mxu0 0.0
      %4912 = vmatpush1.msra.mxu0 0.0
      %4913 = vmatprep.mubr.f32.mxu0 0.0
      %4914 = vmatmul.mubr.f32.gmra.mrb[0].mxu0 %v4844
      %v4915 = vpop.f32.mrb[0].mxu0
      %v4916 = vadd.f32 0.0, %v4915
      %v4917 = vpop.f32.mrb[0].mxu0
      %4918 = vdwg.mxu0
      %v4919 = vadd.f32 %v4782, %v4916
      %v4920 = vld [vmem:[#allocation2] sm:$0x1]
      %v4921 = vadd.f32 %v4919, %v4920
      %v4922 = vxor.u32 %v4921, 2147483648
      %v4923 = vmul.f32 %v4922, 1.442695
      %v4924 = vpow.pop %v4923
      %v4925 = vadd.f32 %v4924, 1.0
      %v4926 = vrcp.pop %v4925
      %v4927 = vmul.f32 1.0, %v4926
      %vm4928 = vcmask 0
      %4929 = vst.msk [vmem:[%s627] sm:$0x1] %vm4928, %v4927
      %p4930 = scmp.lt.s32.totalorder %s33, 1
      %s4931 = scalar_select %p4930, %s33, 1
      %s4932 = scalar_lea.vmem %s20, %s4931
      // Predicated region
      $region101: #{forward.1} parent=99 // pred_check
        %p4933 = pneg %p476
      $region102: #{forward.1} parent=99 // pred_check_branch
        %4935 = sbr.rel (%p4933) target = $region104
      $region103: #{forward.1} parent=99 // pred_region
        _
      $region104: #{forward.1} parent=99 // pred_fallthru
        _
    $region100: #{forward.1} parent=5 // pred_fallthru
      _
    %p4936 = scmp.le.s32.totalorder 2, %s28
    // Predicated region
    $region105: #{forward.1} parent=5 // pred_check
      %p4937 = pneg %p4936
    $region106: #{forward.1} parent=5 // pred_check_branch
      %4939 = sbr.rel (%p4937) target = $region108
    $region107: #{forward.1} parent=5 // pred_region
      %s4940 = ssub.s32 %s28, 2
      // Predicated region
      $region109: #{forward.1} parent=107 // pred_check
        %p4941 = pneg %p482
      $region110: #{forward.1} parent=107 // pred_check_branch
        %4943 = sbr.rel (%p4941) target = $region112
      $region111: #{forward.1} parent=107 // pred_region
        %p4944 = scmp.lt.s32.totalorder %s34, 1
        %s4945 = scalar_select %p4944, %s34, 1
        %s4946 = scalar_lea.vmem %s20, %s4945
      $region112: #{forward.1} parent=107 // pred_fallthru
        _
    $region108: #{forward.1} parent=5 // pred_fallthru
      _
  $region6: #{forward.1} parent=0 // loop_footer
    %s32 = sadd.s32 1, %s28
  $region7: #{forward.1} parent=0 // loop_footer_branch
    %27 = sbr.rel target = $region3
  $region8: #{forward.1} parent=0 // loop_exit
    _

</llo_original>
